<compile_context>
chip_gen: v6e
topology: v6e:2x2x1
jax: 0.10.0
libtpu: 0.0.40
codegen_flags: <defaults>
</compile_context>

<pallas_src>
import functools

import jax
import jax.numpy as jnp
from jax.experimental import pallas as pl
from jax.experimental.pallas import tpu as pltpu

EPS = 1e-5  # torch.nn.InstanceNorm2d default


# ----------------------------- fused Pallas kernel ----------------------------

def _make_dense_encoder_kernel(*, depth, C, Cin, T, F, Wp, PT, F2):
    """Builds the fused kernel for fixed static shapes.

    Activation buffer layout (VMEM scratch, bf16):
        skip_ref[(depth+1)*C, Hp*Wp] with Hp = T + PT + 1, Wp = F + 2.
        Rows 0..PT-1 are the convs' zero top-padding, row Hp-1 is a guard row,
        columns 0 and Wp-1 of every data row are the zero W-padding.
        Channel slot 0      : conv1 output
        Channel slot 1..d   : dense layer 0..depth-1 outputs
    A conv tap (ki, kj) of a layer with dilation d is then just the flat window
    skip_ref[:, off : off + T*Wp] with off = PT*Wp + (ki-1)*d*Wp + (kj-1).
    """
    N_slab = T * Wp               # flattened (T, Wp) output slab per layer
    slab = PT * Wp                # flat offset of that slab inside the buffer
    N2 = T * F2                   # conv2 output positions
    inv_n = 1.0 / float(T * F)    # valid positions for InstanceNorm stats
    inv_n2 = 1.0 / float(N2)

    def kernel(*refs):
        x_ref = refs[0]                      # (Cin, N_slab)          bf16
        w1_ref = refs[1]                     # (C, Cin)               bf16
        wd_refs = refs[2:2 + depth]          # (6, C, (i+1)*C)        bf16
        w2_ref = refs[2 + depth]             # (3, C, C)              bf16
        sel_ref = refs[3 + depth]            # (N_slab, N2)           f32
        mask_ref = refs[4 + depth]           # (1, N_slab)            f32
        g_ref = refs[5 + depth]              # (depth+2, C, 1)        f32
        be_ref = refs[6 + depth]             # (depth+2, C, 1)        f32
        al_ref = refs[7 + depth]             # (depth+2, C, 1)        f32
        o_ref = refs[8 + depth]              # (C, N2)                f32
        skip_ref = refs[9 + depth]           # ((depth+1)*C, Hp*Wp)   bf16 scratch

        msk = mask_ref[...]                  # 1 at valid columns, 0 at W-padding

        def in_prelu(acc, li, mask, inv_count):
            # InstanceNorm2d(affine) + PReLU epilogue, all f32.
            # (conv bias omitted: exactly cancelled by the mean subtraction.)
            if mask is None:
                mean = jnp.sum(acc, axis=1, keepdims=True) * inv_count
                cent = acc - mean
                var = jnp.sum(cent * cent, axis=1, keepdims=True) * inv_count
            else:
                mean = jnp.sum(acc * mask, axis=1, keepdims=True) * inv_count
                cent = acc - mean
                var = jnp.sum(cent * cent * mask, axis=1,
                              keepdims=True) * inv_count
            scale = g_ref[li] * jax.lax.rsqrt(var + EPS)          # (C, 1)
            y = cent * scale + be_ref[li]
            y = jnp.where(y >= 0.0, y, al_ref[li] * y)            # PReLU(C)
            if mask is not None:
                y = y * mask       # keep the padding columns exactly zero
            return y

        # Zero the scratch: the PT top pad rows (= the convs' zero padding),
        # the bottom guard row and the column pads are never written afterwards.
        skip_ref[...] = jnp.zeros_like(skip_ref)

        # ---- dense_conv_1: 1x1 conv + IN + PReLU --------------------------
        acc = jnp.dot(w1_ref[...], x_ref[...],
                      preferred_element_type=jnp.float32)
        y = in_prelu(acc, 0, msk, inv_n)
        skip_ref[0:C, slab:slab + N_slab] = y.astype(skip_ref.dtype)

        # ---- DenseBlock: dilated (2,3) convs, skip concat stays in VMEM ----
        for i in range(depth):
            d = 2 ** i
            cin_i = (i + 1) * C
            w_ref = wd_refs[i]
            acc = jnp.zeros((C, N_slab), jnp.float32)
            for ki in range(2):              # kernel-height taps (dilated by d)
                for kj in range(3):          # kernel-width taps
                    off = slab + (ki - 1) * d * Wp + (kj - 1)
                    win = skip_ref[0:cin_i, off:off + N_slab]
                    acc = acc + jnp.dot(w_ref[ki * 3 + kj], win,
                                        preferred_element_type=jnp.float32)
            y = in_prelu(acc, 1 + i, msk, inv_n)
            skip_ref[(i + 1) * C:(i + 2) * C, slab:slab + N_slab] = (
                y.astype(skip_ref.dtype))

        # ---- dense_conv_2: (1,3) conv, stride (1,2), padding (0,1) --------
        c0 = depth * C                       # last dense-layer output slot
        acc = jnp.zeros((C, N_slab), jnp.float32)
        for kj in range(3):
            off = slab + (kj - 1)
            win = skip_ref[c0:c0 + C, off:off + N_slab]
            acc = acc + jnp.dot(w2_ref[kj], win,
                                preferred_element_type=jnp.float32)
        # Stride-2 column subsampling as a 0/1 selection matmul: lane-dense
        # HBM output (last dim = T*F2) and uses the otherwise idle MXU.
        acc2 = jnp.dot(acc, sel_ref[...], preferred_element_type=jnp.float32)
        o_ref[...] = in_prelu(acc2, depth + 1, None, inv_n2)

    return kernel


# ------------------------------ host-side wrapper ------------------------------

def _prep_dense_weight(w, i, C):
    # PyTorch weight (C, (i+1)*C, 2, 3); its input-channel groups are ordered
    # newest-first ([y_{i-1}, ..., y_0, conv1_out], from torch.cat([x, skip])).
    # The VMEM skip buffer stores them oldest-first, so flip the groups, then
    # go tap-major: (kh*kw, C_out, C_in_total).
    w = w.reshape(C, i + 1, C, 2, 3)
    w = jnp.flip(w, axis=1).reshape(C, (i + 1) * C, 2, 3)
    return jnp.transpose(w, (2, 3, 0, 1)).reshape(2 * 3, C, (i + 1) * C)


@functools.partial(jax.jit, static_argnames=("depth",))
def dense_encoder_forward(x, params, depth=4):
    B, Cin, T, F = x.shape
    C = params["conv1"]["w"].shape[0]
    Wp = F + 2                        # width incl. the (1,1) column padding
    PT = 2 ** (depth - 1) + 1         # top pad rows: max dilation + 1 guard row
    Hp = T + PT + 1                   # + 1 guard row at the bottom
    F2 = (F - 1) // 2 + 1             # conv2 output width (k=3, stride 2, pad 1)
    N_slab = T * Wp
    N2 = T * F2

    # --- tiny host glue: reshapes / casts only (no im2col, no concatenate) ---
    x_slab = jnp.pad(x, ((0, 0), (0, 0), (0, 0), (1, 1)))       # W padding only
    x_slab = x_slab.reshape(B, Cin, N_slab).astype(jnp.bfloat16)

    w1 = params["conv1"]["w"].reshape(C, Cin).astype(jnp.bfloat16)
    wds = [_prep_dense_weight(params[f"dense{i}"]["w"], i, C).astype(jnp.bfloat16)
           for i in range(depth)]
    w2 = jnp.transpose(params["conv2"]["w"], (2, 3, 0, 1)).reshape(3, C, C)
    w2 = w2.astype(jnp.bfloat16)

    layers = ["conv1"] + [f"dense{i}" for i in range(depth)] + ["conv2"]

    def stack(name):
        return jnp.stack([params[l][name].reshape(C, 1) for l in layers],
                         axis=0).astype(jnp.float32)

    gammas, betas, alphas = stack("gamma"), stack("beta"), stack("alpha")
    # conv biases are intentionally not passed: a per-channel constant added
    # before InstanceNorm is exactly removed by the mean subtraction.

    # valid-column mask over the flattened (T, Wp) slab
    wcol = jnp.arange(N_slab, dtype=jnp.int32) % Wp
    mask = ((wcol >= 1) & (wcol <= F)).astype(jnp.float32)[None, :]

    # 0/1 selection matrix implementing the stride-(1,2) column subsampling:
    # output (t, fo) <- slab position (t, 2*fo + 1)
    rows = jnp.arange(N_slab, dtype=jnp.int32)
    cols = jnp.arange(N2, dtype=jnp.int32)
    sel = ((rows[:, None] // Wp == cols[None, :] // F2) &
           (rows[:, None] % Wp == 2 * (cols[None, :] % F2) + 1)
           ).astype(jnp.float32)

    kernel = _make_dense_encoder_kernel(depth=depth, C=C, Cin=Cin, T=T, F=F,
                                        Wp=Wp, PT=PT, F2=F2)

    in_specs = [
        pl.BlockSpec((None, Cin, N_slab), lambda b: (b, 0, 0)),      # x slab
        pl.BlockSpec((C, Cin), lambda b: (0, 0)),                    # w1
    ]
    in_specs += [pl.BlockSpec((6, C, (i + 1) * C), lambda b: (0, 0, 0))
                 for i in range(depth)]                              # dense w
    in_specs += [
        pl.BlockSpec((3, C, C), lambda b: (0, 0, 0)),                # w2
        pl.BlockSpec((N_slab, N2), lambda b: (0, 0)),                # selection
        pl.BlockSpec((1, N_slab), lambda b: (0, 0)),                 # mask
        pl.BlockSpec((depth + 2, C, 1), lambda b: (0, 0, 0)),        # gamma
        pl.BlockSpec((depth + 2, C, 1), lambda b: (0, 0, 0)),        # beta
        pl.BlockSpec((depth + 2, C, 1), lambda b: (0, 0, 0)),        # alpha
    ]

    out = pl.pallas_call(
        kernel,
        out_shape=jax.ShapeDtypeStruct((B, C, N2), jnp.float32),
        grid_spec=pltpu.PrefetchScalarGridSpec(
            num_scalar_prefetch=0,
            grid=(B,),
            in_specs=in_specs,
            out_specs=pl.BlockSpec((None, C, N2), lambda b: (b, 0, 0)),
            scratch_shapes=[
                pltpu.VMEM(((depth + 1) * C, Hp * Wp), jnp.bfloat16)],
        ),
        compiler_params=pltpu.CompilerParams(
            dimension_semantics=("parallel",)),
    )(x_slab, w1, *wds, w2, sel, mask, gammas, betas, alphas)
    return out.reshape(B, C, T, F2)


# ---------------------- parameter construction (deterministic) -----------------

def _layer_params(key, cout, cin, kh, kw):
    k1, k2, k3, k4 = jax.random.split(key, 4)
    return {
        "w": jax.random.normal(k1, (cout, cin, kh, kw), jnp.float32) * 0.1,
        "b": jax.random.normal(k2, (cout,), jnp.float32) * 0.05,
        "gamma": 1.0 + 0.1 * jax.random.normal(k3, (cout,), jnp.float32),
        "beta": 0.05 * jax.random.normal(k4, (cout,), jnp.float32),
        "alpha": jnp.full((cout,), 0.25, jnp.float32),   # PReLU default init
    }


def init_dense_encoder_params(key, in_channel, dense_channel, depth=4):
    keys = jax.random.split(key, depth + 2)
    params = {"conv1": _layer_params(keys[0], dense_channel, in_channel, 1, 1)}
    for i in range(depth):
        params[f"dense{i}"] = _layer_params(
            keys[1 + i], dense_channel, dense_channel * (i + 1), 2, 3)
    params["conv2"] = _layer_params(keys[depth + 1], dense_channel,
                                    dense_channel, 1, 3)
    return params


# --------------------------- pure-JAX f32 reference ----------------------------

def _ref_layer(x, p, *, stride=(1, 1), dilation=(1, 1),
               padding=((0, 0), (0, 0))):
    y = jax.lax.conv_general_dilated(
        x, p["w"], window_strides=stride, padding=padding,
        rhs_dilation=dilation, dimension_numbers=("NCHW", "OIHW", "NCHW"))
    y = y + p["b"][None, :, None, None]
    mean = jnp.mean(y, axis=(2, 3), keepdims=True)
    var = jnp.mean(jnp.square(y - mean), axis=(2, 3), keepdims=True)
    y = (y - mean) * jax.lax.rsqrt(var + EPS)
    y = y * p["gamma"][None, :, None, None] + p["beta"][None, :, None, None]
    return jnp.where(y >= 0, y, p["alpha"][None, :, None, None] * y)


def dense_encoder_reference(x, params, depth=4):
    x = _ref_layer(x, params["conv1"])
    skip = x
    y = x
    for i in range(depth):
        d = 2 ** i
        y = _ref_layer(skip, params[f"dense{i}"], dilation=(d, 1),
                       padding=((d, 0), (1, 1)))
        skip = jnp.concatenate([y, skip], axis=1)
    return _ref_layer(y, params["conv2"], stride=(1, 2),
                      padding=((0, 0), (1, 1)))


# ------------------------------------ main --------------------------------------

if __name__ == "__main__":
    B, in_channel, T, F = 2, 2, 16, 16
    dense_channel = 8
    depth = 4

    key = jax.random.PRNGKey(0)
    k_x, k_p = jax.random.split(key)
    x = jax.random.normal(k_x, (B, in_channel, T, F), jnp.float32)
    params = init_dense_encoder_params(k_p, in_channel, dense_channel,
                                       depth=depth)

    out = dense_encoder_forward(x, params, depth=depth)
    out = jax.block_until_ready(out)

    # conv_2 has stride (1,2), padding (0,1): W 16 -> 8, H unchanged.
    assert out.shape == (B, dense_channel, T, F // 2), out.shape
    assert jnp.all(jnp.isfinite(out))

    # Correctness vs. a pure-JAX f32 reference of the PyTorch module
    # (bf16 matmul operands in the kernel -> small numeric drift only).
    ref = dense_encoder_reference(x, params, depth=depth)
    err = float(jnp.max(jnp.abs(out - ref)))
    assert err < 0.3, err

    print("KERNEL_OK")
</pallas_src>

<mosaic_0001>
module attributes {stable_mosaic.version = 11 : i64} {
  func.func @kernel(%arg0: i32, %arg1: memref<1x2x288xbf16, #tpu.memory_space<vmem>>, %arg2: memref<8x2xbf16, #tpu.memory_space<vmem>>, %arg3: memref<6x8x8xbf16, #tpu.memory_space<vmem>>, %arg4: memref<6x8x16xbf16, #tpu.memory_space<vmem>>, %arg5: memref<6x8x24xbf16, #tpu.memory_space<vmem>>, %arg6: memref<6x8x32xbf16, #tpu.memory_space<vmem>>, %arg7: memref<3x8x8xbf16, #tpu.memory_space<vmem>>, %arg8: memref<288x128xf32, #tpu.memory_space<vmem>>, %arg9: memref<1x288xf32, #tpu.memory_space<vmem>>, %arg10: memref<6x8x1xf32, #tpu.memory_space<vmem>>, %arg11: memref<6x8x1xf32, #tpu.memory_space<vmem>>, %arg12: memref<6x8x1xf32, #tpu.memory_space<vmem>>, %arg13: memref<1x8x128xf32, #tpu.memory_space<vmem>>, %arg14: memref<40x468xbf16, #tpu.memory_space<vmem>>) attributes {dimension_semantics = [#tpu.dimension_semantics<parallel>], iteration_bounds = array<i64: 2>, scalar_prefetch = 0 : i64, scratch_operands = 1 : i64, tpu.core_type = #tpu.core_type<tc>, window_params = [{transform_indices = @transform_0, window_bounds = array<i64: 1, 2, 288>}, {pipeline_mode = #tpu.pipeline_mode<synchronous>, transform_indices = @transform_1, window_bounds = array<i64: 8, 2>}, {pipeline_mode = #tpu.pipeline_mode<synchronous>, transform_indices = @transform_2, window_bounds = array<i64: 6, 8, 8>}, {pipeline_mode = #tpu.pipeline_mode<synchronous>, transform_indices = @transform_3, window_bounds = array<i64: 6, 8, 16>}, {pipeline_mode = #tpu.pipeline_mode<synchronous>, transform_indices = @transform_4, window_bounds = array<i64: 6, 8, 24>}, {pipeline_mode = #tpu.pipeline_mode<synchronous>, transform_indices = @transform_5, window_bounds = array<i64: 6, 8, 32>}, {pipeline_mode = #tpu.pipeline_mode<synchronous>, transform_indices = @transform_6, window_bounds = array<i64: 3, 8, 8>}, {pipeline_mode = #tpu.pipeline_mode<synchronous>, transform_indices = @transform_7, window_bounds = array<i64: 288, 128>}, {pipeline_mode = #tpu.pipeline_mode<synchronous>, transform_indices = @transform_8, window_bounds = array<i64: 1, 288>}, {pipeline_mode = #tpu.pipeline_mode<synchronous>, transform_indices = @transform_9, window_bounds = array<i64: 6, 8, 1>}, {pipeline_mode = #tpu.pipeline_mode<synchronous>, transform_indices = @transform_10, window_bounds = array<i64: 6, 8, 1>}, {pipeline_mode = #tpu.pipeline_mode<synchronous>, transform_indices = @transform_11, window_bounds = array<i64: 6, 8, 1>}, {transform_indices = @transform_12, window_bounds = array<i64: 1, 8, 128>}]} {
    %c0 = arith.constant 0 : index
    %c0_0 = arith.constant 0 : index
    %0 = vector.load %arg9[%c0, %c0_0] : memref<1x288xf32, #tpu.memory_space<vmem>>, vector<1x288xf32>
    %cst = arith.constant 0.000000e+00 : bf16
    %1 = vector.broadcast %cst : bf16 to vector<40x468xbf16>
    %c0_1 = arith.constant 0 : index
    %c0_2 = arith.constant 0 : index
    %2 = vector.load %arg14[%c0_1, %c0_2] : memref<40x468xbf16, #tpu.memory_space<vmem>>, vector<40x468xbf16>
    tpu.vector_store %arg14[%c0_1, %c0_2], %1 {strides = array<i32>} : memref<40x468xbf16, #tpu.memory_space<vmem>>, vector<40x468xbf16>,
    %c0_3 = arith.constant 0 : index
    %c0_4 = arith.constant 0 : index
    %3 = vector.load %arg2[%c0_3, %c0_4] : memref<8x2xbf16, #tpu.memory_space<vmem>>, vector<8x2xbf16>
    %c0_5 = arith.constant 0 : index
    %c0_6 = arith.constant 0 : index
    %c0_7 = arith.constant 0 : index
    %4 = vector.load %arg1[%c0_5, %c0_6, %c0_7] : memref<1x2x288xbf16, #tpu.memory_space<vmem>>, vector<1x2x288xbf16>
    %5 = vector.shape_cast %4 : vector<1x2x288xbf16> to vector<2x288xbf16>
    %cst_8 = arith.constant dense<0.000000e+00> : vector<8x288xf32>
    %6 = tpu.matmul %3, %5, %cst_8 {dimension_numbers = #tpu.dot_dimension_numbers<[1], [0], [0], [1], [0, 0, 1, 1], [], []>} : vector<8x2xbf16>, vector<2x288xbf16>, vector<8x288xf32> -> vector<8x288xf32>
    %7 = vector.broadcast %0 : vector<1x288xf32> to vector<8x288xf32>
    %8 = arith.mulf %6, %7 : vector<8x288xf32>
    %cst_9 = arith.constant dense<0.000000e+00> : vector<8xf32>
    %9 = vector.multi_reduction <add>, %8, %cst_9 [1] : vector<8x288xf32> to vector<8xf32>
    %10 = vector.shape_cast %9 : vector<8xf32> to vector<8x1xf32>
    %cst_10 = arith.constant 3.906250e-03 : f32
    %11 = vector.broadcast %cst_10 : f32 to vector<8x1xf32>
    %12 = arith.mulf %10, %11 : vector<8x1xf32>
    %13 = vector.broadcast %12 : vector<8x1xf32> to vector<8x288xf32>
    %14 = arith.subf %6, %13 : vector<8x288xf32>
    %15 = arith.mulf %14, %14 : vector<8x288xf32>
    %16 = vector.broadcast %0 : vector<1x288xf32> to vector<8x288xf32>
    %17 = arith.mulf %15, %16 : vector<8x288xf32>
    %cst_11 = arith.constant dense<0.000000e+00> : vector<8xf32>
    %18 = vector.multi_reduction <add>, %17, %cst_11 [1] : vector<8x288xf32> to vector<8xf32>
    %19 = vector.shape_cast %18 : vector<8xf32> to vector<8x1xf32>
    %cst_12 = arith.constant 3.906250e-03 : f32
    %20 = vector.broadcast %cst_12 : f32 to vector<8x1xf32>
    %21 = arith.mulf %19, %20 : vector<8x1xf32>
    %c0_13 = arith.constant 0 : index
    %c0_14 = arith.constant 0 : index
    %c0_15 = arith.constant 0 : index
    %22 = vector.load %arg10[%c0_13, %c0_14, %c0_15] : memref<6x8x1xf32, #tpu.memory_space<vmem>>, vector<1x8x1xf32>
    %23 = vector.shape_cast %22 : vector<1x8x1xf32> to vector<8x1xf32>
    %cst_16 = arith.constant 9.99999974E-6 : f32
    %24 = vector.broadcast %cst_16 : f32 to vector<8x1xf32>
    %25 = arith.addf %21, %24 : vector<8x1xf32>
    %26 = math.rsqrt %25 : vector<8x1xf32>
    %27 = arith.mulf %23, %26 : vector<8x1xf32>
    %28 = vector.broadcast %27 : vector<8x1xf32> to vector<8x288xf32>
    %29 = arith.mulf %14, %28 : vector<8x288xf32>
    %c0_17 = arith.constant 0 : index
    %c0_18 = arith.constant 0 : index
    %c0_19 = arith.constant 0 : index
    %30 = vector.load %arg11[%c0_17, %c0_18, %c0_19] : memref<6x8x1xf32, #tpu.memory_space<vmem>>, vector<1x8x1xf32>
    %31 = vector.shape_cast %30 : vector<1x8x1xf32> to vector<8x1xf32>
    %32 = vector.broadcast %31 : vector<8x1xf32> to vector<8x288xf32>
    %33 = arith.addf %29, %32 : vector<8x288xf32>
    %cst_20 = arith.constant 0.000000e+00 : f32
    %34 = vector.broadcast %cst_20 : f32 to vector<8x288xf32>
    %35 = arith.cmpf oge, %33, %34 : vector<8x288xf32>
    %c0_21 = arith.constant 0 : index
    %c0_22 = arith.constant 0 : index
    %c0_23 = arith.constant 0 : index
    %36 = vector.load %arg12[%c0_21, %c0_22, %c0_23] : memref<6x8x1xf32, #tpu.memory_space<vmem>>, vector<1x8x1xf32>
    %37 = vector.shape_cast %36 : vector<1x8x1xf32> to vector<8x1xf32>
    %38 = vector.broadcast %37 : vector<8x1xf32> to vector<8x288xf32>
    %39 = arith.mulf %38, %33 : vector<8x288xf32>
    %40 = arith.select %35, %33, %39 : vector<8x288xi1>, vector<8x288xf32>
    %41 = vector.broadcast %0 : vector<1x288xf32> to vector<8x288xf32>
    %42 = arith.mulf %40, %41 : vector<8x288xf32>
    %43 = arith.truncf %42 : vector<8x288xf32> to vector<8x288xbf16>
    %c0_24 = arith.constant 0 : index
    %c162 = arith.constant 162 : index
    %44 = vector.load %arg14[%c0_24, %c162] : memref<40x468xbf16, #tpu.memory_space<vmem>>, vector<8x288xbf16>
    tpu.vector_store %arg14[%c0_24, %c162], %43 {strides = array<i32>} : memref<40x468xbf16, #tpu.memory_space<vmem>>, vector<8x288xbf16>,
    %cst_25 = arith.constant 0.000000e+00 : f32
    %45 = vector.broadcast %cst_25 : f32 to vector<8x288xf32>
    %c0_26 = arith.constant 0 : index
    %c143 = arith.constant 143 : index
    %46 = vector.load %arg14[%c0_26, %c143] : memref<40x468xbf16, #tpu.memory_space<vmem>>, vector<8x288xbf16>
    %c0_27 = arith.constant 0 : index
    %c0_28 = arith.constant 0 : index
    %c0_29 = arith.constant 0 : index
    %47 = vector.load %arg3[%c0_27, %c0_28, %c0_29] : memref<6x8x8xbf16, #tpu.memory_space<vmem>>, vector<1x8x8xbf16>
    %48 = vector.shape_cast %47 : vector<1x8x8xbf16> to vector<8x8xbf16>
    %cst_30 = arith.constant dense<0.000000e+00> : vector<8x288xf32>
    %49 = tpu.matmul %48, %46, %cst_30 {dimension_numbers = #tpu.dot_dimension_numbers<[1], [0], [0], [1], [0, 0, 1, 1], [], []>} : vector<8x8xbf16>, vector<8x288xbf16>, vector<8x288xf32> -> vector<8x288xf32>
    %50 = arith.addf %45, %49 : vector<8x288xf32>
    %c0_31 = arith.constant 0 : index
    %c144 = arith.constant 144 : index
    %51 = vector.load %arg14[%c0_31, %c144] : memref<40x468xbf16, #tpu.memory_space<vmem>>, vector<8x288xbf16>
    %c1 = arith.constant 1 : index
    %c0_32 = arith.constant 0 : index
    %c0_33 = arith.constant 0 : index
    %52 = vector.load %arg3[%c1, %c0_32, %c0_33] : memref<6x8x8xbf16, #tpu.memory_space<vmem>>, vector<1x8x8xbf16>
    %53 = vector.shape_cast %52 : vector<1x8x8xbf16> to vector<8x8xbf16>
    %cst_34 = arith.constant dense<0.000000e+00> : vector<8x288xf32>
    %54 = tpu.matmul %53, %51, %cst_34 {dimension_numbers = #tpu.dot_dimension_numbers<[1], [0], [0], [1], [0, 0, 1, 1], [], []>} : vector<8x8xbf16>, vector<8x288xbf16>, vector<8x288xf32> -> vector<8x288xf32>
    %55 = arith.addf %50, %54 : vector<8x288xf32>
    %c0_35 = arith.constant 0 : index
    %c145 = arith.constant 145 : index
    %56 = vector.load %arg14[%c0_35, %c145] : memref<40x468xbf16, #tpu.memory_space<vmem>>, vector<8x288xbf16>
    %c2 = arith.constant 2 : index
    %c0_36 = arith.constant 0 : index
    %c0_37 = arith.constant 0 : index
    %57 = vector.load %arg3[%c2, %c0_36, %c0_37] : memref<6x8x8xbf16, #tpu.memory_space<vmem>>, vector<1x8x8xbf16>
    %58 = vector.shape_cast %57 : vector<1x8x8xbf16> to vector<8x8xbf16>
    %cst_38 = arith.constant dense<0.000000e+00> : vector<8x288xf32>
    %59 = tpu.matmul %58, %56, %cst_38 {dimension_numbers = #tpu.dot_dimension_numbers<[1], [0], [0], [1], [0, 0, 1, 1], [], []>} : vector<8x8xbf16>, vector<8x288xbf16>, vector<8x288xf32> -> vector<8x288xf32>
    %60 = arith.addf %55, %59 : vector<8x288xf32>
    %c0_39 = arith.constant 0 : index
    %c161 = arith.constant 161 : index
    %61 = vector.load %arg14[%c0_39, %c161] : memref<40x468xbf16, #tpu.memory_space<vmem>>, vector<8x288xbf16>
    %c3 = arith.constant 3 : index
    %c0_40 = arith.constant 0 : index
    %c0_41 = arith.constant 0 : index
    %62 = vector.load %arg3[%c3, %c0_40, %c0_41] : memref<6x8x8xbf16, #tpu.memory_space<vmem>>, vector<1x8x8xbf16>
    %63 = vector.shape_cast %62 : vector<1x8x8xbf16> to vector<8x8xbf16>
    %cst_42 = arith.constant dense<0.000000e+00> : vector<8x288xf32>
    %64 = tpu.matmul %63, %61, %cst_42 {dimension_numbers = #tpu.dot_dimension_numbers<[1], [0], [0], [1], [0, 0, 1, 1], [], []>} : vector<8x8xbf16>, vector<8x288xbf16>, vector<8x288xf32> -> vector<8x288xf32>
    %65 = arith.addf %60, %64 : vector<8x288xf32>
    %c0_43 = arith.constant 0 : index
    %c162_44 = arith.constant 162 : index
    %66 = vector.load %arg14[%c0_43, %c162_44] : memref<40x468xbf16, #tpu.memory_space<vmem>>, vector<8x288xbf16>
    %c4 = arith.constant 4 : index
    %c0_45 = arith.constant 0 : index
    %c0_46 = arith.constant 0 : index
    %67 = vector.load %arg3[%c4, %c0_45, %c0_46] : memref<6x8x8xbf16, #tpu.memory_space<vmem>>, vector<1x8x8xbf16>
    %68 = vector.shape_cast %67 : vector<1x8x8xbf16> to vector<8x8xbf16>
    %cst_47 = arith.constant dense<0.000000e+00> : vector<8x288xf32>
    %69 = tpu.matmul %68, %66, %cst_47 {dimension_numbers = #tpu.dot_dimension_numbers<[1], [0], [0], [1], [0, 0, 1, 1], [], []>} : vector<8x8xbf16>, vector<8x288xbf16>, vector<8x288xf32> -> vector<8x288xf32>
    %70 = arith.addf %65, %69 : vector<8x288xf32>
    %c0_48 = arith.constant 0 : index
    %c163 = arith.constant 163 : index
    %71 = vector.load %arg14[%c0_48, %c163] : memref<40x468xbf16, #tpu.memory_space<vmem>>, vector<8x288xbf16>
    %c5 = arith.constant 5 : index
    %c0_49 = arith.constant 0 : index
    %c0_50 = arith.constant 0 : index
    %72 = vector.load %arg3[%c5, %c0_49, %c0_50] : memref<6x8x8xbf16, #tpu.memory_space<vmem>>, vector<1x8x8xbf16>
    %73 = vector.shape_cast %72 : vector<1x8x8xbf16> to vector<8x8xbf16>
    %cst_51 = arith.constant dense<0.000000e+00> : vector<8x288xf32>
    %74 = tpu.matmul %73, %71, %cst_51 {dimension_numbers = #tpu.dot_dimension_numbers<[1], [0], [0], [1], [0, 0, 1, 1], [], []>} : vector<8x8xbf16>, vector<8x288xbf16>, vector<8x288xf32> -> vector<8x288xf32>
    %75 = arith.addf %70, %74 : vector<8x288xf32>
    %76 = vector.broadcast %0 : vector<1x288xf32> to vector<8x288xf32>
    %77 = arith.mulf %75, %76 : vector<8x288xf32>
    %cst_52 = arith.constant dense<0.000000e+00> : vector<8xf32>
    %78 = vector.multi_reduction <add>, %77, %cst_52 [1] : vector<8x288xf32> to vector<8xf32>
    %79 = vector.shape_cast %78 : vector<8xf32> to vector<8x1xf32>
    %cst_53 = arith.constant 3.906250e-03 : f32
    %80 = vector.broadcast %cst_53 : f32 to vector<8x1xf32>
    %81 = arith.mulf %79, %80 : vector<8x1xf32>
    %82 = vector.broadcast %81 : vector<8x1xf32> to vector<8x288xf32>
    %83 = arith.subf %75, %82 : vector<8x288xf32>
    %84 = arith.mulf %83, %83 : vector<8x288xf32>
    %85 = vector.broadcast %0 : vector<1x288xf32> to vector<8x288xf32>
    %86 = arith.mulf %84, %85 : vector<8x288xf32>
    %cst_54 = arith.constant dense<0.000000e+00> : vector<8xf32>
    %87 = vector.multi_reduction <add>, %86, %cst_54 [1] : vector<8x288xf32> to vector<8xf32>
    %88 = vector.shape_cast %87 : vector<8xf32> to vector<8x1xf32>
    %cst_55 = arith.constant 3.906250e-03 : f32
    %89 = vector.broadcast %cst_55 : f32 to vector<8x1xf32>
    %90 = arith.mulf %88, %89 : vector<8x1xf32>
    %c1_56 = arith.constant 1 : index
    %c0_57 = arith.constant 0 : index
    %c0_58 = arith.constant 0 : index
    %91 = vector.load %arg10[%c1_56, %c0_57, %c0_58] : memref<6x8x1xf32, #tpu.memory_space<vmem>>, vector<1x8x1xf32>
    %92 = vector.shape_cast %91 : vector<1x8x1xf32> to vector<8x1xf32>
    %cst_59 = arith.constant 9.99999974E-6 : f32
    %93 = vector.broadcast %cst_59 : f32 to vector<8x1xf32>
    %94 = arith.addf %90, %93 : vector<8x1xf32>
    %95 = math.rsqrt %94 : vector<8x1xf32>
    %96 = arith.mulf %92, %95 : vector<8x1xf32>
    %97 = vector.broadcast %96 : vector<8x1xf32> to vector<8x288xf32>
    %98 = arith.mulf %83, %97 : vector<8x288xf32>
    %c1_60 = arith.constant 1 : index
    %c0_61 = arith.constant 0 : index
    %c0_62 = arith.constant 0 : index
    %99 = vector.load %arg11[%c1_60, %c0_61, %c0_62] : memref<6x8x1xf32, #tpu.memory_space<vmem>>, vector<1x8x1xf32>
    %100 = vector.shape_cast %99 : vector<1x8x1xf32> to vector<8x1xf32>
    %101 = vector.broadcast %100 : vector<8x1xf32> to vector<8x288xf32>
    %102 = arith.addf %98, %101 : vector<8x288xf32>
    %cst_63 = arith.constant 0.000000e+00 : f32
    %103 = vector.broadcast %cst_63 : f32 to vector<8x288xf32>
    %104 = arith.cmpf oge, %102, %103 : vector<8x288xf32>
    %c1_64 = arith.constant 1 : index
    %c0_65 = arith.constant 0 : index
    %c0_66 = arith.constant 0 : index
    %105 = vector.load %arg12[%c1_64, %c0_65, %c0_66] : memref<6x8x1xf32, #tpu.memory_space<vmem>>, vector<1x8x1xf32>
    %106 = vector.shape_cast %105 : vector<1x8x1xf32> to vector<8x1xf32>
    %107 = vector.broadcast %106 : vector<8x1xf32> to vector<8x288xf32>
    %108 = arith.mulf %107, %102 : vector<8x288xf32>
    %109 = arith.select %104, %102, %108 : vector<8x288xi1>, vector<8x288xf32>
    %110 = vector.broadcast %0 : vector<1x288xf32> to vector<8x288xf32>
    %111 = arith.mulf %109, %110 : vector<8x288xf32>
    %112 = arith.truncf %111 : vector<8x288xf32> to vector<8x288xbf16>
    %c8 = arith.constant 8 : index
    %c162_67 = arith.constant 162 : index
    %113 = vector.load %arg14[%c8, %c162_67] : memref<40x468xbf16, #tpu.memory_space<vmem>>, vector<8x288xbf16>
    tpu.vector_store %arg14[%c8, %c162_67], %112 {strides = array<i32>} : memref<40x468xbf16, #tpu.memory_space<vmem>>, vector<8x288xbf16>,
    %cst_68 = arith.constant 0.000000e+00 : f32
    %114 = vector.broadcast %cst_68 : f32 to vector<8x288xf32>
    %c0_69 = arith.constant 0 : index
    %c125 = arith.constant 125 : index
    %115 = vector.load %arg14[%c0_69, %c125] : memref<40x468xbf16, #tpu.memory_space<vmem>>, vector<16x288xbf16>
    %c0_70 = arith.constant 0 : index
    %c0_71 = arith.constant 0 : index
    %c0_72 = arith.constant 0 : index
    %116 = vector.load %arg4[%c0_70, %c0_71, %c0_72] : memref<6x8x16xbf16, #tpu.memory_space<vmem>>, vector<1x8x16xbf16>
    %117 = vector.shape_cast %116 : vector<1x8x16xbf16> to vector<8x16xbf16>
    %cst_73 = arith.constant dense<0.000000e+00> : vector<8x288xf32>
    %118 = tpu.matmul %117, %115, %cst_73 {dimension_numbers = #tpu.dot_dimension_numbers<[1], [0], [0], [1], [0, 0, 1, 1], [], []>} : vector<8x16xbf16>, vector<16x288xbf16>, vector<8x288xf32> -> vector<8x288xf32>
    %119 = arith.addf %114, %118 : vector<8x288xf32>
    %c0_74 = arith.constant 0 : index
    %c126 = arith.constant 126 : index
    %120 = vector.load %arg14[%c0_74, %c126] : memref<40x468xbf16, #tpu.memory_space<vmem>>, vector<16x288xbf16>
    %c1_75 = arith.constant 1 : index
    %c0_76 = arith.constant 0 : index
    %c0_77 = arith.constant 0 : index
    %121 = vector.load %arg4[%c1_75, %c0_76, %c0_77] : memref<6x8x16xbf16, #tpu.memory_space<vmem>>, vector<1x8x16xbf16>
    %122 = vector.shape_cast %121 : vector<1x8x16xbf16> to vector<8x16xbf16>
    %cst_78 = arith.constant dense<0.000000e+00> : vector<8x288xf32>
    %123 = tpu.matmul %122, %120, %cst_78 {dimension_numbers = #tpu.dot_dimension_numbers<[1], [0], [0], [1], [0, 0, 1, 1], [], []>} : vector<8x16xbf16>, vector<16x288xbf16>, vector<8x288xf32> -> vector<8x288xf32>
    %124 = arith.addf %119, %123 : vector<8x288xf32>
    %c0_79 = arith.constant 0 : index
    %c127 = arith.constant 127 : index
    %125 = vector.load %arg14[%c0_79, %c127] : memref<40x468xbf16, #tpu.memory_space<vmem>>, vector<16x288xbf16>
    %c2_80 = arith.constant 2 : index
    %c0_81 = arith.constant 0 : index
    %c0_82 = arith.constant 0 : index
    %126 = vector.load %arg4[%c2_80, %c0_81, %c0_82] : memref<6x8x16xbf16, #tpu.memory_space<vmem>>, vector<1x8x16xbf16>
    %127 = vector.shape_cast %126 : vector<1x8x16xbf16> to vector<8x16xbf16>
    %cst_83 = arith.constant dense<0.000000e+00> : vector<8x288xf32>
    %128 = tpu.matmul %127, %125, %cst_83 {dimension_numbers = #tpu.dot_dimension_numbers<[1], [0], [0], [1], [0, 0, 1, 1], [], []>} : vector<8x16xbf16>, vector<16x288xbf16>, vector<8x288xf32> -> vector<8x288xf32>
    %129 = arith.addf %124, %128 : vector<8x288xf32>
    %c0_84 = arith.constant 0 : index
    %c161_85 = arith.constant 161 : index
    %130 = vector.load %arg14[%c0_84, %c161_85] : memref<40x468xbf16, #tpu.memory_space<vmem>>, vector<16x288xbf16>
    %c3_86 = arith.constant 3 : index
    %c0_87 = arith.constant 0 : index
    %c0_88 = arith.constant 0 : index
    %131 = vector.load %arg4[%c3_86, %c0_87, %c0_88] : memref<6x8x16xbf16, #tpu.memory_space<vmem>>, vector<1x8x16xbf16>
    %132 = vector.shape_cast %131 : vector<1x8x16xbf16> to vector<8x16xbf16>
    %cst_89 = arith.constant dense<0.000000e+00> : vector<8x288xf32>
    %133 = tpu.matmul %132, %130, %cst_89 {dimension_numbers = #tpu.dot_dimension_numbers<[1], [0], [0], [1], [0, 0, 1, 1], [], []>} : vector<8x16xbf16>, vector<16x288xbf16>, vector<8x288xf32> -> vector<8x288xf32>
    %134 = arith.addf %129, %133 : vector<8x288xf32>
    %c0_90 = arith.constant 0 : index
    %c162_91 = arith.constant 162 : index
    %135 = vector.load %arg14[%c0_90, %c162_91] : memref<40x468xbf16, #tpu.memory_space<vmem>>, vector<16x288xbf16>
    %c4_92 = arith.constant 4 : index
    %c0_93 = arith.constant 0 : index
    %c0_94 = arith.constant 0 : index
    %136 = vector.load %arg4[%c4_92, %c0_93, %c0_94] : memref<6x8x16xbf16, #tpu.memory_space<vmem>>, vector<1x8x16xbf16>
    %137 = vector.shape_cast %136 : vector<1x8x16xbf16> to vector<8x16xbf16>
    %cst_95 = arith.constant dense<0.000000e+00> : vector<8x288xf32>
    %138 = tpu.matmul %137, %135, %cst_95 {dimension_numbers = #tpu.dot_dimension_numbers<[1], [0], [0], [1], [0, 0, 1, 1], [], []>} : vector<8x16xbf16>, vector<16x288xbf16>, vector<8x288xf32> -> vector<8x288xf32>
    %139 = arith.addf %134, %138 : vector<8x288xf32>
    %c0_96 = arith.constant 0 : index
    %c163_97 = arith.constant 163 : index
    %140 = vector.load %arg14[%c0_96, %c163_97] : memref<40x468xbf16, #tpu.memory_space<vmem>>, vector<16x288xbf16>
    %c5_98 = arith.constant 5 : index
    %c0_99 = arith.constant 0 : index
    %c0_100 = arith.constant 0 : index
    %141 = vector.load %arg4[%c5_98, %c0_99, %c0_100] : memref<6x8x16xbf16, #tpu.memory_space<vmem>>, vector<1x8x16xbf16>
    %142 = vector.shape_cast %141 : vector<1x8x16xbf16> to vector<8x16xbf16>
    %cst_101 = arith.constant dense<0.000000e+00> : vector<8x288xf32>
    %143 = tpu.matmul %142, %140, %cst_101 {dimension_numbers = #tpu.dot_dimension_numbers<[1], [0], [0], [1], [0, 0, 1, 1], [], []>} : vector<8x16xbf16>, vector<16x288xbf16>, vector<8x288xf32> -> vector<8x288xf32>
    %144 = arith.addf %139, %143 : vector<8x288xf32>
    %145 = vector.broadcast %0 : vector<1x288xf32> to vector<8x288xf32>
    %146 = arith.mulf %144, %145 : vector<8x288xf32>
    %cst_102 = arith.constant dense<0.000000e+00> : vector<8xf32>
    %147 = vector.multi_reduction <add>, %146, %cst_102 [1] : vector<8x288xf32> to vector<8xf32>
    %148 = vector.shape_cast %147 : vector<8xf32> to vector<8x1xf32>
    %cst_103 = arith.constant 3.906250e-03 : f32
    %149 = vector.broadcast %cst_103 : f32 to vector<8x1xf32>
    %150 = arith.mulf %148, %149 : vector<8x1xf32>
    %151 = vector.broadcast %150 : vector<8x1xf32> to vector<8x288xf32>
    %152 = arith.subf %144, %151 : vector<8x288xf32>
    %153 = arith.mulf %152, %152 : vector<8x288xf32>
    %154 = vector.broadcast %0 : vector<1x288xf32> to vector<8x288xf32>
    %155 = arith.mulf %153, %154 : vector<8x288xf32>
    %cst_104 = arith.constant dense<0.000000e+00> : vector<8xf32>
    %156 = vector.multi_reduction <add>, %155, %cst_104 [1] : vector<8x288xf32> to vector<8xf32>
    %157 = vector.shape_cast %156 : vector<8xf32> to vector<8x1xf32>
    %cst_105 = arith.constant 3.906250e-03 : f32
    %158 = vector.broadcast %cst_105 : f32 to vector<8x1xf32>
    %159 = arith.mulf %157, %158 : vector<8x1xf32>
    %c2_106 = arith.constant 2 : index
    %c0_107 = arith.constant 0 : index
    %c0_108 = arith.constant 0 : index
    %160 = vector.load %arg10[%c2_106, %c0_107, %c0_108] : memref<6x8x1xf32, #tpu.memory_space<vmem>>, vector<1x8x1xf32>
    %161 = vector.shape_cast %160 : vector<1x8x1xf32> to vector<8x1xf32>
    %cst_109 = arith.constant 9.99999974E-6 : f32
    %162 = vector.broadcast %cst_109 : f32 to vector<8x1xf32>
    %163 = arith.addf %159, %162 : vector<8x1xf32>
    %164 = math.rsqrt %163 : vector<8x1xf32>
    %165 = arith.mulf %161, %164 : vector<8x1xf32>
    %166 = vector.broadcast %165 : vector<8x1xf32> to vector<8x288xf32>
    %167 = arith.mulf %152, %166 : vector<8x288xf32>
    %c2_110 = arith.constant 2 : index
    %c0_111 = arith.constant 0 : index
    %c0_112 = arith.constant 0 : index
    %168 = vector.load %arg11[%c2_110, %c0_111, %c0_112] : memref<6x8x1xf32, #tpu.memory_space<vmem>>, vector<1x8x1xf32>
    %169 = vector.shape_cast %168 : vector<1x8x1xf32> to vector<8x1xf32>
    %170 = vector.broadcast %169 : vector<8x1xf32> to vector<8x288xf32>
    %171 = arith.addf %167, %170 : vector<8x288xf32>
    %cst_113 = arith.constant 0.000000e+00 : f32
    %172 = vector.broadcast %cst_113 : f32 to vector<8x288xf32>
    %173 = arith.cmpf oge, %171, %172 : vector<8x288xf32>
    %c2_114 = arith.constant 2 : index
    %c0_115 = arith.constant 0 : index
    %c0_116 = arith.constant 0 : index
    %174 = vector.load %arg12[%c2_114, %c0_115, %c0_116] : memref<6x8x1xf32, #tpu.memory_space<vmem>>, vector<1x8x1xf32>
    %175 = vector.shape_cast %174 : vector<1x8x1xf32> to vector<8x1xf32>
    %176 = vector.broadcast %175 : vector<8x1xf32> to vector<8x288xf32>
    %177 = arith.mulf %176, %171 : vector<8x288xf32>
    %178 = arith.select %173, %171, %177 : vector<8x288xi1>, vector<8x288xf32>
    %179 = vector.broadcast %0 : vector<1x288xf32> to vector<8x288xf32>
    %180 = arith.mulf %178, %179 : vector<8x288xf32>
    %181 = arith.truncf %180 : vector<8x288xf32> to vector<8x288xbf16>
    %c16 = arith.constant 16 : index
    %c162_117 = arith.constant 162 : index
    %182 = vector.load %arg14[%c16, %c162_117] : memref<40x468xbf16, #tpu.memory_space<vmem>>, vector<8x288xbf16>
    tpu.vector_store %arg14[%c16, %c162_117], %181 {strides = array<i32>} : memref<40x468xbf16, #tpu.memory_space<vmem>>, vector<8x288xbf16>,
    %cst_118 = arith.constant 0.000000e+00 : f32
    %183 = vector.broadcast %cst_118 : f32 to vector<8x288xf32>
    %c0_119 = arith.constant 0 : index
    %c89 = arith.constant 89 : index
    %184 = vector.load %arg14[%c0_119, %c89] : memref<40x468xbf16, #tpu.memory_space<vmem>>, vector<24x288xbf16>
    %c0_120 = arith.constant 0 : index
    %c0_121 = arith.constant 0 : index
    %c0_122 = arith.constant 0 : index
    %185 = vector.load %arg5[%c0_120, %c0_121, %c0_122] : memref<6x8x24xbf16, #tpu.memory_space<vmem>>, vector<1x8x24xbf16>
    %186 = vector.shape_cast %185 : vector<1x8x24xbf16> to vector<8x24xbf16>
    %cst_123 = arith.constant dense<0.000000e+00> : vector<8x288xf32>
    %187 = tpu.matmul %186, %184, %cst_123 {dimension_numbers = #tpu.dot_dimension_numbers<[1], [0], [0], [1], [0, 0, 1, 1], [], []>} : vector<8x24xbf16>, vector<24x288xbf16>, vector<8x288xf32> -> vector<8x288xf32>
    %188 = arith.addf %183, %187 : vector<8x288xf32>
    %c0_124 = arith.constant 0 : index
    %c90 = arith.constant 90 : index
    %189 = vector.load %arg14[%c0_124, %c90] : memref<40x468xbf16, #tpu.memory_space<vmem>>, vector<24x288xbf16>
    %c1_125 = arith.constant 1 : index
    %c0_126 = arith.constant 0 : index
    %c0_127 = arith.constant 0 : index
    %190 = vector.load %arg5[%c1_125, %c0_126, %c0_127] : memref<6x8x24xbf16, #tpu.memory_space<vmem>>, vector<1x8x24xbf16>
    %191 = vector.shape_cast %190 : vector<1x8x24xbf16> to vector<8x24xbf16>
    %cst_128 = arith.constant dense<0.000000e+00> : vector<8x288xf32>
    %192 = tpu.matmul %191, %189, %cst_128 {dimension_numbers = #tpu.dot_dimension_numbers<[1], [0], [0], [1], [0, 0, 1, 1], [], []>} : vector<8x24xbf16>, vector<24x288xbf16>, vector<8x288xf32> -> vector<8x288xf32>
    %193 = arith.addf %188, %192 : vector<8x288xf32>
    %c0_129 = arith.constant 0 : index
    %c91 = arith.constant 91 : index
    %194 = vector.load %arg14[%c0_129, %c91] : memref<40x468xbf16, #tpu.memory_space<vmem>>, vector<24x288xbf16>
    %c2_130 = arith.constant 2 : index
    %c0_131 = arith.constant 0 : index
    %c0_132 = arith.constant 0 : index
    %195 = vector.load %arg5[%c2_130, %c0_131, %c0_132] : memref<6x8x24xbf16, #tpu.memory_space<vmem>>, vector<1x8x24xbf16>
    %196 = vector.shape_cast %195 : vector<1x8x24xbf16> to vector<8x24xbf16>
    %cst_133 = arith.constant dense<0.000000e+00> : vector<8x288xf32>
    %197 = tpu.matmul %196, %194, %cst_133 {dimension_numbers = #tpu.dot_dimension_numbers<[1], [0], [0], [1], [0, 0, 1, 1], [], []>} : vector<8x24xbf16>, vector<24x288xbf16>, vector<8x288xf32> -> vector<8x288xf32>
    %198 = arith.addf %193, %197 : vector<8x288xf32>
    %c0_134 = arith.constant 0 : index
    %c161_135 = arith.constant 161 : index
    %199 = vector.load %arg14[%c0_134, %c161_135] : memref<40x468xbf16, #tpu.memory_space<vmem>>, vector<24x288xbf16>
    %c3_136 = arith.constant 3 : index
    %c0_137 = arith.constant 0 : index
    %c0_138 = arith.constant 0 : index
    %200 = vector.load %arg5[%c3_136, %c0_137, %c0_138] : memref<6x8x24xbf16, #tpu.memory_space<vmem>>, vector<1x8x24xbf16>
    %201 = vector.shape_cast %200 : vector<1x8x24xbf16> to vector<8x24xbf16>
    %cst_139 = arith.constant dense<0.000000e+00> : vector<8x288xf32>
    %202 = tpu.matmul %201, %199, %cst_139 {dimension_numbers = #tpu.dot_dimension_numbers<[1], [0], [0], [1], [0, 0, 1, 1], [], []>} : vector<8x24xbf16>, vector<24x288xbf16>, vector<8x288xf32> -> vector<8x288xf32>
    %203 = arith.addf %198, %202 : vector<8x288xf32>
    %c0_140 = arith.constant 0 : index
    %c162_141 = arith.constant 162 : index
    %204 = vector.load %arg14[%c0_140, %c162_141] : memref<40x468xbf16, #tpu.memory_space<vmem>>, vector<24x288xbf16>
    %c4_142 = arith.constant 4 : index
    %c0_143 = arith.constant 0 : index
    %c0_144 = arith.constant 0 : index
    %205 = vector.load %arg5[%c4_142, %c0_143, %c0_144] : memref<6x8x24xbf16, #tpu.memory_space<vmem>>, vector<1x8x24xbf16>
    %206 = vector.shape_cast %205 : vector<1x8x24xbf16> to vector<8x24xbf16>
    %cst_145 = arith.constant dense<0.000000e+00> : vector<8x288xf32>
    %207 = tpu.matmul %206, %204, %cst_145 {dimension_numbers = #tpu.dot_dimension_numbers<[1], [0], [0], [1], [0, 0, 1, 1], [], []>} : vector<8x24xbf16>, vector<24x288xbf16>, vector<8x288xf32> -> vector<8x288xf32>
    %208 = arith.addf %203, %207 : vector<8x288xf32>
    %c0_146 = arith.constant 0 : index
    %c163_147 = arith.constant 163 : index
    %209 = vector.load %arg14[%c0_146, %c163_147] : memref<40x468xbf16, #tpu.memory_space<vmem>>, vector<24x288xbf16>
    %c5_148 = arith.constant 5 : index
    %c0_149 = arith.constant 0 : index
    %c0_150 = arith.constant 0 : index
    %210 = vector.load %arg5[%c5_148, %c0_149, %c0_150] : memref<6x8x24xbf16, #tpu.memory_space<vmem>>, vector<1x8x24xbf16>
    %211 = vector.shape_cast %210 : vector<1x8x24xbf16> to vector<8x24xbf16>
    %cst_151 = arith.constant dense<0.000000e+00> : vector<8x288xf32>
    %212 = tpu.matmul %211, %209, %cst_151 {dimension_numbers = #tpu.dot_dimension_numbers<[1], [0], [0], [1], [0, 0, 1, 1], [], []>} : vector<8x24xbf16>, vector<24x288xbf16>, vector<8x288xf32> -> vector<8x288xf32>
    %213 = arith.addf %208, %212 : vector<8x288xf32>
    %214 = vector.broadcast %0 : vector<1x288xf32> to vector<8x288xf32>
    %215 = arith.mulf %213, %214 : vector<8x288xf32>
    %cst_152 = arith.constant dense<0.000000e+00> : vector<8xf32>
    %216 = vector.multi_reduction <add>, %215, %cst_152 [1] : vector<8x288xf32> to vector<8xf32>
    %217 = vector.shape_cast %216 : vector<8xf32> to vector<8x1xf32>
    %cst_153 = arith.constant 3.906250e-03 : f32
    %218 = vector.broadcast %cst_153 : f32 to vector<8x1xf32>
    %219 = arith.mulf %217, %218 : vector<8x1xf32>
    %220 = vector.broadcast %219 : vector<8x1xf32> to vector<8x288xf32>
    %221 = arith.subf %213, %220 : vector<8x288xf32>
    %222 = arith.mulf %221, %221 : vector<8x288xf32>
    %223 = vector.broadcast %0 : vector<1x288xf32> to vector<8x288xf32>
    %224 = arith.mulf %222, %223 : vector<8x288xf32>
    %cst_154 = arith.constant dense<0.000000e+00> : vector<8xf32>
    %225 = vector.multi_reduction <add>, %224, %cst_154 [1] : vector<8x288xf32> to vector<8xf32>
    %226 = vector.shape_cast %225 : vector<8xf32> to vector<8x1xf32>
    %cst_155 = arith.constant 3.906250e-03 : f32
    %227 = vector.broadcast %cst_155 : f32 to vector<8x1xf32>
    %228 = arith.mulf %226, %227 : vector<8x1xf32>
    %c3_156 = arith.constant 3 : index
    %c0_157 = arith.constant 0 : index
    %c0_158 = arith.constant 0 : index
    %229 = vector.load %arg10[%c3_156, %c0_157, %c0_158] : memref<6x8x1xf32, #tpu.memory_space<vmem>>, vector<1x8x1xf32>
    %230 = vector.shape_cast %229 : vector<1x8x1xf32> to vector<8x1xf32>
    %cst_159 = arith.constant 9.99999974E-6 : f32
    %231 = vector.broadcast %cst_159 : f32 to vector<8x1xf32>
    %232 = arith.addf %228, %231 : vector<8x1xf32>
    %233 = math.rsqrt %232 : vector<8x1xf32>
    %234 = arith.mulf %230, %233 : vector<8x1xf32>
    %235 = vector.broadcast %234 : vector<8x1xf32> to vector<8x288xf32>
    %236 = arith.mulf %221, %235 : vector<8x288xf32>
    %c3_160 = arith.constant 3 : index
    %c0_161 = arith.constant 0 : index
    %c0_162 = arith.constant 0 : index
    %237 = vector.load %arg11[%c3_160, %c0_161, %c0_162] : memref<6x8x1xf32, #tpu.memory_space<vmem>>, vector<1x8x1xf32>
    %238 = vector.shape_cast %237 : vector<1x8x1xf32> to vector<8x1xf32>
    %239 = vector.broadcast %238 : vector<8x1xf32> to vector<8x288xf32>
    %240 = arith.addf %236, %239 : vector<8x288xf32>
    %cst_163 = arith.constant 0.000000e+00 : f32
    %241 = vector.broadcast %cst_163 : f32 to vector<8x288xf32>
    %242 = arith.cmpf oge, %240, %241 : vector<8x288xf32>
    %c3_164 = arith.constant 3 : index
    %c0_165 = arith.constant 0 : index
    %c0_166 = arith.constant 0 : index
    %243 = vector.load %arg12[%c3_164, %c0_165, %c0_166] : memref<6x8x1xf32, #tpu.memory_space<vmem>>, vector<1x8x1xf32>
    %244 = vector.shape_cast %243 : vector<1x8x1xf32> to vector<8x1xf32>
    %245 = vector.broadcast %244 : vector<8x1xf32> to vector<8x288xf32>
    %246 = arith.mulf %245, %240 : vector<8x288xf32>
    %247 = arith.select %242, %240, %246 : vector<8x288xi1>, vector<8x288xf32>
    %248 = vector.broadcast %0 : vector<1x288xf32> to vector<8x288xf32>
    %249 = arith.mulf %247, %248 : vector<8x288xf32>
    %250 = arith.truncf %249 : vector<8x288xf32> to vector<8x288xbf16>
    %c24 = arith.constant 24 : index
    %c162_167 = arith.constant 162 : index
    %251 = vector.load %arg14[%c24, %c162_167] : memref<40x468xbf16, #tpu.memory_space<vmem>>, vector<8x288xbf16>
    tpu.vector_store %arg14[%c24, %c162_167], %250 {strides = array<i32>} : memref<40x468xbf16, #tpu.memory_space<vmem>>, vector<8x288xbf16>,
    %cst_168 = arith.constant 0.000000e+00 : f32
    %252 = vector.broadcast %cst_168 : f32 to vector<8x288xf32>
    %c0_169 = arith.constant 0 : index
    %c17 = arith.constant 17 : index
    %253 = vector.load %arg14[%c0_169, %c17] : memref<40x468xbf16, #tpu.memory_space<vmem>>, vector<32x288xbf16>
    %c0_170 = arith.constant 0 : index
    %c0_171 = arith.constant 0 : index
    %c0_172 = arith.constant 0 : index
    %254 = vector.load %arg6[%c0_170, %c0_171, %c0_172] : memref<6x8x32xbf16, #tpu.memory_space<vmem>>, vector<1x8x32xbf16>
    %255 = vector.shape_cast %254 : vector<1x8x32xbf16> to vector<8x32xbf16>
    %cst_173 = arith.constant dense<0.000000e+00> : vector<8x288xf32>
    %256 = tpu.matmul %255, %253, %cst_173 {dimension_numbers = #tpu.dot_dimension_numbers<[1], [0], [0], [1], [0, 0, 1, 1], [], []>} : vector<8x32xbf16>, vector<32x288xbf16>, vector<8x288xf32> -> vector<8x288xf32>
    %257 = arith.addf %252, %256 : vector<8x288xf32>
    %c0_174 = arith.constant 0 : index
    %c18 = arith.constant 18 : index
    %258 = vector.load %arg14[%c0_174, %c18] : memref<40x468xbf16, #tpu.memory_space<vmem>>, vector<32x288xbf16>
    %c1_175 = arith.constant 1 : index
    %c0_176 = arith.constant 0 : index
    %c0_177 = arith.constant 0 : index
    %259 = vector.load %arg6[%c1_175, %c0_176, %c0_177] : memref<6x8x32xbf16, #tpu.memory_space<vmem>>, vector<1x8x32xbf16>
    %260 = vector.shape_cast %259 : vector<1x8x32xbf16> to vector<8x32xbf16>
    %cst_178 = arith.constant dense<0.000000e+00> : vector<8x288xf32>
    %261 = tpu.matmul %260, %258, %cst_178 {dimension_numbers = #tpu.dot_dimension_numbers<[1], [0], [0], [1], [0, 0, 1, 1], [], []>} : vector<8x32xbf16>, vector<32x288xbf16>, vector<8x288xf32> -> vector<8x288xf32>
    %262 = arith.addf %257, %261 : vector<8x288xf32>
    %c0_179 = arith.constant 0 : index
    %c19 = arith.constant 19 : index
    %263 = vector.load %arg14[%c0_179, %c19] : memref<40x468xbf16, #tpu.memory_space<vmem>>, vector<32x288xbf16>
    %c2_180 = arith.constant 2 : index
    %c0_181 = arith.constant 0 : index
    %c0_182 = arith.constant 0 : index
    %264 = vector.load %arg6[%c2_180, %c0_181, %c0_182] : memref<6x8x32xbf16, #tpu.memory_space<vmem>>, vector<1x8x32xbf16>
    %265 = vector.shape_cast %264 : vector<1x8x32xbf16> to vector<8x32xbf16>
    %cst_183 = arith.constant dense<0.000000e+00> : vector<8x288xf32>
    %266 = tpu.matmul %265, %263, %cst_183 {dimension_numbers = #tpu.dot_dimension_numbers<[1], [0], [0], [1], [0, 0, 1, 1], [], []>} : vector<8x32xbf16>, vector<32x288xbf16>, vector<8x288xf32> -> vector<8x288xf32>
    %267 = arith.addf %262, %266 : vector<8x288xf32>
    %c0_184 = arith.constant 0 : index
    %c161_185 = arith.constant 161 : index
    %268 = vector.load %arg14[%c0_184, %c161_185] : memref<40x468xbf16, #tpu.memory_space<vmem>>, vector<32x288xbf16>
    %c3_186 = arith.constant 3 : index
    %c0_187 = arith.constant 0 : index
    %c0_188 = arith.constant 0 : index
    %269 = vector.load %arg6[%c3_186, %c0_187, %c0_188] : memref<6x8x32xbf16, #tpu.memory_space<vmem>>, vector<1x8x32xbf16>
    %270 = vector.shape_cast %269 : vector<1x8x32xbf16> to vector<8x32xbf16>
    %cst_189 = arith.constant dense<0.000000e+00> : vector<8x288xf32>
    %271 = tpu.matmul %270, %268, %cst_189 {dimension_numbers = #tpu.dot_dimension_numbers<[1], [0], [0], [1], [0, 0, 1, 1], [], []>} : vector<8x32xbf16>, vector<32x288xbf16>, vector<8x288xf32> -> vector<8x288xf32>
    %272 = arith.addf %267, %271 : vector<8x288xf32>
    %c0_190 = arith.constant 0 : index
    %c162_191 = arith.constant 162 : index
    %273 = vector.load %arg14[%c0_190, %c162_191] : memref<40x468xbf16, #tpu.memory_space<vmem>>, vector<32x288xbf16>
    %c4_192 = arith.constant 4 : index
    %c0_193 = arith.constant 0 : index
    %c0_194 = arith.constant 0 : index
    %274 = vector.load %arg6[%c4_192, %c0_193, %c0_194] : memref<6x8x32xbf16, #tpu.memory_space<vmem>>, vector<1x8x32xbf16>
    %275 = vector.shape_cast %274 : vector<1x8x32xbf16> to vector<8x32xbf16>
    %cst_195 = arith.constant dense<0.000000e+00> : vector<8x288xf32>
    %276 = tpu.matmul %275, %273, %cst_195 {dimension_numbers = #tpu.dot_dimension_numbers<[1], [0], [0], [1], [0, 0, 1, 1], [], []>} : vector<8x32xbf16>, vector<32x288xbf16>, vector<8x288xf32> -> vector<8x288xf32>
    %277 = arith.addf %272, %276 : vector<8x288xf32>
    %c0_196 = arith.constant 0 : index
    %c163_197 = arith.constant 163 : index
    %278 = vector.load %arg14[%c0_196, %c163_197] : memref<40x468xbf16, #tpu.memory_space<vmem>>, vector<32x288xbf16>
    %c5_198 = arith.constant 5 : index
    %c0_199 = arith.constant 0 : index
    %c0_200 = arith.constant 0 : index
    %279 = vector.load %arg6[%c5_198, %c0_199, %c0_200] : memref<6x8x32xbf16, #tpu.memory_space<vmem>>, vector<1x8x32xbf16>
    %280 = vector.shape_cast %279 : vector<1x8x32xbf16> to vector<8x32xbf16>
    %cst_201 = arith.constant dense<0.000000e+00> : vector<8x288xf32>
    %281 = tpu.matmul %280, %278, %cst_201 {dimension_numbers = #tpu.dot_dimension_numbers<[1], [0], [0], [1], [0, 0, 1, 1], [], []>} : vector<8x32xbf16>, vector<32x288xbf16>, vector<8x288xf32> -> vector<8x288xf32>
    %282 = arith.addf %277, %281 : vector<8x288xf32>
    %283 = vector.broadcast %0 : vector<1x288xf32> to vector<8x288xf32>
    %284 = arith.mulf %282, %283 : vector<8x288xf32>
    %cst_202 = arith.constant dense<0.000000e+00> : vector<8xf32>
    %285 = vector.multi_reduction <add>, %284, %cst_202 [1] : vector<8x288xf32> to vector<8xf32>
    %286 = vector.shape_cast %285 : vector<8xf32> to vector<8x1xf32>
    %cst_203 = arith.constant 3.906250e-03 : f32
    %287 = vector.broadcast %cst_203 : f32 to vector<8x1xf32>
    %288 = arith.mulf %286, %287 : vector<8x1xf32>
    %289 = vector.broadcast %288 : vector<8x1xf32> to vector<8x288xf32>
    %290 = arith.subf %282, %289 : vector<8x288xf32>
    %291 = arith.mulf %290, %290 : vector<8x288xf32>
    %292 = vector.broadcast %0 : vector<1x288xf32> to vector<8x288xf32>
    %293 = arith.mulf %291, %292 : vector<8x288xf32>
    %cst_204 = arith.constant dense<0.000000e+00> : vector<8xf32>
    %294 = vector.multi_reduction <add>, %293, %cst_204 [1] : vector<8x288xf32> to vector<8xf32>
    %295 = vector.shape_cast %294 : vector<8xf32> to vector<8x1xf32>
    %cst_205 = arith.constant 3.906250e-03 : f32
    %296 = vector.broadcast %cst_205 : f32 to vector<8x1xf32>
    %297 = arith.mulf %295, %296 : vector<8x1xf32>
    %c4_206 = arith.constant 4 : index
    %c0_207 = arith.constant 0 : index
    %c0_208 = arith.constant 0 : index
    %298 = vector.load %arg10[%c4_206, %c0_207, %c0_208] : memref<6x8x1xf32, #tpu.memory_space<vmem>>, vector<1x8x1xf32>
    %299 = vector.shape_cast %298 : vector<1x8x1xf32> to vector<8x1xf32>
    %cst_209 = arith.constant 9.99999974E-6 : f32
    %300 = vector.broadcast %cst_209 : f32 to vector<8x1xf32>
    %301 = arith.addf %297, %300 : vector<8x1xf32>
    %302 = math.rsqrt %301 : vector<8x1xf32>
    %303 = arith.mulf %299, %302 : vector<8x1xf32>
    %304 = vector.broadcast %303 : vector<8x1xf32> to vector<8x288xf32>
    %305 = arith.mulf %290, %304 : vector<8x288xf32>
    %c4_210 = arith.constant 4 : index
    %c0_211 = arith.constant 0 : index
    %c0_212 = arith.constant 0 : index
    %306 = vector.load %arg11[%c4_210, %c0_211, %c0_212] : memref<6x8x1xf32, #tpu.memory_space<vmem>>, vector<1x8x1xf32>
    %307 = vector.shape_cast %306 : vector<1x8x1xf32> to vector<8x1xf32>
    %308 = vector.broadcast %307 : vector<8x1xf32> to vector<8x288xf32>
    %309 = arith.addf %305, %308 : vector<8x288xf32>
    %cst_213 = arith.constant 0.000000e+00 : f32
    %310 = vector.broadcast %cst_213 : f32 to vector<8x288xf32>
    %311 = arith.cmpf oge, %309, %310 : vector<8x288xf32>
    %c4_214 = arith.constant 4 : index
    %c0_215 = arith.constant 0 : index
    %c0_216 = arith.constant 0 : index
    %312 = vector.load %arg12[%c4_214, %c0_215, %c0_216] : memref<6x8x1xf32, #tpu.memory_space<vmem>>, vector<1x8x1xf32>
    %313 = vector.shape_cast %312 : vector<1x8x1xf32> to vector<8x1xf32>
    %314 = vector.broadcast %313 : vector<8x1xf32> to vector<8x288xf32>
    %315 = arith.mulf %314, %309 : vector<8x288xf32>
    %316 = arith.select %311, %309, %315 : vector<8x288xi1>, vector<8x288xf32>
    %317 = vector.broadcast %0 : vector<1x288xf32> to vector<8x288xf32>
    %318 = arith.mulf %316, %317 : vector<8x288xf32>
    %319 = arith.truncf %318 : vector<8x288xf32> to vector<8x288xbf16>
    %c32 = arith.constant 32 : index
    %c162_217 = arith.constant 162 : index
    %320 = vector.load %arg14[%c32, %c162_217] : memref<40x468xbf16, #tpu.memory_space<vmem>>, vector<8x288xbf16>
    tpu.vector_store %arg14[%c32, %c162_217], %319 {strides = array<i32>} : memref<40x468xbf16, #tpu.memory_space<vmem>>, vector<8x288xbf16>,
    %cst_218 = arith.constant 0.000000e+00 : f32
    %321 = vector.broadcast %cst_218 : f32 to vector<8x288xf32>
    %c32_219 = arith.constant 32 : index
    %c161_220 = arith.constant 161 : index
    %322 = vector.load %arg14[%c32_219, %c161_220] : memref<40x468xbf16, #tpu.memory_space<vmem>>, vector<8x288xbf16>
    %c0_221 = arith.constant 0 : index
    %c0_222 = arith.constant 0 : index
    %c0_223 = arith.constant 0 : index
    %323 = vector.load %arg7[%c0_221, %c0_222, %c0_223] : memref<3x8x8xbf16, #tpu.memory_space<vmem>>, vector<1x8x8xbf16>
    %324 = vector.shape_cast %323 : vector<1x8x8xbf16> to vector<8x8xbf16>
    %cst_224 = arith.constant dense<0.000000e+00> : vector<8x288xf32>
    %325 = tpu.matmul %324, %322, %cst_224 {dimension_numbers = #tpu.dot_dimension_numbers<[1], [0], [0], [1], [0, 0, 1, 1], [], []>} : vector<8x8xbf16>, vector<8x288xbf16>, vector<8x288xf32> -> vector<8x288xf32>
    %326 = arith.addf %321, %325 : vector<8x288xf32>
    %c32_225 = arith.constant 32 : index
    %c162_226 = arith.constant 162 : index
    %327 = vector.load %arg14[%c32_225, %c162_226] : memref<40x468xbf16, #tpu.memory_space<vmem>>, vector<8x288xbf16>
    %c1_227 = arith.constant 1 : index
    %c0_228 = arith.constant 0 : index
    %c0_229 = arith.constant 0 : index
    %328 = vector.load %arg7[%c1_227, %c0_228, %c0_229] : memref<3x8x8xbf16, #tpu.memory_space<vmem>>, vector<1x8x8xbf16>
    %329 = vector.shape_cast %328 : vector<1x8x8xbf16> to vector<8x8xbf16>
    %cst_230 = arith.constant dense<0.000000e+00> : vector<8x288xf32>
    %330 = tpu.matmul %329, %327, %cst_230 {dimension_numbers = #tpu.dot_dimension_numbers<[1], [0], [0], [1], [0, 0, 1, 1], [], []>} : vector<8x8xbf16>, vector<8x288xbf16>, vector<8x288xf32> -> vector<8x288xf32>
    %331 = arith.addf %326, %330 : vector<8x288xf32>
    %c32_231 = arith.constant 32 : index
    %c163_232 = arith.constant 163 : index
    %332 = vector.load %arg14[%c32_231, %c163_232] : memref<40x468xbf16, #tpu.memory_space<vmem>>, vector<8x288xbf16>
    %c2_233 = arith.constant 2 : index
    %c0_234 = arith.constant 0 : index
    %c0_235 = arith.constant 0 : index
    %333 = vector.load %arg7[%c2_233, %c0_234, %c0_235] : memref<3x8x8xbf16, #tpu.memory_space<vmem>>, vector<1x8x8xbf16>
    %334 = vector.shape_cast %333 : vector<1x8x8xbf16> to vector<8x8xbf16>
    %cst_236 = arith.constant dense<0.000000e+00> : vector<8x288xf32>
    %335 = tpu.matmul %334, %332, %cst_236 {dimension_numbers = #tpu.dot_dimension_numbers<[1], [0], [0], [1], [0, 0, 1, 1], [], []>} : vector<8x8xbf16>, vector<8x288xbf16>, vector<8x288xf32> -> vector<8x288xf32>
    %336 = arith.addf %331, %335 : vector<8x288xf32>
    %c0_237 = arith.constant 0 : index
    %c0_238 = arith.constant 0 : index
    %337 = vector.load %arg8[%c0_237, %c0_238] : memref<288x128xf32, #tpu.memory_space<vmem>>, vector<288x128xf32>
    %cst_239 = arith.constant dense<0.000000e+00> : vector<8x128xf32>
    %338 = tpu.matmul %336, %337, %cst_239 {dimension_numbers = #tpu.dot_dimension_numbers<[1], [0], [0], [1], [0, 0, 1, 1], [], []>} : vector<8x288xf32>, vector<288x128xf32>, vector<8x128xf32> -> vector<8x128xf32>
    %cst_240 = arith.constant dense<0.000000e+00> : vector<8xf32>
    %339 = vector.multi_reduction <add>, %338, %cst_240 [1] : vector<8x128xf32> to vector<8xf32>
    %340 = vector.shape_cast %339 : vector<8xf32> to vector<8x1xf32>
    %cst_241 = arith.constant 7.812500e-03 : f32
    %341 = vector.broadcast %cst_241 : f32 to vector<8x1xf32>
    %342 = arith.mulf %340, %341 : vector<8x1xf32>
    %343 = vector.broadcast %342 : vector<8x1xf32> to vector<8x128xf32>
    %344 = arith.subf %338, %343 : vector<8x128xf32>
    %345 = arith.mulf %344, %344 : vector<8x128xf32>
    %cst_242 = arith.constant dense<0.000000e+00> : vector<8xf32>
    %346 = vector.multi_reduction <add>, %345, %cst_242 [1] : vector<8x128xf32> to vector<8xf32>
    %347 = vector.shape_cast %346 : vector<8xf32> to vector<8x1xf32>
    %cst_243 = arith.constant 7.812500e-03 : f32
    %348 = vector.broadcast %cst_243 : f32 to vector<8x1xf32>
    %349 = arith.mulf %347, %348 : vector<8x1xf32>
    %c5_244 = arith.constant 5 : index
    %c0_245 = arith.constant 0 : index
    %c0_246 = arith.constant 0 : index
    %350 = vector.load %arg10[%c5_244, %c0_245, %c0_246] : memref<6x8x1xf32, #tpu.memory_space<vmem>>, vector<1x8x1xf32>
    %351 = vector.shape_cast %350 : vector<1x8x1xf32> to vector<8x1xf32>
    %cst_247 = arith.constant 9.99999974E-6 : f32
    %352 = vector.broadcast %cst_247 : f32 to vector<8x1xf32>
    %353 = arith.addf %349, %352 : vector<8x1xf32>
    %354 = math.rsqrt %353 : vector<8x1xf32>
    %355 = arith.mulf %351, %354 : vector<8x1xf32>
    %356 = vector.broadcast %355 : vector<8x1xf32> to vector<8x128xf32>
    %357 = arith.mulf %344, %356 : vector<8x128xf32>
    %c5_248 = arith.constant 5 : index
    %c0_249 = arith.constant 0 : index
    %c0_250 = arith.constant 0 : index
    %358 = vector.load %arg11[%c5_248, %c0_249, %c0_250] : memref<6x8x1xf32, #tpu.memory_space<vmem>>, vector<1x8x1xf32>
    %359 = vector.shape_cast %358 : vector<1x8x1xf32> to vector<8x1xf32>
    %360 = vector.broadcast %359 : vector<8x1xf32> to vector<8x128xf32>
    %361 = arith.addf %357, %360 : vector<8x128xf32>
    %cst_251 = arith.constant 0.000000e+00 : f32
    %362 = vector.broadcast %cst_251 : f32 to vector<8x128xf32>
    %363 = arith.cmpf oge, %361, %362 : vector<8x128xf32>
    %c5_252 = arith.constant 5 : index
    %c0_253 = arith.constant 0 : index
    %c0_254 = arith.constant 0 : index
    %364 = vector.load %arg12[%c5_252, %c0_253, %c0_254] : memref<6x8x1xf32, #tpu.memory_space<vmem>>, vector<1x8x1xf32>
    %365 = vector.shape_cast %364 : vector<1x8x1xf32> to vector<8x1xf32>
    %366 = vector.broadcast %365 : vector<8x1xf32> to vector<8x128xf32>
    %367 = arith.mulf %366, %361 : vector<8x128xf32>
    %368 = arith.select %363, %361, %367 : vector<8x128xi1>, vector<8x128xf32>
    %c0_255 = arith.constant 0 : index
    %c0_256 = arith.constant 0 : index
    %c0_257 = arith.constant 0 : index
    %369 = vector.load %arg13[%c0_255, %c0_256, %c0_257] : memref<1x8x128xf32, #tpu.memory_space<vmem>>, vector<1x8x128xf32>
    %370 = vector.shape_cast %369 : vector<1x8x128xf32> to vector<8x128xf32>
    %371 = vector.shape_cast %368 : vector<8x128xf32> to vector<1x8x128xf32>
    tpu.vector_store %arg13[%c0_255, %c0_256, %c0_257], %371 {strides = array<i32>} : memref<1x8x128xf32, #tpu.memory_space<vmem>>, vector<1x8x128xf32>,
    return
  }
  func.func @transform_0(%arg0: i32) -> (i32, i32, i32) {
    %c0_i32 = arith.constant 0 : i32
    %c0_i32_0 = arith.constant 0 : i32
    %c0_i32_1 = arith.constant 0 : i32
    return %arg0, %c0_i32, %c0_i32_0 : i32, i32, i32
  }
  func.func @transform_1(%arg0: i32) -> (i32, i32) {
    %c0_i32 = arith.constant 0 : i32
    %c0_i32_0 = arith.constant 0 : i32
    %c0_i32_1 = arith.constant 0 : i32
    return %c0_i32, %c0_i32_0 : i32, i32
  }
  func.func @transform_2(%arg0: i32) -> (i32, i32, i32) {
    %c0_i32 = arith.constant 0 : i32
    %c0_i32_0 = arith.constant 0 : i32
    %c0_i32_1 = arith.constant 0 : i32
    %c0_i32_2 = arith.constant 0 : i32
    return %c0_i32, %c0_i32_0, %c0_i32_1 : i32, i32, i32
  }
  func.func @transform_3(%arg0: i32) -> (i32, i32, i32) {
    %c0_i32 = arith.constant 0 : i32
    %c0_i32_0 = arith.constant 0 : i32
    %c0_i32_1 = arith.constant 0 : i32
    %c0_i32_2 = arith.constant 0 : i32
    return %c0_i32, %c0_i32_0, %c0_i32_1 : i32, i32, i32
  }
  func.func @transform_4(%arg0: i32) -> (i32, i32, i32) {
    %c0_i32 = arith.constant 0 : i32
    %c0_i32_0 = arith.constant 0 : i32
    %c0_i32_1 = arith.constant 0 : i32
    %c0_i32_2 = arith.constant 0 : i32
    return %c0_i32, %c0_i32_0, %c0_i32_1 : i32, i32, i32
  }
  func.func @transform_5(%arg0: i32) -> (i32, i32, i32) {
    %c0_i32 = arith.constant 0 : i32
    %c0_i32_0 = arith.constant 0 : i32
    %c0_i32_1 = arith.constant 0 : i32
    %c0_i32_2 = arith.constant 0 : i32
    return %c0_i32, %c0_i32_0, %c0_i32_1 : i32, i32, i32
  }
  func.func @transform_6(%arg0: i32) -> (i32, i32, i32) {
    %c0_i32 = arith.constant 0 : i32
    %c0_i32_0 = arith.constant 0 : i32
    %c0_i32_1 = arith.constant 0 : i32
    %c0_i32_2 = arith.constant 0 : i32
    return %c0_i32, %c0_i32_0, %c0_i32_1 : i32, i32, i32
  }
  func.func @transform_7(%arg0: i32) -> (i32, i32) {
    %c0_i32 = arith.constant 0 : i32
    %c0_i32_0 = arith.constant 0 : i32
    %c0_i32_1 = arith.constant 0 : i32
    return %c0_i32, %c0_i32_0 : i32, i32
  }
  func.func @transform_8(%arg0: i32) -> (i32, i32) {
    %c0_i32 = arith.constant 0 : i32
    %c0_i32_0 = arith.constant 0 : i32
    %c0_i32_1 = arith.constant 0 : i32
    return %c0_i32, %c0_i32_0 : i32, i32
  }
  func.func @transform_9(%arg0: i32) -> (i32, i32, i32) {
    %c0_i32 = arith.constant 0 : i32
    %c0_i32_0 = arith.constant 0 : i32
    %c0_i32_1 = arith.constant 0 : i32
    %c0_i32_2 = arith.constant 0 : i32
    return %c0_i32, %c0_i32_0, %c0_i32_1 : i32, i32, i32
  }
  func.func @transform_10(%arg0: i32) -> (i32, i32, i32) {
    %c0_i32 = arith.constant 0 : i32
    %c0_i32_0 = arith.constant 0 : i32
    %c0_i32_1 = arith.constant 0 : i32
    %c0_i32_2 = arith.constant 0 : i32
    return %c0_i32, %c0_i32_0, %c0_i32_1 : i32, i32, i32
  }
  func.func @transform_11(%arg0: i32) -> (i32, i32, i32) {
    %c0_i32 = arith.constant 0 : i32
    %c0_i32_0 = arith.constant 0 : i32
    %c0_i32_1 = arith.constant 0 : i32
    %c0_i32_2 = arith.constant 0 : i32
    return %c0_i32, %c0_i32_0, %c0_i32_1 : i32, i32, i32
  }
  func.func @transform_12(%arg0: i32) -> (i32, i32, i32) {
    %c0_i32 = arith.constant 0 : i32
    %c0_i32_0 = arith.constant 0 : i32
    %c0_i32_1 = arith.constant 0 : i32
    return %arg0, %c0_i32, %c0_i32_0 : i32, i32, i32
  }
}

</mosaic_0001>

<llo_original>
// kernel: dense_encoder_forward.1
$region0: #{dense_encoder_forward.1}
  #allocation0 [shape = 'u32[]', space=smem, size = 0x4, offset = 0x4, fixed_abs, tag = 'smem constant byte address 0x4 - core index']
  #allocation1 [shape = 'u32[144,128]{1,0:T(1,128)}', space=vmem, size = 0x12000, scoped, tag = 'internal scratch']
  #allocation2 [shape = 'bf16[40,468]{1,0:T(8,128)(2,1)}', space=vmem, size = 0xa000, scoped, tag = 'scratch operand']
  %s0 = inlined_call_operand.vmem [shape: bf16[2,2,288], index: 0, kind: input, shape index: {}]
  %s1 = inlined_call_operand.vmem [shape: bf16[8,2], index: 1, kind: input, shape index: {}]
  %s2 = inlined_call_operand.vmem [shape: bf16[6,8,8], index: 2, kind: input, shape index: {}]
  %s3 = inlined_call_operand.vmem [shape: bf16[6,8,16], index: 3, kind: input, shape index: {}]
  %s4 = inlined_call_operand.vmem [shape: bf16[6,8,24], index: 4, kind: input, shape index: {}]
  %s5 = inlined_call_operand.vmem [shape: bf16[6,8,32], index: 5, kind: input, shape index: {}]
  %s6 = inlined_call_operand.vmem [shape: bf16[3,8,8], index: 6, kind: input, shape index: {}]
  %s7 = inlined_call_operand.vmem [shape: f32[288,128], index: 7, kind: input, shape index: {}]
  %s8 = inlined_call_operand.vmem [shape: f32[1,288], index: 8, kind: input, shape index: {}]
  %s9 = inlined_call_operand.vmem [shape: f32[6,8,1], index: 9, kind: input, shape index: {}]
  %s10 = inlined_call_operand.vmem [shape: f32[6,8,1], index: 10, kind: input, shape index: {}]
  %s11 = inlined_call_operand.vmem [shape: f32[6,8,1], index: 11, kind: input, shape index: {}]
  %s12 = inlined_call_operand.vmem [shape: f32[2,8,128], index: 12, kind: output, shape index: {}]
  %s13 = sld [smem:[#allocation0]]
  $region81: #{dense_encoder_forward.1} parent=0
    _
  %s15 = ssub.s32 1, %s13
  %s16 = scalar_select 0, %s15, %s13
  loop: start=0, step=1, limit=4
  $region2: #{dense_encoder_forward.1} parent=0 // loop_pre_header
    _
  $region3: #{dense_encoder_forward.1} parent=0 // loop_header
    %s18 = sphi 0, %s22
    %p19 = scmp.ge.s32.totalorder %s18, 4
    %s28 = sphi 0, %s30
    %s31 = sphi 0, %s28
    %s32 = sphi 0, %s31
    %s48 = sphi 0, %s32
    %s52 = sphi 0, %s52
    %s54 = sphi 0, %s52
    %s55 = sphi 0, %s54
    %s69 = sphi 0, %s55
    %s73 = sphi 0, %s73
    %s75 = sphi 0, %s73
    %s76 = sphi 0, %s75
    %s90 = sphi 0, %s76
    %s94 = sphi 0, %s94
    %s96 = sphi 0, %s94
    %s97 = sphi 0, %s96
    %s111 = sphi 0, %s97
    %s115 = sphi 0, %s115
    %s117 = sphi 0, %s115
    %s118 = sphi 0, %s117
    %s132 = sphi 0, %s118
    %s136 = sphi 0, %s136
    %s138 = sphi 0, %s136
    %s139 = sphi 0, %s138
    %s153 = sphi 0, %s139
    %s157 = sphi 0, %s157
    %s159 = sphi 0, %s157
    %s160 = sphi 0, %s159
    %s174 = sphi 0, %s160
    %s178 = sphi 0, %s178
    %s180 = sphi 0, %s178
    %s181 = sphi 0, %s180
    %s195 = sphi 0, %s181
    %s199 = sphi 0, %s199
    %s201 = sphi 0, %s199
    %s202 = sphi 0, %s201
    %s216 = sphi 0, %s202
    %s220 = sphi 0, %s220
    %s222 = sphi 0, %s220
    %s223 = sphi 0, %s222
    %s237 = sphi 0, %s223
    %s241 = sphi 0, %s241
    %s243 = sphi 0, %s241
    %s244 = sphi 0, %s243
    %s258 = sphi 0, %s244
    %s262 = sphi 0, %s262
    %s264 = sphi 0, %s262
    %s265 = sphi 0, %s264
    %s279 = sphi 0, %s265
    %s285 = sphi 0, %s287
    %s288 = sphi 0, %s285
    %s289 = sphi 0, %s288
    %s305 = sphi 0, %s289
  $region4: #{dense_encoder_forward.1} parent=0 // loop_header_branch
    %21 = sbr.rel (%p19) target = $region8
  $region5: #{dense_encoder_forward.1} parent=0 // loop_body
    %s23 = ssub.s32 %s18, 1
    %s24 = ssub.s32 %s18, 2
    %s25 = sadd.s32 %s18, 1
    %s26 = ssub.s32 %s18, %s25
    %p27 = scmp.eq.s32.totalorder %s26, 0
    %s29 = sadd.s32 %s28, 1
    %s30 = scalar_select %p27, %s28, %s29
    %p33 = pneg %p27
    %p34 = scmp.eq.s32.totalorder %s18, 1
    %p35 = por %p33, %p34
    %p36 = scmp.ne.s32.totalorder %s28, %s31
    %p37 = scmp.eq.s32.totalorder %s18, 0
    %p38 = por %p36, %p37
    %p39 = scmp.ne.s32.totalorder %s28, %s31
    %p40 = scmp.eq.s32.totalorder %s23, 1
    %p41 = por %p39, %p40
    %p42 = scmp.ne.s32.totalorder %s31, %s32
    %p43 = scmp.eq.s32.totalorder %s23, 0
    %p44 = por %p42, %p43
    %p45 = scmp.ne.s32.totalorder %s31, %s32
    %p46 = scmp.eq.s32.totalorder %s24, 1
    %p47 = por %p45, %p46
    %p49 = scmp.ne.s32.totalorder %s32, %s48
    %p50 = scmp.eq.s32.totalorder %s24, 0
    %p51 = por %p49, %p50
    %s53 = sadd.s32 %s52, 1
    %p56 = scmp.eq.s32.totalorder %s18, 1
    %p57 = scmp.ne.s32.totalorder %s52, %s54
    %p58 = scmp.eq.s32.totalorder %s18, 0
    %p59 = por %p57, %p58
    %p60 = scmp.ne.s32.totalorder %s52, %s54
    %p61 = scmp.eq.s32.totalorder %s23, 1
    %p62 = por %p60, %p61
    %p63 = scmp.ne.s32.totalorder %s54, %s55
    %p64 = scmp.eq.s32.totalorder %s23, 0
    %p65 = por %p63, %p64
    %p66 = scmp.ne.s32.totalorder %s54, %s55
    %p67 = scmp.eq.s32.totalorder %s24, 1
    %p68 = por %p66, %p67
    %p70 = scmp.ne.s32.totalorder %s55, %s69
    %p71 = scmp.eq.s32.totalorder %s24, 0
    %p72 = por %p70, %p71
    %s74 = sadd.s32 %s73, 1
    %p77 = scmp.eq.s32.totalorder %s18, 1
    %p78 = scmp.ne.s32.totalorder %s73, %s75
    %p79 = scmp.eq.s32.totalorder %s18, 0
    %p80 = por %p78, %p79
    %p81 = scmp.ne.s32.totalorder %s73, %s75
    %p82 = scmp.eq.s32.totalorder %s23, 1
    %p83 = por %p81, %p82
    %p84 = scmp.ne.s32.totalorder %s75, %s76
    %p85 = scmp.eq.s32.totalorder %s23, 0
    %p86 = por %p84, %p85
    %p87 = scmp.ne.s32.totalorder %s75, %s76
    %p88 = scmp.eq.s32.totalorder %s24, 1
    %p89 = por %p87, %p88
    %p91 = scmp.ne.s32.totalorder %s76, %s90
    %p92 = scmp.eq.s32.totalorder %s24, 0
    %p93 = por %p91, %p92
    %s95 = sadd.s32 %s94, 1
    %p98 = scmp.eq.s32.totalorder %s18, 1
    %p99 = scmp.ne.s32.totalorder %s94, %s96
    %p100 = scmp.eq.s32.totalorder %s18, 0
    %p101 = por %p99, %p100
    %p102 = scmp.ne.s32.totalorder %s94, %s96
    %p103 = scmp.eq.s32.totalorder %s23, 1
    %p104 = por %p102, %p103
    %p105 = scmp.ne.s32.totalorder %s96, %s97
    %p106 = scmp.eq.s32.totalorder %s23, 0
    %p107 = por %p105, %p106
    %p108 = scmp.ne.s32.totalorder %s96, %s97
    %p109 = scmp.eq.s32.totalorder %s24, 1
    %p110 = por %p108, %p109
    %p112 = scmp.ne.s32.totalorder %s97, %s111
    %p113 = scmp.eq.s32.totalorder %s24, 0
    %p114 = por %p112, %p113
    %s116 = sadd.s32 %s115, 1
    %p119 = scmp.eq.s32.totalorder %s18, 1
    %p120 = scmp.ne.s32.totalorder %s115, %s117
    %p121 = scmp.eq.s32.totalorder %s18, 0
    %p122 = por %p120, %p121
    %p123 = scmp.ne.s32.totalorder %s115, %s117
    %p124 = scmp.eq.s32.totalorder %s23, 1
    %p125 = por %p123, %p124
    %p126 = scmp.ne.s32.totalorder %s117, %s118
    %p127 = scmp.eq.s32.totalorder %s23, 0
    %p128 = por %p126, %p127
    %p129 = scmp.ne.s32.totalorder %s117, %s118
    %p130 = scmp.eq.s32.totalorder %s24, 1
    %p131 = por %p129, %p130
    %p133 = scmp.ne.s32.totalorder %s118, %s132
    %p134 = scmp.eq.s32.totalorder %s24, 0
    %p135 = por %p133, %p134
    %s137 = sadd.s32 %s136, 1
    %p140 = scmp.eq.s32.totalorder %s18, 1
    %p141 = scmp.ne.s32.totalorder %s136, %s138
    %p142 = scmp.eq.s32.totalorder %s18, 0
    %p143 = por %p141, %p142
    %p144 = scmp.ne.s32.totalorder %s136, %s138
    %p145 = scmp.eq.s32.totalorder %s23, 1
    %p146 = por %p144, %p145
    %p147 = scmp.ne.s32.totalorder %s138, %s139
    %p148 = scmp.eq.s32.totalorder %s23, 0
    %p149 = por %p147, %p148
    %p150 = scmp.ne.s32.totalorder %s138, %s139
    %p151 = scmp.eq.s32.totalorder %s24, 1
    %p152 = por %p150, %p151
    %p154 = scmp.ne.s32.totalorder %s139, %s153
    %p155 = scmp.eq.s32.totalorder %s24, 0
    %p156 = por %p154, %p155
    %s158 = sadd.s32 %s157, 1
    %p161 = scmp.eq.s32.totalorder %s18, 1
    %p162 = scmp.ne.s32.totalorder %s157, %s159
    %p163 = scmp.eq.s32.totalorder %s18, 0
    %p164 = por %p162, %p163
    %p165 = scmp.ne.s32.totalorder %s157, %s159
    %p166 = scmp.eq.s32.totalorder %s23, 1
    %p167 = por %p165, %p166
    %p168 = scmp.ne.s32.totalorder %s159, %s160
    %p169 = scmp.eq.s32.totalorder %s23, 0
    %p170 = por %p168, %p169
    %p171 = scmp.ne.s32.totalorder %s159, %s160
    %p172 = scmp.eq.s32.totalorder %s24, 1
    %p173 = por %p171, %p172
    %p175 = scmp.ne.s32.totalorder %s160, %s174
    %p176 = scmp.eq.s32.totalorder %s24, 0
    %p177 = por %p175, %p176
    %s179 = sadd.s32 %s178, 1
    %p182 = scmp.eq.s32.totalorder %s18, 1
    %p183 = scmp.ne.s32.totalorder %s178, %s180
    %p184 = scmp.eq.s32.totalorder %s18, 0
    %p185 = por %p183, %p184
    %p186 = scmp.ne.s32.totalorder %s178, %s180
    %p187 = scmp.eq.s32.totalorder %s23, 1
    %p188 = por %p186, %p187
    %p189 = scmp.ne.s32.totalorder %s180, %s181
    %p190 = scmp.eq.s32.totalorder %s23, 0
    %p191 = por %p189, %p190
    %p192 = scmp.ne.s32.totalorder %s180, %s181
    %p193 = scmp.eq.s32.totalorder %s24, 1
    %p194 = por %p192, %p193
    %p196 = scmp.ne.s32.totalorder %s181, %s195
    %p197 = scmp.eq.s32.totalorder %s24, 0
    %p198 = por %p196, %p197
    %s200 = sadd.s32 %s199, 1
    %p203 = scmp.eq.s32.totalorder %s18, 1
    %p204 = scmp.ne.s32.totalorder %s199, %s201
    %p205 = scmp.eq.s32.totalorder %s18, 0
    %p206 = por %p204, %p205
    %p207 = scmp.ne.s32.totalorder %s199, %s201
    %p208 = scmp.eq.s32.totalorder %s23, 1
    %p209 = por %p207, %p208
    %p210 = scmp.ne.s32.totalorder %s201, %s202
    %p211 = scmp.eq.s32.totalorder %s23, 0
    %p212 = por %p210, %p211
    %p213 = scmp.ne.s32.totalorder %s201, %s202
    %p214 = scmp.eq.s32.totalorder %s24, 1
    %p215 = por %p213, %p214
    %p217 = scmp.ne.s32.totalorder %s202, %s216
    %p218 = scmp.eq.s32.totalorder %s24, 0
    %p219 = por %p217, %p218
    %s221 = sadd.s32 %s220, 1
    %p224 = scmp.eq.s32.totalorder %s18, 1
    %p225 = scmp.ne.s32.totalorder %s220, %s222
    %p226 = scmp.eq.s32.totalorder %s18, 0
    %p227 = por %p225, %p226
    %p228 = scmp.ne.s32.totalorder %s220, %s222
    %p229 = scmp.eq.s32.totalorder %s23, 1
    %p230 = por %p228, %p229
    %p231 = scmp.ne.s32.totalorder %s222, %s223
    %p232 = scmp.eq.s32.totalorder %s23, 0
    %p233 = por %p231, %p232
    %p234 = scmp.ne.s32.totalorder %s222, %s223
    %p235 = scmp.eq.s32.totalorder %s24, 1
    %p236 = por %p234, %p235
    %p238 = scmp.ne.s32.totalorder %s223, %s237
    %p239 = scmp.eq.s32.totalorder %s24, 0
    %p240 = por %p238, %p239
    %s242 = sadd.s32 %s241, 1
    %p245 = scmp.eq.s32.totalorder %s18, 1
    %p246 = scmp.ne.s32.totalorder %s241, %s243
    %p247 = scmp.eq.s32.totalorder %s18, 0
    %p248 = por %p246, %p247
    %p249 = scmp.ne.s32.totalorder %s241, %s243
    %p250 = scmp.eq.s32.totalorder %s23, 1
    %p251 = por %p249, %p250
    %p252 = scmp.ne.s32.totalorder %s243, %s244
    %p253 = scmp.eq.s32.totalorder %s23, 0
    %p254 = por %p252, %p253
    %p255 = scmp.ne.s32.totalorder %s243, %s244
    %p256 = scmp.eq.s32.totalorder %s24, 1
    %p257 = por %p255, %p256
    %p259 = scmp.ne.s32.totalorder %s244, %s258
    %p260 = scmp.eq.s32.totalorder %s24, 0
    %p261 = por %p259, %p260
    %s263 = sadd.s32 %s262, 1
    %p266 = scmp.eq.s32.totalorder %s18, 1
    %p267 = scmp.ne.s32.totalorder %s262, %s264
    %p268 = scmp.eq.s32.totalorder %s18, 0
    %p269 = por %p267, %p268
    %p270 = scmp.ne.s32.totalorder %s262, %s264
    %p271 = scmp.eq.s32.totalorder %s23, 1
    %p272 = por %p270, %p271
    %p273 = scmp.ne.s32.totalorder %s264, %s265
    %p274 = scmp.eq.s32.totalorder %s23, 0
    %p275 = por %p273, %p274
    %p276 = scmp.ne.s32.totalorder %s264, %s265
    %p277 = scmp.eq.s32.totalorder %s24, 1
    %p278 = por %p276, %p277
    %p280 = scmp.ne.s32.totalorder %s265, %s279
    %p281 = scmp.eq.s32.totalorder %s24, 0
    %p282 = por %p280, %p281
    %s283 = ssub.s32 %s18, %s25
    %p284 = scmp.eq.s32.totalorder %s283, 0
    %s286 = sadd.s32 %s285, 1
    %s287 = scalar_select %p284, %s285, %s286
    %p290 = pneg %p284
    %p291 = scmp.eq.s32.totalorder %s18, 1
    %p292 = por %p290, %p291
    %p293 = scmp.ne.s32.totalorder %s285, %s288
    %p294 = scmp.eq.s32.totalorder %s18, 0
    %p295 = por %p293, %p294
    %p296 = scmp.ne.s32.totalorder %s285, %s288
    %p297 = scmp.eq.s32.totalorder %s23, 1
    %p298 = por %p296, %p297
    %p299 = scmp.ne.s32.totalorder %s288, %s289
    %p300 = scmp.eq.s32.totalorder %s23, 0
    %p301 = por %p299, %p300
    %p302 = scmp.ne.s32.totalorder %s288, %s289
    %p303 = scmp.eq.s32.totalorder %s24, 1
    %p304 = por %p302, %p303
    %p306 = scmp.ne.s32.totalorder %s289, %s305
    %p307 = scmp.eq.s32.totalorder %s24, 0
    %p308 = por %p306, %p307
    %p309 = scmp.le.s32.totalorder 1, %s18
    %p310 = scmp.lt.s32.totalorder %s18, 3
    %p311 = pnand %p309, %p310
    %p312 = pneg %p311
    // Predicated region
    $region9: #{dense_encoder_forward.1} parent=5 // pred_check
      _
    $region10: #{dense_encoder_forward.1} parent=5 // pred_check_branch
      %314 = sbr.rel (%p311) target = $region12
    $region11: #{dense_encoder_forward.1} parent=5 // pred_region
      %s315 = ssub.s32 %s18, 1
      // Predicated region
      $region13: #{dense_encoder_forward.1} parent=11 // pred_check
        %p316 = pneg %p65
      $region14: #{dense_encoder_forward.1} parent=11 // pred_check_branch
        %318 = sbr.rel (%p316) target = $region16
      $region15: #{dense_encoder_forward.1} parent=11 // pred_region
        _
      $region16: #{dense_encoder_forward.1} parent=11 // pred_fallthru
        _
      // Predicated region
      $region17: #{dense_encoder_forward.1} parent=11 // pred_check
        %p319 = pneg %p86
      $region18: #{dense_encoder_forward.1} parent=11 // pred_check_branch
        %321 = sbr.rel (%p319) target = $region20
      $region19: #{dense_encoder_forward.1} parent=11 // pred_region
        _
      $region20: #{dense_encoder_forward.1} parent=11 // pred_fallthru
        _
      // Predicated region
      $region21: #{dense_encoder_forward.1} parent=11 // pred_check
        %p322 = pneg %p107
      $region22: #{dense_encoder_forward.1} parent=11 // pred_check_branch
        %324 = sbr.rel (%p322) target = $region24
      $region23: #{dense_encoder_forward.1} parent=11 // pred_region
        _
      $region24: #{dense_encoder_forward.1} parent=11 // pred_fallthru
        _
      // Predicated region
      $region25: #{dense_encoder_forward.1} parent=11 // pred_check
        %p325 = pneg %p128
      $region26: #{dense_encoder_forward.1} parent=11 // pred_check_branch
        %327 = sbr.rel (%p325) target = $region28
      $region27: #{dense_encoder_forward.1} parent=11 // pred_region
        _
      $region28: #{dense_encoder_forward.1} parent=11 // pred_fallthru
        _
      // Predicated region
      $region29: #{dense_encoder_forward.1} parent=11 // pred_check
        %p328 = pneg %p149
      $region30: #{dense_encoder_forward.1} parent=11 // pred_check_branch
        %330 = sbr.rel (%p328) target = $region32
      $region31: #{dense_encoder_forward.1} parent=11 // pred_region
        _
      $region32: #{dense_encoder_forward.1} parent=11 // pred_fallthru
        _
      // Predicated region
      $region33: #{dense_encoder_forward.1} parent=11 // pred_check
        %p331 = pneg %p170
      $region34: #{dense_encoder_forward.1} parent=11 // pred_check_branch
        %333 = sbr.rel (%p331) target = $region36
      $region35: #{dense_encoder_forward.1} parent=11 // pred_region
        _
      $region36: #{dense_encoder_forward.1} parent=11 // pred_fallthru
        _
      // Predicated region
      $region37: #{dense_encoder_forward.1} parent=11 // pred_check
        %p334 = pneg %p191
      $region38: #{dense_encoder_forward.1} parent=11 // pred_check_branch
        %336 = sbr.rel (%p334) target = $region40
      $region39: #{dense_encoder_forward.1} parent=11 // pred_region
        _
      $region40: #{dense_encoder_forward.1} parent=11 // pred_fallthru
        _
      // Predicated region
      $region41: #{dense_encoder_forward.1} parent=11 // pred_check
        %p337 = pneg %p212
      $region42: #{dense_encoder_forward.1} parent=11 // pred_check_branch
        %339 = sbr.rel (%p337) target = $region44
      $region43: #{dense_encoder_forward.1} parent=11 // pred_region
        _
      $region44: #{dense_encoder_forward.1} parent=11 // pred_fallthru
        _
      // Predicated region
      $region45: #{dense_encoder_forward.1} parent=11 // pred_check
        %p340 = pneg %p233
      $region46: #{dense_encoder_forward.1} parent=11 // pred_check_branch
        %342 = sbr.rel (%p340) target = $region48
      $region47: #{dense_encoder_forward.1} parent=11 // pred_region
        _
      $region48: #{dense_encoder_forward.1} parent=11 // pred_fallthru
        _
      // Predicated region
      $region49: #{dense_encoder_forward.1} parent=11 // pred_check
        %p343 = pneg %p254
      $region50: #{dense_encoder_forward.1} parent=11 // pred_check_branch
        %345 = sbr.rel (%p343) target = $region52
      $region51: #{dense_encoder_forward.1} parent=11 // pred_region
        _
      $region52: #{dense_encoder_forward.1} parent=11 // pred_fallthru
        _
      // Predicated region
      $region53: #{dense_encoder_forward.1} parent=11 // pred_check
        %p346 = pneg %p275
      $region54: #{dense_encoder_forward.1} parent=11 // pred_check_branch
        %348 = sbr.rel (%p346) target = $region56
      $region55: #{dense_encoder_forward.1} parent=11 // pred_region
        _
      $region56: #{dense_encoder_forward.1} parent=11 // pred_fallthru
        _
    $region12: #{dense_encoder_forward.1} parent=5 // pred_fallthru
      _
    %p349 = scmp.lt.s32.totalorder %s18, 2
    // Predicated region
    $region57: #{dense_encoder_forward.1} parent=5 // pred_check
      %p350 = pneg %p349
    $region58: #{dense_encoder_forward.1} parent=5 // pred_check_branch
      %352 = sbr.rel (%p350) target = $region60
    $region59: #{dense_encoder_forward.1} parent=5 // pred_region
      // Predicated region
      $region61: #{dense_encoder_forward.1} parent=59 // pred_check
        %p353 = pneg %p38
      $region62: #{dense_encoder_forward.1} parent=59 // pred_check_branch
        %355 = sbr.rel (%p353) target = $region64
      $region63: #{dense_encoder_forward.1} parent=59 // pred_region
        %p356 = scmp.lt.s32.totalorder %s18, 1
        %s357 = scalar_select %p356, %s18, 1
        %s358 = smul.addr %s357, 3
        %s359 = scalar_lea.vmem %s0, %s358
      $region64: #{dense_encoder_forward.1} parent=59 // pred_fallthru
        _
    $region60: #{dense_encoder_forward.1} parent=5 // pred_fallthru
      _
    %p360 = scmp.le.s32.totalorder 1, %s18
    %p361 = scmp.lt.s32.totalorder %s18, 3
    %p362 = pnand %p360, %p361
    %p363 = pneg %p362
    // Predicated region
    $region65: #{dense_encoder_forward.1} parent=5 // pred_check
      _
    $region66: #{dense_encoder_forward.1} parent=5 // pred_check_branch
      %365 = sbr.rel (%p362) target = $region68
    $region67: #{dense_encoder_forward.1} parent=5 // pred_region
      %s366 = ssub.s32 %s18, 1
      %p367 = scmp.lt.s32.totalorder %s23, 1
      %s368 = scalar_select %p367, %s23, 1
      %s369 = smul.addr %s368, 3
      %s370 = scalar_lea.vmem %s0, %s369
      %p371 = pneg %p44
      %p372 = pneg %p41
      %p373 = pneg %p65
      %p374 = pneg %p62
      %p375 = pneg %p86
      %p376 = pneg %p83
      %p377 = pneg %p107
      %p378 = pneg %p104
      %p379 = pneg %p128
      %p380 = pneg %p125
      %p381 = pneg %p149
      %p382 = pneg %p146
      %p383 = pneg %p170
      %p384 = pneg %p167
      %p385 = pneg %p191
      %p386 = pneg %p188
      %p387 = pneg %p212
      %p388 = pneg %p209
      %p389 = pneg %p233
      %p390 = pneg %p230
      %p391 = pneg %p254
      %p392 = pneg %p251
      %p393 = pneg %p275
      %p394 = pneg %p272
      %p395 = pneg %p301
      %p396 = pneg %p298
      %p397 = scmp.lt.s32.totalorder %s23, 1
      %s398 = scalar_select %p397, %s23, 1
      %s399 = smul.addr %s398, 8
      %s400 = scalar_lea.vmem %s12, %s399
      %p401 = scmp.lt.s32.totalorder %s23, 1
      %s402 = scalar_select %p401, %s23, 1
      %s403 = smul.addr %s402, 3
      %s404 = scalar_lea.vmem %s0, %s403
      %p405 = scmp.lt.s32.totalorder %s23, 1
      %s406 = scalar_select %p405, %s23, 1
      %s407 = smul.addr %s406, 8
      %s408 = scalar_lea.vmem %s12, %s407
      %v410 = vld [vmem:[%s8] sm:$0x7]
      %411 = vst [vmem:[#allocation2] sm:$0xff] 0
      %vm412 = vcmask 1043456
      %vm413 = vcmask 687108
      %vm414 = vmor %vm413, %vm412
      %415 = vst.msk [vmem:[#allocation2 + $0x8] sm:$0xff] %vm414, 0
      %416 = vst [vmem:[#allocation2 + $0x10] sm:$0xff] 0
      %417 = vst.msk [vmem:[#allocation2 + $0x18] sm:$0xff] %vm414, 0
      %418 = vst [vmem:[#allocation2 + $0x20] sm:$0xff] 0
      %419 = vst.msk [vmem:[#allocation2 + $0x28] sm:$0xff] %vm414, 0
      %420 = vst [vmem:[#allocation2 + $0x30] sm:$0xff] 0
      %421 = vst.msk [vmem:[#allocation2 + $0x38] sm:$0xff] %vm414, 0
      %422 = vst [vmem:[#allocation2 + $0x40] sm:$0xff] 0
      %423 = vst.msk [vmem:[#allocation2 + $0x48] sm:$0xff] %vm414, 0
      %v424 = vld [vmem:[%s1] sm:$0xf]
      %v425 = vld [vmem:[%s404] sm:$0x7]
      %v428 = vunpack.c.l.s4 1966171168
      %v429 = vunpack.c.0.s8 %v428
      %v430 = vlaneseq
      %v431 = vshrl.u32 %v430, 7
      %v432 = vsub.s32 %v429, %v431
      %v433 = vrot.slane %v425, %v432
      %v434 = vcombine.high %v433, %v433
      %v436 = vunpack.c.l.s4 1966171168
      %v437 = vunpack.c.0.s8 %v436
      %v438 = vlaneseq
      %v439 = vshrl.u32 %v438, 7
      %v440 = vsub.s32 %v437, %v439
      %v441 = vrot.slane %v433, %v440
      %v443 = vunpack.c.l.s4 1966171168
      %v444 = vunpack.c.0.s8 %v443
      %v445 = vlaneseq
      %v446 = vshrl.u32 %v445, 7
      %v447 = vsub.s32 %v444, %v446
      %v448 = vrot.slane %v434, %v447
      %v449 = vcombine.high %v441, %v441
      %vm450 = vcmask 15360
      %v452 = vsel %vm450, %v424, 0
      %vm454 = vcmask 1040384
      %v456 = vsel %vm454, %v441, 0
      %v459 = vsel %vm454, %v448, 0
      %v462 = vsel %vm454, %v449, 0
      %464 = vmatprep.subr.bf16.mxu0 0
      %465 = vmatpush1.bf16.msra.mxu0 0
      %466 = vmatprep.subr.bf16.mxu0 0
      %467 = vmatpush1.bf16.msra.mxu0 0
      %468 = vmatprep.subr.bf16.mxu0 0
      %469 = vmatpush1.bf16.msra.mxu0 0
      %470 = vmatprep.subr.bf16.mxu0 0
      %471 = vmatpush1.bf16.msra.mxu0 0
      %472 = vmatprep.subr.bf16.mxu0 0
      %473 = vmatpush1.bf16.msra.mxu0 0
      %474 = vmatprep.subr.bf16.mxu0 0
      %475 = vmatpush1.bf16.msra.mxu0 0
      %476 = vmatprep.subr.bf16.mxu0 0
      %477 = vmatpush1.bf16.msra.mxu0 0
      %478 = vmatprep.subr.bf16.mxu0 %v459
      %479 = vmatpush1.bf16.msra.mxu0 %v456
      %480 = vmatprep.subr.bf16.mxu0 0
      %481 = vmatpush2.bf16.msra.mxu0 0
      %482 = vmatprep.subr.bf16.mxu0 0
      %483 = vmatpush2.bf16.msra.mxu0 0
      %484 = vmatprep.subr.bf16.mxu0 0
      %485 = vmatpush2.bf16.msra.mxu0 0
      %486 = vmatprep.subr.bf16.mxu0 0
      %487 = vmatpush2.bf16.msra.mxu0 0
      %488 = vmatprep.subr.bf16.mxu0 0
      %489 = vmatpush2.bf16.msra.mxu0 0
      %490 = vmatprep.subr.bf16.mxu0 0
      %491 = vmatpush2.bf16.msra.mxu0 0
      %492 = vmatprep.subr.bf16.mxu0 0
      %493 = vmatpush2.bf16.msra.mxu0 0
      %494 = vmatprep.subr.bf16.mxu0 0
      %495 = vmatpush2.bf16.msra.mxu0 0
      %496 = vmatprep.mubr.bf16.mxu0 0
      %497 = vmatmul.mubr.bf16.gmra.mxu0 %v452
      %v498 = vpop.f32.mrf.mxu0
      %v499 = vadd.f32 0.0, %v498
      %v500 = vpop.f32.mrf.mxu0
      %v501 = vadd.f32 0.0, %v500
      %v502 = vpop.f32.mrf.mxu0
      %v503 = vpop.f32.mrf.mxu0
      %504 = vdwg.mxu0
      %505 = vmatprep.subr.bf16.mxu0 0
      %506 = vmatpush1.bf16.msra.mxu0 0
      %507 = vmatprep.subr.bf16.mxu0 0
      %508 = vmatpush1.bf16.msra.mxu0 0
      %509 = vmatprep.subr.bf16.mxu0 0
      %510 = vmatpush1.bf16.msra.mxu0 0
      %511 = vmatprep.subr.bf16.mxu0 0
      %512 = vmatpush1.bf16.msra.mxu0 0
      %513 = vmatprep.subr.bf16.mxu0 0
      %514 = vmatpush1.bf16.msra.mxu0 0
      %515 = vmatprep.subr.bf16.mxu0 0
      %516 = vmatpush1.bf16.msra.mxu0 0
      %517 = vmatprep.subr.bf16.mxu0 0
      %518 = vmatpush1.bf16.msra.mxu0 0
      %519 = vmatprep.subr.bf16.mxu0 0
      %520 = vmatpush1.bf16.msra.mxu0 %v462
      %521 = vmatprep.subr.bf16.mxu0 0
      %522 = vmatpush2.bf16.msra.mxu0 0
      %523 = vmatprep.subr.bf16.mxu0 0
      %524 = vmatpush2.bf16.msra.mxu0 0
      %525 = vmatprep.subr.bf16.mxu0 0
      %526 = vmatpush2.bf16.msra.mxu0 0
      %527 = vmatprep.subr.bf16.mxu0 0
      %528 = vmatpush2.bf16.msra.mxu0 0
      %529 = vmatprep.subr.bf16.mxu0 0
      %530 = vmatpush2.bf16.msra.mxu0 0
      %531 = vmatprep.subr.bf16.mxu0 0
      %532 = vmatpush2.bf16.msra.mxu0 0
      %533 = vmatprep.subr.bf16.mxu0 0
      %534 = vmatpush2.bf16.msra.mxu0 0
      %535 = vmatprep.subr.bf16.mxu0 0
      %536 = vmatpush2.bf16.msra.mxu0 0
      %537 = vmatprep.mubr.bf16.mxu0 0
      %538 = vmatmul.mubr.bf16.gmra.mxu0 %v452
      %v539 = vpop.f32.mrf.mxu0
      %v540 = vadd.f32 0.0, %v539
      %v541 = vpop.f32.mrf.mxu0
      %v542 = vpop.f32.mrf.mxu0
      %v543 = vpop.f32.mrf.mxu0
      %544 = vdwg.mxu0
      %v546 = vlaneseq
      %v547 = vshrl.u32 %v546, 7
      %v548 = vsub.s32 0, %v547
      %v549 = vrot.slane %v410, %v548
      %v550 = vlaneseq
      %v551 = vshrl.u32 %v550, 7
      %v552 = vsub.s32 1, %v551
      %v553 = vrot.slane %v410, %v552
      %v554 = vlaneseq
      %v555 = vshrl.u32 %v554, 7
      %v556 = vsub.s32 2, %v555
      %v557 = vrot.slane %v410, %v556
      %v561 = vmul.f32 %v499, %v549
      %v562 = vmul.f32 %v501, %v553
      %v563 = vmul.f32 %v540, %v557
      %v564 = vadd.f32 %v561, %v562
      %vm565 = vcmask 261120
      %v566 = vsel %vm565, %v563, 0.0
      %v567 = vadd.f32 %v564, %v566
      %568 = vadd.xlane.f32.xlu0 %v567
      %v569 = vpop.xlane.xlu0 %568
      %v570 = vmul.f32 %v569, 0.00390625
      %v571 = vsub.f32 %v499, %v570
      %v572 = vsub.f32 %v501, %v570
      %v573 = vsub.f32 %v540, %v570
      %v574 = vmul.f32 %v571, %v571
      %v575 = vmul.f32 %v572, %v572
      %v576 = vmul.f32 %v573, %v573
      %v577 = vmul.f32 %v574, %v549
      %v578 = vmul.f32 %v575, %v553
      %v579 = vmul.f32 %v576, %v557
      %v580 = vadd.f32 %v577, %v578
      %v581 = vsel %vm565, %v579, 0.0
      %v582 = vadd.f32 %v580, %v581
      %583 = vadd.xlane.f32.xlu0 %v582
      %v584 = vpop.xlane.xlu0 %583
      %v585 = vmul.f32 %v584, 0.00390625
      %v586 = vld [vmem:[%s9] sm:$0xff]
      %v587 = vadd.f32 %v585, 1e-05
      %v588 = vrsqrt.pop %v587
      %v589 = vmul.f32 %v586, %v588
      %591 = vset.pattern.permute.xlu0 0
      %592 = vperm.xlu0 %591, %v589
      %v593 = vpop.permute.xlu0 %592
      %v595 = vmul.f32 %v571, %v593
      %v596 = vmul.f32 %v572, %v593
      %v597 = vmul.f32 %v573, %v593
      %v598 = vld [vmem:[%s10] sm:$0xff]
      %600 = vset.pattern.permute.xlu0 0
      %601 = vperm.xlu0 %600, %v598
      %v602 = vpop.permute.xlu0 %601
      %v604 = vadd.f32 %v595, %v602
      %v605 = vadd.f32 %v596, %v602
      %v606 = vadd.f32 %v597, %v602
      %vm607 = vcmp.ge.f32.partialorder %v604, 0.0
      %vm608 = vcmp.ge.f32.partialorder %v605, 0.0
      %vm609 = vcmp.ge.f32.partialorder %v606, 0.0
      %v610 = vld [vmem:[%s11] sm:$0xff]
      %612 = vset.pattern.permute.xlu0 0
      %613 = vperm.xlu0 %612, %v610
      %v614 = vpop.permute.xlu0 %613
      %v616 = vmul.f32 %v614, %v604
      %v617 = vmul.f32 %v614, %v605
      %v618 = vmul.f32 %v614, %v606
      %v619 = vsel %vm607, %v604, %v616
      %v620 = vsel %vm608, %v605, %v617
      %v621 = vsel %vm609, %v606, %v618
      %v622 = vmul.f32 %v619, %v549
      %v623 = vmul.f32 %v620, %v553
      %v624 = vmul.f32 %v621, %v557
      %v625 = vpack.c.bf16 %v622, %v622
      %v626 = vpack.c.bf16 %v623, %v623
      %v627 = vpack.c.bf16 %v624, %v624
      %v631 = vunpack.c.l.b16 %v625
      %v632 = vunpack.c.l.b16 %v626
      %v633 = vunpack.c.l.b16 %v627
      %v634 = vpack.c.b16 %v632, %v631
      %v635 = vpack.c.b16 %v633, %v633
      %636 = vrot.lane.b32.xlu0 %v634, 34
      %v637 = vpop.permute.xlu0 %636
      %638 = vrot.lane.b32.xlu0 %v635, 34
      %v639 = vpop.permute.xlu0 %638
      %v640 = vrot.slane %v637, 4
      %vm641 = vcmask 277504
      %v642 = vsel %vm641, %v640, %v637
      %v643 = vsel %vm641, %v640, %v639
      %vm646 = vcmask 1043728
      %vm647 = vcmask 1047556
      %vm648 = vmor %vm647, %vm646
      %649 = vst.msk [vmem:[#allocation2 + $0x4] sm:$0xff] %vm648, %v642
      %vm650 = vcmask 535552
      %651 = vst.msk [vmem:[#allocation2 + $0xc] sm:$0xf] %vm650, %v643
      %v652 = vld [vmem:[#allocation2 + $0x4] sm:$0xff]
      %v653 = vld [vmem:[#allocation2 + $0xc] sm:$0xf]
      %v654 = vld [vmem:[%s2] sm:$0xf]
      %s655 = scalar_lea.vmem %s2, 4
      %v656 = vld [vmem:[%s655] sm:$0xf]
      %v659 = vunpack.c.l.b16 %v652
      %v660 = vunpack.c.h.b16 %v652
      %v661 = vunpack.c.l.b16 %v653
      %v662 = vpack.c.b16 %v659, %v659
      %v663 = vpack.c.b16 %v660, %v660
      %v664 = vpack.c.b16 %v661, %v661
      %665 = vrot.lane.b32.xlu0 %v662, 112
      %v666 = vpop.permute.xlu0 %665
      %667 = vrot.lane.b32.xlu0 %v663, 112
      %v668 = vpop.permute.xlu0 %667
      %669 = vrot.lane.b32.xlu0 %v664, 112
      %v670 = vpop.permute.xlu0 %669
      %vm671 = vcmask 916480
      %v672 = vsel %vm671, %v666, %v668
      %v673 = vsel %vm671, %v668, %v670
      %vm674 = vcmask 64512
      %v676 = vsel %vm674, %v656, 0
      %v679 = vsel %vm412, %v672, 0
      %v682 = vsel %vm412, %v673, 0
      %v685 = vsel %vm412, %v670, 0
      %687 = vmatprep.subr.bf16.mxu0 0
      %688 = vmatpush1.bf16.msra.mxu0 0
      %689 = vmatprep.subr.bf16.mxu0 0
      %690 = vmatpush1.bf16.msra.mxu0 0
      %691 = vmatprep.subr.bf16.mxu0 0
      %692 = vmatpush1.bf16.msra.mxu0 0
      %693 = vmatprep.subr.bf16.mxu0 0
      %694 = vmatpush1.bf16.msra.mxu0 0
      %695 = vmatprep.subr.bf16.mxu0 0
      %696 = vmatpush1.bf16.msra.mxu0 0
      %697 = vmatprep.subr.bf16.mxu0 0
      %698 = vmatpush1.bf16.msra.mxu0 0
      %699 = vmatprep.subr.bf16.mxu0 0
      %700 = vmatpush1.bf16.msra.mxu0 0
      %701 = vmatprep.subr.bf16.mxu0 %v682
      %702 = vmatpush1.bf16.msra.mxu0 %v679
      %703 = vmatprep.subr.bf16.mxu0 0
      %704 = vmatpush2.bf16.msra.mxu0 0
      %705 = vmatprep.subr.bf16.mxu0 0
      %706 = vmatpush2.bf16.msra.mxu0 0
      %707 = vmatprep.subr.bf16.mxu0 0
      %708 = vmatpush2.bf16.msra.mxu0 0
      %709 = vmatprep.subr.bf16.mxu0 0
      %710 = vmatpush2.bf16.msra.mxu0 0
      %711 = vmatprep.subr.bf16.mxu0 0
      %712 = vmatpush2.bf16.msra.mxu0 0
      %713 = vmatprep.subr.bf16.mxu0 0
      %714 = vmatpush2.bf16.msra.mxu0 0
      %715 = vmatprep.subr.bf16.mxu0 0
      %716 = vmatpush2.bf16.msra.mxu0 0
      %717 = vmatprep.subr.bf16.mxu0 0
      %718 = vmatpush2.bf16.msra.mxu0 0
      %719 = vmatprep.mubr.bf16.mxu0 0
      %720 = vmatmul.mubr.bf16.gmra.mxu0 %v676
      %v721 = vpop.f32.mrf.mxu0
      %v722 = vadd.f32 0.0, %v721
      %v723 = vpop.f32.mrf.mxu0
      %v724 = vadd.f32 0.0, %v723
      %v725 = vpop.f32.mrf.mxu0
      %v726 = vpop.f32.mrf.mxu0
      %727 = vdwg.mxu0
      %728 = vmatprep.subr.bf16.mxu0 0
      %729 = vmatpush1.bf16.msra.mxu0 0
      %730 = vmatprep.subr.bf16.mxu0 0
      %731 = vmatpush1.bf16.msra.mxu0 0
      %732 = vmatprep.subr.bf16.mxu0 0
      %733 = vmatpush1.bf16.msra.mxu0 0
      %734 = vmatprep.subr.bf16.mxu0 0
      %735 = vmatpush1.bf16.msra.mxu0 0
      %736 = vmatprep.subr.bf16.mxu0 0
      %737 = vmatpush1.bf16.msra.mxu0 0
      %738 = vmatprep.subr.bf16.mxu0 0
      %739 = vmatpush1.bf16.msra.mxu0 0
      %740 = vmatprep.subr.bf16.mxu0 0
      %741 = vmatpush1.bf16.msra.mxu0 0
      %742 = vmatprep.subr.bf16.mxu0 0
      %743 = vmatpush1.bf16.msra.mxu0 %v685
      %744 = vmatprep.subr.bf16.mxu0 0
      %745 = vmatpush2.bf16.msra.mxu0 0
      %746 = vmatprep.subr.bf16.mxu0 0
      %747 = vmatpush2.bf16.msra.mxu0 0
      %748 = vmatprep.subr.bf16.mxu0 0
      %749 = vmatpush2.bf16.msra.mxu0 0
      %750 = vmatprep.subr.bf16.mxu0 0
      %751 = vmatpush2.bf16.msra.mxu0 0
      %752 = vmatprep.subr.bf16.mxu0 0
      %753 = vmatpush2.bf16.msra.mxu0 0
      %754 = vmatprep.subr.bf16.mxu0 0
      %755 = vmatpush2.bf16.msra.mxu0 0
      %756 = vmatprep.subr.bf16.mxu0 0
      %757 = vmatpush2.bf16.msra.mxu0 0
      %758 = vmatprep.subr.bf16.mxu0 0
      %759 = vmatpush2.bf16.msra.mxu0 0
      %760 = vmatprep.mubr.bf16.mxu0 0
      %761 = vmatmul.mubr.bf16.gmra.mxu0 %v676
      %v762 = vpop.f32.mrf.mxu0
      %v763 = vadd.f32 0.0, %v762
      %v764 = vpop.f32.mrf.mxu0
      %v765 = vpop.f32.mrf.mxu0
      %v766 = vpop.f32.mrf.mxu0
      %767 = vdwg.mxu0
      %768 = vrot.lane.b32.xlu0 %v662, 113
      %v769 = vpop.permute.xlu0 %768
      %770 = vrot.lane.b32.xlu0 %v663, 113
      %v771 = vpop.permute.xlu0 %770
      %772 = vrot.lane.b32.xlu0 %v664, 113
      %v773 = vpop.permute.xlu0 %772
      %vm774 = vcmask 924672
      %v775 = vsel %vm774, %v769, %v771
      %v776 = vsel %vm774, %v771, %v773
      %v778 = vsel %vm674, %v654, 0
      %v781 = vsel %vm412, %v775, 0
      %v784 = vsel %vm412, %v776, 0
      %v787 = vsel %vm412, %v773, 0
      %789 = vmatprep.subr.bf16.mxu0 0
      %790 = vmatpush1.bf16.msra.mxu0 0
      %791 = vmatprep.subr.bf16.mxu0 0
      %792 = vmatpush1.bf16.msra.mxu0 0
      %793 = vmatprep.subr.bf16.mxu0 0
      %794 = vmatpush1.bf16.msra.mxu0 0
      %795 = vmatprep.subr.bf16.mxu0 0
      %796 = vmatpush1.bf16.msra.mxu0 0
      %797 = vmatprep.subr.bf16.mxu0 0
      %798 = vmatpush1.bf16.msra.mxu0 0
      %799 = vmatprep.subr.bf16.mxu0 0
      %800 = vmatpush1.bf16.msra.mxu0 0
      %801 = vmatprep.subr.bf16.mxu0 0
      %802 = vmatpush1.bf16.msra.mxu0 0
      %803 = vmatprep.subr.bf16.mxu0 %v784
      %804 = vmatpush1.bf16.msra.mxu0 %v781
      %805 = vmatprep.subr.bf16.mxu0 0
      %806 = vmatpush2.bf16.msra.mxu0 0
      %807 = vmatprep.subr.bf16.mxu0 0
      %808 = vmatpush2.bf16.msra.mxu0 0
      %809 = vmatprep.subr.bf16.mxu0 0
      %810 = vmatpush2.bf16.msra.mxu0 0
      %811 = vmatprep.subr.bf16.mxu0 0
      %812 = vmatpush2.bf16.msra.mxu0 0
      %813 = vmatprep.subr.bf16.mxu0 0
      %814 = vmatpush2.bf16.msra.mxu0 0
      %815 = vmatprep.subr.bf16.mxu0 0
      %816 = vmatpush2.bf16.msra.mxu0 0
      %817 = vmatprep.subr.bf16.mxu0 0
      %818 = vmatpush2.bf16.msra.mxu0 0
      %819 = vmatprep.subr.bf16.mxu0 0
      %820 = vmatpush2.bf16.msra.mxu0 0
      %821 = vmatprep.mubr.bf16.mxu0 0
      %822 = vmatmul.mubr.bf16.gmra.mxu0 %v778
      %v823 = vpop.f32.mrf.mxu0
      %v824 = vadd.f32 %v722, %v823
      %v825 = vpop.f32.mrf.mxu0
      %v826 = vadd.f32 %v724, %v825
      %v827 = vpop.f32.mrf.mxu0
      %v828 = vpop.f32.mrf.mxu0
      %829 = vdwg.mxu0
      %830 = vmatprep.subr.bf16.mxu0 0
      %831 = vmatpush1.bf16.msra.mxu0 0
      %832 = vmatprep.subr.bf16.mxu0 0
      %833 = vmatpush1.bf16.msra.mxu0 0
      %834 = vmatprep.subr.bf16.mxu0 0
      %835 = vmatpush1.bf16.msra.mxu0 0
      %836 = vmatprep.subr.bf16.mxu0 0
      %837 = vmatpush1.bf16.msra.mxu0 0
      %838 = vmatprep.subr.bf16.mxu0 0
      %839 = vmatpush1.bf16.msra.mxu0 0
      %840 = vmatprep.subr.bf16.mxu0 0
      %841 = vmatpush1.bf16.msra.mxu0 0
      %842 = vmatprep.subr.bf16.mxu0 0
      %843 = vmatpush1.bf16.msra.mxu0 0
      %844 = vmatprep.subr.bf16.mxu0 0
      %845 = vmatpush1.bf16.msra.mxu0 %v787
      %846 = vmatprep.subr.bf16.mxu0 0
      %847 = vmatpush2.bf16.msra.mxu0 0
      %848 = vmatprep.subr.bf16.mxu0 0
      %849 = vmatpush2.bf16.msra.mxu0 0
      %850 = vmatprep.subr.bf16.mxu0 0
      %851 = vmatpush2.bf16.msra.mxu0 0
      %852 = vmatprep.subr.bf16.mxu0 0
      %853 = vmatpush2.bf16.msra.mxu0 0
      %854 = vmatprep.subr.bf16.mxu0 0
      %855 = vmatpush2.bf16.msra.mxu0 0
      %856 = vmatprep.subr.bf16.mxu0 0
      %857 = vmatpush2.bf16.msra.mxu0 0
      %858 = vmatprep.subr.bf16.mxu0 0
      %859 = vmatpush2.bf16.msra.mxu0 0
      %860 = vmatprep.subr.bf16.mxu0 0
      %861 = vmatpush2.bf16.msra.mxu0 0
      %862 = vmatprep.mubr.bf16.mxu0 0
      %863 = vmatmul.mubr.bf16.gmra.mxu0 %v778
      %v864 = vpop.f32.mrf.mxu0
      %v865 = vadd.f32 %v763, %v864
      %v866 = vpop.f32.mrf.mxu0
      %v867 = vpop.f32.mrf.mxu0
      %v868 = vpop.f32.mrf.mxu0
      %869 = vdwg.mxu0
      %s870 = scalar_lea.vmem %s2, 8
      %v871 = vld [vmem:[%s870] sm:$0xf]
      %872 = vrot.lane.b32.xlu0 %v662, 111
      %v873 = vpop.permute.xlu0 %872
      %874 = vrot.lane.b32.xlu0 %v663, 111
      %v875 = vpop.permute.xlu0 %874
      %876 = vrot.lane.b32.xlu0 %v664, 111
      %v877 = vpop.permute.xlu0 %876
      %vm878 = vcmask 908288
      %v879 = vsel %vm878, %v873, %v875
      %v880 = vsel %vm878, %v875, %v877
      %v882 = vsel %vm674, %v871, 0
      %v885 = vsel %vm412, %v879, 0
      %v888 = vsel %vm412, %v880, 0
      %v891 = vsel %vm412, %v877, 0
      %893 = vmatprep.subr.bf16.mxu0 0
      %894 = vmatpush1.bf16.msra.mxu0 0
      %895 = vmatprep.subr.bf16.mxu0 0
      %896 = vmatpush1.bf16.msra.mxu0 0
      %897 = vmatprep.subr.bf16.mxu0 0
      %898 = vmatpush1.bf16.msra.mxu0 0
      %899 = vmatprep.subr.bf16.mxu0 0
      %900 = vmatpush1.bf16.msra.mxu0 0
      %901 = vmatprep.subr.bf16.mxu0 0
      %902 = vmatpush1.bf16.msra.mxu0 0
      %903 = vmatprep.subr.bf16.mxu0 0
      %904 = vmatpush1.bf16.msra.mxu0 0
      %905 = vmatprep.subr.bf16.mxu0 0
      %906 = vmatpush1.bf16.msra.mxu0 0
      %907 = vmatprep.subr.bf16.mxu0 %v888
      %908 = vmatpush1.bf16.msra.mxu0 %v885
      %909 = vmatprep.subr.bf16.mxu0 0
      %910 = vmatpush2.bf16.msra.mxu0 0
      %911 = vmatprep.subr.bf16.mxu0 0
      %912 = vmatpush2.bf16.msra.mxu0 0
      %913 = vmatprep.subr.bf16.mxu0 0
      %914 = vmatpush2.bf16.msra.mxu0 0
      %915 = vmatprep.subr.bf16.mxu0 0
      %916 = vmatpush2.bf16.msra.mxu0 0
      %917 = vmatprep.subr.bf16.mxu0 0
      %918 = vmatpush2.bf16.msra.mxu0 0
      %919 = vmatprep.subr.bf16.mxu0 0
      %920 = vmatpush2.bf16.msra.mxu0 0
      %921 = vmatprep.subr.bf16.mxu0 0
      %922 = vmatpush2.bf16.msra.mxu0 0
      %923 = vmatprep.subr.bf16.mxu0 0
      %924 = vmatpush2.bf16.msra.mxu0 0
      %925 = vmatprep.mubr.bf16.mxu0 0
      %926 = vmatmul.mubr.bf16.gmra.mxu0 %v882
      %v927 = vpop.f32.mrf.mxu0
      %v928 = vadd.f32 0.0, %v927
      %v929 = vpop.f32.mrf.mxu0
      %v930 = vadd.f32 0.0, %v929
      %v931 = vpop.f32.mrf.mxu0
      %v932 = vpop.f32.mrf.mxu0
      %933 = vdwg.mxu0
      %934 = vmatprep.subr.bf16.mxu0 0
      %935 = vmatpush1.bf16.msra.mxu0 0
      %936 = vmatprep.subr.bf16.mxu0 0
      %937 = vmatpush1.bf16.msra.mxu0 0
      %938 = vmatprep.subr.bf16.mxu0 0
      %939 = vmatpush1.bf16.msra.mxu0 0
      %940 = vmatprep.subr.bf16.mxu0 0
      %941 = vmatpush1.bf16.msra.mxu0 0
      %942 = vmatprep.subr.bf16.mxu0 0
      %943 = vmatpush1.bf16.msra.mxu0 0
      %944 = vmatprep.subr.bf16.mxu0 0
      %945 = vmatpush1.bf16.msra.mxu0 0
      %946 = vmatprep.subr.bf16.mxu0 0
      %947 = vmatpush1.bf16.msra.mxu0 0
      %948 = vmatprep.subr.bf16.mxu0 0
      %949 = vmatpush1.bf16.msra.mxu0 %v891
      %950 = vmatprep.subr.bf16.mxu0 0
      %951 = vmatpush2.bf16.msra.mxu0 0
      %952 = vmatprep.subr.bf16.mxu0 0
      %953 = vmatpush2.bf16.msra.mxu0 0
      %954 = vmatprep.subr.bf16.mxu0 0
      %955 = vmatpush2.bf16.msra.mxu0 0
      %956 = vmatprep.subr.bf16.mxu0 0
      %957 = vmatpush2.bf16.msra.mxu0 0
      %958 = vmatprep.subr.bf16.mxu0 0
      %959 = vmatpush2.bf16.msra.mxu0 0
      %960 = vmatprep.subr.bf16.mxu0 0
      %961 = vmatpush2.bf16.msra.mxu0 0
      %962 = vmatprep.subr.bf16.mxu0 0
      %963 = vmatpush2.bf16.msra.mxu0 0
      %964 = vmatprep.subr.bf16.mxu0 0
      %965 = vmatpush2.bf16.msra.mxu0 0
      %966 = vmatprep.mubr.bf16.mxu0 0
      %967 = vmatmul.mubr.bf16.gmra.mxu0 %v882
      %v968 = vpop.f32.mrf.mxu0
      %v969 = vadd.f32 0.0, %v968
      %v970 = vpop.f32.mrf.mxu0
      %v971 = vpop.f32.mrf.mxu0
      %v972 = vpop.f32.mrf.mxu0
      %973 = vdwg.mxu0
      %v974 = vadd.f32 %v824, %v928
      %v975 = vadd.f32 %v826, %v930
      %v976 = vadd.f32 %v865, %v969
      %s977 = scalar_lea.vmem %s2, 12
      %v978 = vld [vmem:[%s977] sm:$0xf]
      %979 = vrot.lane.b32.xlu0 %v662, 95
      %v980 = vpop.permute.xlu0 %979
      %981 = vrot.lane.b32.xlu0 %v663, 95
      %v982 = vpop.permute.xlu0 %981
      %983 = vrot.lane.b32.xlu0 %v664, 95
      %v984 = vpop.permute.xlu0 %983
      %vm985 = vcmask 777216
      %v986 = vsel %vm985, %v980, %v982
      %v987 = vsel %vm985, %v982, %v984
      %v989 = vsel %vm674, %v978, 0
      %v992 = vsel %vm412, %v986, 0
      %v995 = vsel %vm412, %v987, 0
      %v998 = vsel %vm412, %v984, 0
      %1000 = vmatprep.subr.bf16.mxu0 0
      %1001 = vmatpush1.bf16.msra.mxu0 0
      %1002 = vmatprep.subr.bf16.mxu0 0
      %1003 = vmatpush1.bf16.msra.mxu0 0
      %1004 = vmatprep.subr.bf16.mxu0 0
      %1005 = vmatpush1.bf16.msra.mxu0 0
      %1006 = vmatprep.subr.bf16.mxu0 0
      %1007 = vmatpush1.bf16.msra.mxu0 0
      %1008 = vmatprep.subr.bf16.mxu0 0
      %1009 = vmatpush1.bf16.msra.mxu0 0
      %1010 = vmatprep.subr.bf16.mxu0 0
      %1011 = vmatpush1.bf16.msra.mxu0 0
      %1012 = vmatprep.subr.bf16.mxu0 0
      %1013 = vmatpush1.bf16.msra.mxu0 0
      %1014 = vmatprep.subr.bf16.mxu0 %v995
      %1015 = vmatpush1.bf16.msra.mxu0 %v992
      %1016 = vmatprep.subr.bf16.mxu0 0
      %1017 = vmatpush2.bf16.msra.mxu0 0
      %1018 = vmatprep.subr.bf16.mxu0 0
      %1019 = vmatpush2.bf16.msra.mxu0 0
      %1020 = vmatprep.subr.bf16.mxu0 0
      %1021 = vmatpush2.bf16.msra.mxu0 0
      %1022 = vmatprep.subr.bf16.mxu0 0
      %1023 = vmatpush2.bf16.msra.mxu0 0
      %1024 = vmatprep.subr.bf16.mxu0 0
      %1025 = vmatpush2.bf16.msra.mxu0 0
      %1026 = vmatprep.subr.bf16.mxu0 0
      %1027 = vmatpush2.bf16.msra.mxu0 0
      %1028 = vmatprep.subr.bf16.mxu0 0
      %1029 = vmatpush2.bf16.msra.mxu0 0
      %1030 = vmatprep.subr.bf16.mxu0 0
      %1031 = vmatpush2.bf16.msra.mxu0 0
      %1032 = vmatprep.mubr.bf16.mxu0 0
      %1033 = vmatmul.mubr.bf16.gmra.mxu0 %v989
      %v1034 = vpop.f32.mrf.mxu0
      %v1035 = vadd.f32 0.0, %v1034
      %v1036 = vpop.f32.mrf.mxu0
      %v1037 = vadd.f32 0.0, %v1036
      %v1038 = vpop.f32.mrf.mxu0
      %v1039 = vpop.f32.mrf.mxu0
      %1040 = vdwg.mxu0
      %1041 = vmatprep.subr.bf16.mxu0 0
      %1042 = vmatpush1.bf16.msra.mxu0 0
      %1043 = vmatprep.subr.bf16.mxu0 0
      %1044 = vmatpush1.bf16.msra.mxu0 0
      %1045 = vmatprep.subr.bf16.mxu0 0
      %1046 = vmatpush1.bf16.msra.mxu0 0
      %1047 = vmatprep.subr.bf16.mxu0 0
      %1048 = vmatpush1.bf16.msra.mxu0 0
      %1049 = vmatprep.subr.bf16.mxu0 0
      %1050 = vmatpush1.bf16.msra.mxu0 0
      %1051 = vmatprep.subr.bf16.mxu0 0
      %1052 = vmatpush1.bf16.msra.mxu0 0
      %1053 = vmatprep.subr.bf16.mxu0 0
      %1054 = vmatpush1.bf16.msra.mxu0 0
      %1055 = vmatprep.subr.bf16.mxu0 0
      %1056 = vmatpush1.bf16.msra.mxu0 %v998
      %1057 = vmatprep.subr.bf16.mxu0 0
      %1058 = vmatpush2.bf16.msra.mxu0 0
      %1059 = vmatprep.subr.bf16.mxu0 0
      %1060 = vmatpush2.bf16.msra.mxu0 0
      %1061 = vmatprep.subr.bf16.mxu0 0
      %1062 = vmatpush2.bf16.msra.mxu0 0
      %1063 = vmatprep.subr.bf16.mxu0 0
      %1064 = vmatpush2.bf16.msra.mxu0 0
      %1065 = vmatprep.subr.bf16.mxu0 0
      %1066 = vmatpush2.bf16.msra.mxu0 0
      %1067 = vmatprep.subr.bf16.mxu0 0
      %1068 = vmatpush2.bf16.msra.mxu0 0
      %1069 = vmatprep.subr.bf16.mxu0 0
      %1070 = vmatpush2.bf16.msra.mxu0 0
      %1071 = vmatprep.subr.bf16.mxu0 0
      %1072 = vmatpush2.bf16.msra.mxu0 0
      %1073 = vmatprep.mubr.bf16.mxu0 0
      %1074 = vmatmul.mubr.bf16.gmra.mxu0 %v989
      %v1075 = vpop.f32.mrf.mxu0
      %v1076 = vadd.f32 0.0, %v1075
      %v1077 = vpop.f32.mrf.mxu0
      %v1078 = vpop.f32.mrf.mxu0
      %v1079 = vpop.f32.mrf.mxu0
      %1080 = vdwg.mxu0
      %v1081 = vadd.f32 %v974, %v1035
      %v1082 = vadd.f32 %v975, %v1037
      %v1083 = vadd.f32 %v976, %v1076
      %s1084 = scalar_lea.vmem %s2, 16
      %v1085 = vld [vmem:[%s1084] sm:$0xf]
      %1086 = vrot.lane.b32.xlu0 %v662, 94
      %v1087 = vpop.permute.xlu0 %1086
      %1088 = vrot.lane.b32.xlu0 %v663, 94
      %v1089 = vpop.permute.xlu0 %1088
      %1090 = vrot.lane.b32.xlu0 %v664, 94
      %v1091 = vpop.permute.xlu0 %1090
      %vm1092 = vcmask 769024
      %v1093 = vsel %vm1092, %v1087, %v1089
      %v1094 = vsel %vm1092, %v1089, %v1091
      %v1096 = vsel %vm674, %v1085, 0
      %v1099 = vsel %vm412, %v1093, 0
      %v1102 = vsel %vm412, %v1094, 0
      %v1105 = vsel %vm412, %v1091, 0
      %1107 = vmatprep.subr.bf16.mxu0 0
      %1108 = vmatpush1.bf16.msra.mxu0 0
      %1109 = vmatprep.subr.bf16.mxu0 0
      %1110 = vmatpush1.bf16.msra.mxu0 0
      %1111 = vmatprep.subr.bf16.mxu0 0
      %1112 = vmatpush1.bf16.msra.mxu0 0
      %1113 = vmatprep.subr.bf16.mxu0 0
      %1114 = vmatpush1.bf16.msra.mxu0 0
      %1115 = vmatprep.subr.bf16.mxu0 0
      %1116 = vmatpush1.bf16.msra.mxu0 0
      %1117 = vmatprep.subr.bf16.mxu0 0
      %1118 = vmatpush1.bf16.msra.mxu0 0
      %1119 = vmatprep.subr.bf16.mxu0 0
      %1120 = vmatpush1.bf16.msra.mxu0 0
      %1121 = vmatprep.subr.bf16.mxu0 %v1102
      %1122 = vmatpush1.bf16.msra.mxu0 %v1099
      %1123 = vmatprep.subr.bf16.mxu0 0
      %1124 = vmatpush2.bf16.msra.mxu0 0
      %1125 = vmatprep.subr.bf16.mxu0 0
      %1126 = vmatpush2.bf16.msra.mxu0 0
      %1127 = vmatprep.subr.bf16.mxu0 0
      %1128 = vmatpush2.bf16.msra.mxu0 0
      %1129 = vmatprep.subr.bf16.mxu0 0
      %1130 = vmatpush2.bf16.msra.mxu0 0
      %1131 = vmatprep.subr.bf16.mxu0 0
      %1132 = vmatpush2.bf16.msra.mxu0 0
      %1133 = vmatprep.subr.bf16.mxu0 0
      %1134 = vmatpush2.bf16.msra.mxu0 0
      %1135 = vmatprep.subr.bf16.mxu0 0
      %1136 = vmatpush2.bf16.msra.mxu0 0
      %1137 = vmatprep.subr.bf16.mxu0 0
      %1138 = vmatpush2.bf16.msra.mxu0 0
      %1139 = vmatprep.mubr.bf16.mxu0 0
      %1140 = vmatmul.mubr.bf16.gmra.mxu0 %v1096
      %v1141 = vpop.f32.mrf.mxu0
      %v1142 = vadd.f32 0.0, %v1141
      %v1143 = vpop.f32.mrf.mxu0
      %v1144 = vadd.f32 0.0, %v1143
      %v1145 = vpop.f32.mrf.mxu0
      %v1146 = vpop.f32.mrf.mxu0
      %1147 = vdwg.mxu0
      %1148 = vmatprep.subr.bf16.mxu0 0
      %1149 = vmatpush1.bf16.msra.mxu0 0
      %1150 = vmatprep.subr.bf16.mxu0 0
      %1151 = vmatpush1.bf16.msra.mxu0 0
      %1152 = vmatprep.subr.bf16.mxu0 0
      %1153 = vmatpush1.bf16.msra.mxu0 0
      %1154 = vmatprep.subr.bf16.mxu0 0
      %1155 = vmatpush1.bf16.msra.mxu0 0
      %1156 = vmatprep.subr.bf16.mxu0 0
      %1157 = vmatpush1.bf16.msra.mxu0 0
      %1158 = vmatprep.subr.bf16.mxu0 0
      %1159 = vmatpush1.bf16.msra.mxu0 0
      %1160 = vmatprep.subr.bf16.mxu0 0
      %1161 = vmatpush1.bf16.msra.mxu0 0
      %1162 = vmatprep.subr.bf16.mxu0 0
      %1163 = vmatpush1.bf16.msra.mxu0 %v1105
      %1164 = vmatprep.subr.bf16.mxu0 0
      %1165 = vmatpush2.bf16.msra.mxu0 0
      %1166 = vmatprep.subr.bf16.mxu0 0
      %1167 = vmatpush2.bf16.msra.mxu0 0
      %1168 = vmatprep.subr.bf16.mxu0 0
      %1169 = vmatpush2.bf16.msra.mxu0 0
      %1170 = vmatprep.subr.bf16.mxu0 0
      %1171 = vmatpush2.bf16.msra.mxu0 0
      %1172 = vmatprep.subr.bf16.mxu0 0
      %1173 = vmatpush2.bf16.msra.mxu0 0
      %1174 = vmatprep.subr.bf16.mxu0 0
      %1175 = vmatpush2.bf16.msra.mxu0 0
      %1176 = vmatprep.subr.bf16.mxu0 0
      %1177 = vmatpush2.bf16.msra.mxu0 0
      %1178 = vmatprep.subr.bf16.mxu0 0
      %1179 = vmatpush2.bf16.msra.mxu0 0
      %1180 = vmatprep.mubr.bf16.mxu0 0
      %1181 = vmatmul.mubr.bf16.gmra.mxu0 %v1096
      %v1182 = vpop.f32.mrf.mxu0
      %v1183 = vadd.f32 0.0, %v1182
      %v1184 = vpop.f32.mrf.mxu0
      %v1185 = vpop.f32.mrf.mxu0
      %v1186 = vpop.f32.mrf.mxu0
      %1187 = vdwg.mxu0
      %v1188 = vadd.f32 %v1081, %v1142
      %v1189 = vadd.f32 %v1082, %v1144
      %v1190 = vadd.f32 %v1083, %v1183
      %s1191 = scalar_lea.vmem %s2, 20
      %v1192 = vld [vmem:[%s1191] sm:$0xf]
      %1193 = vrot.lane.b32.xlu0 %v662, 93
      %v1194 = vpop.permute.xlu0 %1193
      %1195 = vrot.lane.b32.xlu0 %v663, 93
      %v1196 = vpop.permute.xlu0 %1195
      %1197 = vrot.lane.b32.xlu0 %v664, 93
      %v1198 = vpop.permute.xlu0 %1197
      %vm1199 = vcmask 760832
      %v1200 = vsel %vm1199, %v1194, %v1196
      %v1201 = vsel %vm1199, %v1196, %v1198
      %v1203 = vsel %vm674, %v1192, 0
      %v1206 = vsel %vm412, %v1200, 0
      %v1209 = vsel %vm412, %v1201, 0
      %v1212 = vsel %vm412, %v1198, 0
      %1214 = vmatprep.subr.bf16.mxu0 0
      %1215 = vmatpush1.bf16.msra.mxu0 0
      %1216 = vmatprep.subr.bf16.mxu0 0
      %1217 = vmatpush1.bf16.msra.mxu0 0
      %1218 = vmatprep.subr.bf16.mxu0 0
      %1219 = vmatpush1.bf16.msra.mxu0 0
      %1220 = vmatprep.subr.bf16.mxu0 0
      %1221 = vmatpush1.bf16.msra.mxu0 0
      %1222 = vmatprep.subr.bf16.mxu0 0
      %1223 = vmatpush1.bf16.msra.mxu0 0
      %1224 = vmatprep.subr.bf16.mxu0 0
      %1225 = vmatpush1.bf16.msra.mxu0 0
      %1226 = vmatprep.subr.bf16.mxu0 0
      %1227 = vmatpush1.bf16.msra.mxu0 0
      %1228 = vmatprep.subr.bf16.mxu0 %v1209
      %1229 = vmatpush1.bf16.msra.mxu0 %v1206
      %1230 = vmatprep.subr.bf16.mxu0 0
      %1231 = vmatpush2.bf16.msra.mxu0 0
      %1232 = vmatprep.subr.bf16.mxu0 0
      %1233 = vmatpush2.bf16.msra.mxu0 0
      %1234 = vmatprep.subr.bf16.mxu0 0
      %1235 = vmatpush2.bf16.msra.mxu0 0
      %1236 = vmatprep.subr.bf16.mxu0 0
      %1237 = vmatpush2.bf16.msra.mxu0 0
      %1238 = vmatprep.subr.bf16.mxu0 0
      %1239 = vmatpush2.bf16.msra.mxu0 0
      %1240 = vmatprep.subr.bf16.mxu0 0
      %1241 = vmatpush2.bf16.msra.mxu0 0
      %1242 = vmatprep.subr.bf16.mxu0 0
      %1243 = vmatpush2.bf16.msra.mxu0 0
      %1244 = vmatprep.subr.bf16.mxu0 0
      %1245 = vmatpush2.bf16.msra.mxu0 0
      %1246 = vmatprep.mubr.bf16.mxu0 0
      %1247 = vmatmul.mubr.bf16.gmra.mxu0 %v1203
      %v1248 = vpop.f32.mrf.mxu0
      %v1249 = vadd.f32 0.0, %v1248
      %v1250 = vpop.f32.mrf.mxu0
      %v1251 = vadd.f32 0.0, %v1250
      %v1252 = vpop.f32.mrf.mxu0
      %v1253 = vpop.f32.mrf.mxu0
      %1254 = vdwg.mxu0
      %1255 = vmatprep.subr.bf16.mxu0 0
      %1256 = vmatpush1.bf16.msra.mxu0 0
      %1257 = vmatprep.subr.bf16.mxu0 0
      %1258 = vmatpush1.bf16.msra.mxu0 0
      %1259 = vmatprep.subr.bf16.mxu0 0
      %1260 = vmatpush1.bf16.msra.mxu0 0
      %1261 = vmatprep.subr.bf16.mxu0 0
      %1262 = vmatpush1.bf16.msra.mxu0 0
      %1263 = vmatprep.subr.bf16.mxu0 0
      %1264 = vmatpush1.bf16.msra.mxu0 0
      %1265 = vmatprep.subr.bf16.mxu0 0
      %1266 = vmatpush1.bf16.msra.mxu0 0
      %1267 = vmatprep.subr.bf16.mxu0 0
      %1268 = vmatpush1.bf16.msra.mxu0 0
      %1269 = vmatprep.subr.bf16.mxu0 0
      %1270 = vmatpush1.bf16.msra.mxu0 %v1212
      %1271 = vmatprep.subr.bf16.mxu0 0
      %1272 = vmatpush2.bf16.msra.mxu0 0
      %1273 = vmatprep.subr.bf16.mxu0 0
      %1274 = vmatpush2.bf16.msra.mxu0 0
      %1275 = vmatprep.subr.bf16.mxu0 0
      %1276 = vmatpush2.bf16.msra.mxu0 0
      %1277 = vmatprep.subr.bf16.mxu0 0
      %1278 = vmatpush2.bf16.msra.mxu0 0
      %1279 = vmatprep.subr.bf16.mxu0 0
      %1280 = vmatpush2.bf16.msra.mxu0 0
      %1281 = vmatprep.subr.bf16.mxu0 0
      %1282 = vmatpush2.bf16.msra.mxu0 0
      %1283 = vmatprep.subr.bf16.mxu0 0
      %1284 = vmatpush2.bf16.msra.mxu0 0
      %1285 = vmatprep.subr.bf16.mxu0 0
      %1286 = vmatpush2.bf16.msra.mxu0 0
      %1287 = vmatprep.mubr.bf16.mxu0 0
      %1288 = vmatmul.mubr.bf16.gmra.mxu0 %v1203
      %v1289 = vpop.f32.mrf.mxu0
      %v1290 = vadd.f32 0.0, %v1289
      %v1291 = vpop.f32.mrf.mxu0
      %v1292 = vpop.f32.mrf.mxu0
      %v1293 = vpop.f32.mrf.mxu0
      %1294 = vdwg.mxu0
      %v1295 = vadd.f32 %v1188, %v1249
      %v1296 = vadd.f32 %v1189, %v1251
      %v1297 = vadd.f32 %v1190, %v1290
      %v1298 = vmul.f32 %v1295, %v549
      %v1299 = vmul.f32 %v1296, %v553
      %v1300 = vmul.f32 %v1297, %v557
      %v1301 = vadd.f32 %v1298, %v1299
      %v1302 = vsel %vm565, %v1300, 0.0
      %v1303 = vadd.f32 %v1301, %v1302
      %1304 = vadd.xlane.f32.xlu0 %v1303
      %v1305 = vpop.xlane.xlu0 %1304
      %v1306 = vmul.f32 %v1305, 0.00390625
      %v1307 = vsub.f32 %v1295, %v1306
      %v1308 = vsub.f32 %v1296, %v1306
      %v1309 = vsub.f32 %v1297, %v1306
      %v1310 = vmul.f32 %v1307, %v1307
      %v1311 = vmul.f32 %v1308, %v1308
      %v1312 = vmul.f32 %v1309, %v1309
      %v1313 = vmul.f32 %v1310, %v549
      %v1314 = vmul.f32 %v1311, %v553
      %v1315 = vmul.f32 %v1312, %v557
      %v1316 = vadd.f32 %v1313, %v1314
      %v1317 = vsel %vm565, %v1315, 0.0
      %v1318 = vadd.f32 %v1316, %v1317
      %1319 = vadd.xlane.f32.xlu0 %v1318
      %v1320 = vpop.xlane.xlu0 %1319
      %v1321 = vmul.f32 %v1320, 0.00390625
      %s1322 = scalar_lea.vmem %s9, 8
      %v1323 = vld [vmem:[%s1322] sm:$0xff]
      %v1324 = vadd.f32 %v1321, 1e-05
      %v1325 = vrsqrt.pop %v1324
      %v1326 = vmul.f32 %v1323, %v1325
      %1328 = vset.pattern.permute.xlu0 0
      %1329 = vperm.xlu0 %1328, %v1326
      %v1330 = vpop.permute.xlu0 %1329
      %v1332 = vmul.f32 %v1307, %v1330
      %v1333 = vmul.f32 %v1308, %v1330
      %v1334 = vmul.f32 %v1309, %v1330
      %s1335 = scalar_lea.vmem %s10, 8
      %v1336 = vld [vmem:[%s1335] sm:$0xff]
      %1338 = vset.pattern.permute.xlu0 0
      %1339 = vperm.xlu0 %1338, %v1336
      %v1340 = vpop.permute.xlu0 %1339
      %v1342 = vadd.f32 %v1332, %v1340
      %v1343 = vadd.f32 %v1333, %v1340
      %v1344 = vadd.f32 %v1334, %v1340
      %vm1345 = vcmp.ge.f32.partialorder %v1342, 0.0
      %vm1346 = vcmp.ge.f32.partialorder %v1343, 0.0
      %vm1347 = vcmp.ge.f32.partialorder %v1344, 0.0
      %s1348 = scalar_lea.vmem %s11, 8
      %v1349 = vld [vmem:[%s1348] sm:$0xff]
      %1351 = vset.pattern.permute.xlu0 0
      %1352 = vperm.xlu0 %1351, %v1349
      %v1353 = vpop.permute.xlu0 %1352
      %v1355 = vmul.f32 %v1353, %v1342
      %v1356 = vmul.f32 %v1353, %v1343
      %v1357 = vmul.f32 %v1353, %v1344
      %v1358 = vsel %vm1345, %v1342, %v1355
      %v1359 = vsel %vm1346, %v1343, %v1356
      %v1360 = vsel %vm1347, %v1344, %v1357
      %v1361 = vmul.f32 %v1358, %v549
      %v1362 = vmul.f32 %v1359, %v553
      %v1363 = vmul.f32 %v1360, %v557
      %v1364 = vpack.c.bf16 %v1361, %v1361
      %v1365 = vpack.c.bf16 %v1362, %v1362
      %v1366 = vpack.c.bf16 %v1363, %v1363
      %v1370 = vunpack.c.l.b16 %v1364
      %v1371 = vunpack.c.l.b16 %v1365
      %v1372 = vunpack.c.l.b16 %v1366
      %v1373 = vpack.c.b16 %v1371, %v1370
      %v1374 = vpack.c.b16 %v1372, %v1372
      %1375 = vrot.lane.b32.xlu0 %v1373, 34
      %v1376 = vpop.permute.xlu0 %1375
      %1377 = vrot.lane.b32.xlu0 %v1374, 34
      %v1378 = vpop.permute.xlu0 %1377
      %v1379 = vrot.slane %v1376, 4
      %v1380 = vsel %vm641, %v1379, %v1376
      %v1381 = vsel %vm641, %v1379, %v1378
      %1384 = vst.msk [vmem:[#allocation2 + $0x14] sm:$0xff] %vm648, %v1380
      %1385 = vst.msk [vmem:[#allocation2 + $0x1c] sm:$0xf] %vm650, %v1381
      %v1386 = vld [vmem:[#allocation2] sm:$0xff]
      %v1387 = vld [vmem:[#allocation2 + $0x8] sm:$0xff]
      %v1388 = vld [vmem:[#allocation2 + $0x10] sm:$0xff]
      %v1389 = vld [vmem:[#allocation2 + $0x18] sm:$0xff]
      %v1390 = vld [vmem:[%s3] sm:$0xf]
      %s1391 = scalar_lea.vmem %s3, 4
      %v1392 = vld [vmem:[%s1391] sm:$0xf]
      %v1397 = vunpack.c.l.b16 %v1386
      %v1398 = vunpack.c.h.b16 %v1386
      %v1399 = vunpack.c.l.b16 %v1387
      %v1400 = vunpack.c.h.b16 %v1387
      %v1401 = vunpack.c.l.b16 %v1388
      %v1402 = vunpack.c.h.b16 %v1388
      %v1403 = vunpack.c.l.b16 %v1389
      %v1404 = vunpack.c.h.b16 %v1389
      %v1405 = vpack.c.b16 %v1401, %v1397
      %v1406 = vpack.c.b16 %v1402, %v1398
      %v1407 = vpack.c.b16 %v1403, %v1399
      %v1408 = vpack.c.b16 %v1404, %v1400
      %1409 = vrot.lane.b32.xlu0 %v1405, 2
      %v1410 = vpop.permute.xlu0 %1409
      %1411 = vrot.lane.b32.xlu0 %v1406, 2
      %v1412 = vpop.permute.xlu0 %1411
      %1413 = vrot.lane.b32.xlu0 %v1407, 2
      %v1414 = vpop.permute.xlu0 %1413
      %1415 = vrot.lane.b32.xlu0 %v1408, 2
      %v1416 = vpop.permute.xlu0 %1415
      %vm1417 = vcmask 15360
      %v1418 = vsel %vm1417, %v1410, %v1412
      %v1419 = vsel %vm1417, %v1412, %v1414
      %v1420 = vsel %vm1417, %v1414, %v1416
      %vm1424 = vcmask 130048
      %v1426 = vsel %vm1424, %v1392, 0
      %1428 = vmatprep.subr.bf16.mxu0 0
      %1429 = vmatpush1.bf16.msra.mxu0 0
      %1430 = vmatprep.subr.bf16.mxu0 0
      %1431 = vmatpush1.bf16.msra.mxu0 0
      %1432 = vmatprep.subr.bf16.mxu0 0
      %1433 = vmatpush1.bf16.msra.mxu0 0
      %1434 = vmatprep.subr.bf16.mxu0 0
      %1435 = vmatpush1.bf16.msra.mxu0 0
      %1436 = vmatprep.subr.bf16.mxu0 0
      %1437 = vmatpush1.bf16.msra.mxu0 0
      %1438 = vmatprep.subr.bf16.mxu0 0
      %1439 = vmatpush1.bf16.msra.mxu0 0
      %1440 = vmatprep.subr.bf16.mxu0 0
      %1441 = vmatpush1.bf16.msra.mxu0 0
      %1442 = vmatprep.subr.bf16.mxu0 %v1419
      %1443 = vmatpush1.bf16.msra.mxu0 %v1418
      %1444 = vmatprep.subr.bf16.mxu0 0
      %1445 = vmatpush2.bf16.msra.mxu0 0
      %1446 = vmatprep.subr.bf16.mxu0 0
      %1447 = vmatpush2.bf16.msra.mxu0 0
      %1448 = vmatprep.subr.bf16.mxu0 0
      %1449 = vmatpush2.bf16.msra.mxu0 0
      %1450 = vmatprep.subr.bf16.mxu0 0
      %1451 = vmatpush2.bf16.msra.mxu0 0
      %1452 = vmatprep.subr.bf16.mxu0 0
      %1453 = vmatpush2.bf16.msra.mxu0 0
      %1454 = vmatprep.subr.bf16.mxu0 0
      %1455 = vmatpush2.bf16.msra.mxu0 0
      %1456 = vmatprep.subr.bf16.mxu0 0
      %1457 = vmatpush2.bf16.msra.mxu0 0
      %1458 = vmatprep.subr.bf16.mxu0 0
      %1459 = vmatpush2.bf16.msra.mxu0 0
      %1460 = vmatprep.mubr.bf16.mxu0 0
      %1461 = vmatmul.mubr.bf16.gmra.mxu0 %v1426
      %v1462 = vpop.f32.mrf.mxu0
      %v1463 = vadd.f32 0.0, %v1462
      %v1464 = vpop.f32.mrf.mxu0
      %v1465 = vadd.f32 0.0, %v1464
      %v1466 = vpop.f32.mrf.mxu0
      %v1467 = vpop.f32.mrf.mxu0
      %1468 = vdwg.mxu0
      %1469 = vmatprep.subr.bf16.mxu0 0
      %1470 = vmatpush1.bf16.msra.mxu0 0
      %1471 = vmatprep.subr.bf16.mxu0 0
      %1472 = vmatpush1.bf16.msra.mxu0 0
      %1473 = vmatprep.subr.bf16.mxu0 0
      %1474 = vmatpush1.bf16.msra.mxu0 0
      %1475 = vmatprep.subr.bf16.mxu0 0
      %1476 = vmatpush1.bf16.msra.mxu0 0
      %1477 = vmatprep.subr.bf16.mxu0 0
      %1478 = vmatpush1.bf16.msra.mxu0 0
      %1479 = vmatprep.subr.bf16.mxu0 0
      %1480 = vmatpush1.bf16.msra.mxu0 0
      %1481 = vmatprep.subr.bf16.mxu0 0
      %1482 = vmatpush1.bf16.msra.mxu0 0
      %1483 = vmatprep.subr.bf16.mxu0 0
      %1484 = vmatpush1.bf16.msra.mxu0 %v1420
      %1485 = vmatprep.subr.bf16.mxu0 0
      %1486 = vmatpush2.bf16.msra.mxu0 0
      %1487 = vmatprep.subr.bf16.mxu0 0
      %1488 = vmatpush2.bf16.msra.mxu0 0
      %1489 = vmatprep.subr.bf16.mxu0 0
      %1490 = vmatpush2.bf16.msra.mxu0 0
      %1491 = vmatprep.subr.bf16.mxu0 0
      %1492 = vmatpush2.bf16.msra.mxu0 0
      %1493 = vmatprep.subr.bf16.mxu0 0
      %1494 = vmatpush2.bf16.msra.mxu0 0
      %1495 = vmatprep.subr.bf16.mxu0 0
      %1496 = vmatpush2.bf16.msra.mxu0 0
      %1497 = vmatprep.subr.bf16.mxu0 0
      %1498 = vmatpush2.bf16.msra.mxu0 0
      %1499 = vmatprep.subr.bf16.mxu0 0
      %1500 = vmatpush2.bf16.msra.mxu0 0
      %1501 = vmatprep.mubr.bf16.mxu0 0
      %1502 = vmatmul.mubr.bf16.gmra.mxu0 %v1426
      %v1503 = vpop.f32.mrf.mxu0
      %v1504 = vadd.f32 0.0, %v1503
      %v1505 = vpop.f32.mrf.mxu0
      %v1506 = vpop.f32.mrf.mxu0
      %v1507 = vpop.f32.mrf.mxu0
      %1508 = vdwg.mxu0
      %1509 = vrot.lane.b32.xlu0 %v1405, 3
      %v1510 = vpop.permute.xlu0 %1509
      %1511 = vrot.lane.b32.xlu0 %v1406, 3
      %v1512 = vpop.permute.xlu0 %1511
      %1513 = vrot.lane.b32.xlu0 %v1407, 3
      %v1514 = vpop.permute.xlu0 %1513
      %1515 = vrot.lane.b32.xlu0 %v1408, 3
      %v1516 = vpop.permute.xlu0 %1515
      %vm1517 = vcmask 23552
      %v1518 = vsel %vm1517, %v1510, %v1512
      %v1519 = vsel %vm1517, %v1512, %v1514
      %v1520 = vsel %vm1517, %v1514, %v1516
      %v1525 = vsel %vm1424, %v1390, 0
      %1527 = vmatprep.subr.bf16.mxu0 0
      %1528 = vmatpush1.bf16.msra.mxu0 0
      %1529 = vmatprep.subr.bf16.mxu0 0
      %1530 = vmatpush1.bf16.msra.mxu0 0
      %1531 = vmatprep.subr.bf16.mxu0 0
      %1532 = vmatpush1.bf16.msra.mxu0 0
      %1533 = vmatprep.subr.bf16.mxu0 0
      %1534 = vmatpush1.bf16.msra.mxu0 0
      %1535 = vmatprep.subr.bf16.mxu0 0
      %1536 = vmatpush1.bf16.msra.mxu0 0
      %1537 = vmatprep.subr.bf16.mxu0 0
      %1538 = vmatpush1.bf16.msra.mxu0 0
      %1539 = vmatprep.subr.bf16.mxu0 0
      %1540 = vmatpush1.bf16.msra.mxu0 0
      %1541 = vmatprep.subr.bf16.mxu0 %v1519
      %1542 = vmatpush1.bf16.msra.mxu0 %v1518
      %1543 = vmatprep.subr.bf16.mxu0 0
      %1544 = vmatpush2.bf16.msra.mxu0 0
      %1545 = vmatprep.subr.bf16.mxu0 0
      %1546 = vmatpush2.bf16.msra.mxu0 0
      %1547 = vmatprep.subr.bf16.mxu0 0
      %1548 = vmatpush2.bf16.msra.mxu0 0
      %1549 = vmatprep.subr.bf16.mxu0 0
      %1550 = vmatpush2.bf16.msra.mxu0 0
      %1551 = vmatprep.subr.bf16.mxu0 0
      %1552 = vmatpush2.bf16.msra.mxu0 0
      %1553 = vmatprep.subr.bf16.mxu0 0
      %1554 = vmatpush2.bf16.msra.mxu0 0
      %1555 = vmatprep.subr.bf16.mxu0 0
      %1556 = vmatpush2.bf16.msra.mxu0 0
      %1557 = vmatprep.subr.bf16.mxu0 0
      %1558 = vmatpush2.bf16.msra.mxu0 0
      %1559 = vmatprep.mubr.bf16.mxu0 0
      %1560 = vmatmul.mubr.bf16.gmra.mxu0 %v1525
      %v1561 = vpop.f32.mrf.mxu0
      %v1562 = vadd.f32 %v1463, %v1561
      %v1563 = vpop.f32.mrf.mxu0
      %v1564 = vadd.f32 %v1465, %v1563
      %v1565 = vpop.f32.mrf.mxu0
      %v1566 = vpop.f32.mrf.mxu0
      %1567 = vdwg.mxu0
      %1568 = vmatprep.subr.bf16.mxu0 0
      %1569 = vmatpush1.bf16.msra.mxu0 0
      %1570 = vmatprep.subr.bf16.mxu0 0
      %1571 = vmatpush1.bf16.msra.mxu0 0
      %1572 = vmatprep.subr.bf16.mxu0 0
      %1573 = vmatpush1.bf16.msra.mxu0 0
      %1574 = vmatprep.subr.bf16.mxu0 0
      %1575 = vmatpush1.bf16.msra.mxu0 0
      %1576 = vmatprep.subr.bf16.mxu0 0
      %1577 = vmatpush1.bf16.msra.mxu0 0
      %1578 = vmatprep.subr.bf16.mxu0 0
      %1579 = vmatpush1.bf16.msra.mxu0 0
      %1580 = vmatprep.subr.bf16.mxu0 0
      %1581 = vmatpush1.bf16.msra.mxu0 0
      %1582 = vmatprep.subr.bf16.mxu0 0
      %1583 = vmatpush1.bf16.msra.mxu0 %v1520
      %1584 = vmatprep.subr.bf16.mxu0 0
      %1585 = vmatpush2.bf16.msra.mxu0 0
      %1586 = vmatprep.subr.bf16.mxu0 0
      %1587 = vmatpush2.bf16.msra.mxu0 0
      %1588 = vmatprep.subr.bf16.mxu0 0
      %1589 = vmatpush2.bf16.msra.mxu0 0
      %1590 = vmatprep.subr.bf16.mxu0 0
      %1591 = vmatpush2.bf16.msra.mxu0 0
      %1592 = vmatprep.subr.bf16.mxu0 0
      %1593 = vmatpush2.bf16.msra.mxu0 0
      %1594 = vmatprep.subr.bf16.mxu0 0
      %1595 = vmatpush2.bf16.msra.mxu0 0
      %1596 = vmatprep.subr.bf16.mxu0 0
      %1597 = vmatpush2.bf16.msra.mxu0 0
      %1598 = vmatprep.subr.bf16.mxu0 0
      %1599 = vmatpush2.bf16.msra.mxu0 0
      %1600 = vmatprep.mubr.bf16.mxu0 0
      %1601 = vmatmul.mubr.bf16.gmra.mxu0 %v1525
      %v1602 = vpop.f32.mrf.mxu0
      %v1603 = vadd.f32 %v1504, %v1602
      %v1604 = vpop.f32.mrf.mxu0
      %v1605 = vpop.f32.mrf.mxu0
      %v1606 = vpop.f32.mrf.mxu0
      %1607 = vdwg.mxu0
      %s1608 = scalar_lea.vmem %s3, 8
      %v1609 = vld [vmem:[%s1608] sm:$0xf]
      %1610 = vrot.lane.b32.xlu0 %v1405, 1
      %v1611 = vpop.permute.xlu0 %1610
      %1612 = vrot.lane.b32.xlu0 %v1406, 1
      %v1613 = vpop.permute.xlu0 %1612
      %1614 = vrot.lane.b32.xlu0 %v1407, 1
      %v1615 = vpop.permute.xlu0 %1614
      %1616 = vrot.lane.b32.xlu0 %v1408, 1
      %v1617 = vpop.permute.xlu0 %1616
      %vm1618 = vcmask 7168
      %v1619 = vsel %vm1618, %v1611, %v1613
      %v1620 = vsel %vm1618, %v1613, %v1615
      %v1621 = vsel %vm1618, %v1615, %v1617
      %v1626 = vsel %vm1424, %v1609, 0
      %1628 = vmatprep.subr.bf16.mxu0 0
      %1629 = vmatpush1.bf16.msra.mxu0 0
      %1630 = vmatprep.subr.bf16.mxu0 0
      %1631 = vmatpush1.bf16.msra.mxu0 0
      %1632 = vmatprep.subr.bf16.mxu0 0
      %1633 = vmatpush1.bf16.msra.mxu0 0
      %1634 = vmatprep.subr.bf16.mxu0 0
      %1635 = vmatpush1.bf16.msra.mxu0 0
      %1636 = vmatprep.subr.bf16.mxu0 0
      %1637 = vmatpush1.bf16.msra.mxu0 0
      %1638 = vmatprep.subr.bf16.mxu0 0
      %1639 = vmatpush1.bf16.msra.mxu0 0
      %1640 = vmatprep.subr.bf16.mxu0 0
      %1641 = vmatpush1.bf16.msra.mxu0 0
      %1642 = vmatprep.subr.bf16.mxu0 %v1620
      %1643 = vmatpush1.bf16.msra.mxu0 %v1619
      %1644 = vmatprep.subr.bf16.mxu0 0
      %1645 = vmatpush2.bf16.msra.mxu0 0
      %1646 = vmatprep.subr.bf16.mxu0 0
      %1647 = vmatpush2.bf16.msra.mxu0 0
      %1648 = vmatprep.subr.bf16.mxu0 0
      %1649 = vmatpush2.bf16.msra.mxu0 0
      %1650 = vmatprep.subr.bf16.mxu0 0
      %1651 = vmatpush2.bf16.msra.mxu0 0
      %1652 = vmatprep.subr.bf16.mxu0 0
      %1653 = vmatpush2.bf16.msra.mxu0 0
      %1654 = vmatprep.subr.bf16.mxu0 0
      %1655 = vmatpush2.bf16.msra.mxu0 0
      %1656 = vmatprep.subr.bf16.mxu0 0
      %1657 = vmatpush2.bf16.msra.mxu0 0
      %1658 = vmatprep.subr.bf16.mxu0 0
      %1659 = vmatpush2.bf16.msra.mxu0 0
      %1660 = vmatprep.mubr.bf16.mxu0 0
      %1661 = vmatmul.mubr.bf16.gmra.mxu0 %v1626
      %v1662 = vpop.f32.mrf.mxu0
      %v1663 = vadd.f32 0.0, %v1662
      %v1664 = vpop.f32.mrf.mxu0
      %v1665 = vadd.f32 0.0, %v1664
      %v1666 = vpop.f32.mrf.mxu0
      %v1667 = vpop.f32.mrf.mxu0
      %1668 = vdwg.mxu0
      %1669 = vmatprep.subr.bf16.mxu0 0
      %1670 = vmatpush1.bf16.msra.mxu0 0
      %1671 = vmatprep.subr.bf16.mxu0 0
      %1672 = vmatpush1.bf16.msra.mxu0 0
      %1673 = vmatprep.subr.bf16.mxu0 0
      %1674 = vmatpush1.bf16.msra.mxu0 0
      %1675 = vmatprep.subr.bf16.mxu0 0
      %1676 = vmatpush1.bf16.msra.mxu0 0
      %1677 = vmatprep.subr.bf16.mxu0 0
      %1678 = vmatpush1.bf16.msra.mxu0 0
      %1679 = vmatprep.subr.bf16.mxu0 0
      %1680 = vmatpush1.bf16.msra.mxu0 0
      %1681 = vmatprep.subr.bf16.mxu0 0
      %1682 = vmatpush1.bf16.msra.mxu0 0
      %1683 = vmatprep.subr.bf16.mxu0 0
      %1684 = vmatpush1.bf16.msra.mxu0 %v1621
      %1685 = vmatprep.subr.bf16.mxu0 0
      %1686 = vmatpush2.bf16.msra.mxu0 0
      %1687 = vmatprep.subr.bf16.mxu0 0
      %1688 = vmatpush2.bf16.msra.mxu0 0
      %1689 = vmatprep.subr.bf16.mxu0 0
      %1690 = vmatpush2.bf16.msra.mxu0 0
      %1691 = vmatprep.subr.bf16.mxu0 0
      %1692 = vmatpush2.bf16.msra.mxu0 0
      %1693 = vmatprep.subr.bf16.mxu0 0
      %1694 = vmatpush2.bf16.msra.mxu0 0
      %1695 = vmatprep.subr.bf16.mxu0 0
      %1696 = vmatpush2.bf16.msra.mxu0 0
      %1697 = vmatprep.subr.bf16.mxu0 0
      %1698 = vmatpush2.bf16.msra.mxu0 0
      %1699 = vmatprep.subr.bf16.mxu0 0
      %1700 = vmatpush2.bf16.msra.mxu0 0
      %1701 = vmatprep.mubr.bf16.mxu0 0
      %1702 = vmatmul.mubr.bf16.gmra.mxu0 %v1626
      %v1703 = vpop.f32.mrf.mxu0
      %v1704 = vadd.f32 0.0, %v1703
      %v1705 = vpop.f32.mrf.mxu0
      %v1706 = vpop.f32.mrf.mxu0
      %v1707 = vpop.f32.mrf.mxu0
      %1708 = vdwg.mxu0
      %v1709 = vadd.f32 %v1562, %v1663
      %v1710 = vadd.f32 %v1564, %v1665
      %v1711 = vadd.f32 %v1603, %v1704
      %v1712 = vld [vmem:[#allocation2 + $0x4] sm:$0xff]
      %v1713 = vld [vmem:[#allocation2 + $0xc] sm:$0xf]
      %v1714 = vld [vmem:[#allocation2 + $0x14] sm:$0xff]
      %v1715 = vld [vmem:[#allocation2 + $0x1c] sm:$0xf]
      %s1716 = scalar_lea.vmem %s3, 12
      %v1717 = vld [vmem:[%s1716] sm:$0xf]
      %v1722 = vunpack.c.l.b16 %v1712
      %v1723 = vunpack.c.h.b16 %v1712
      %v1724 = vunpack.c.l.b16 %v1713
      %v1725 = vunpack.c.l.b16 %v1714
      %v1726 = vunpack.c.h.b16 %v1714
      %v1727 = vunpack.c.l.b16 %v1715
      %v1728 = vpack.c.b16 %v1725, %v1722
      %v1729 = vpack.c.b16 %v1726, %v1723
      %v1730 = vpack.c.b16 %v1727, %v1724
      %1731 = vrot.lane.b32.xlu0 %v1728, 95
      %v1732 = vpop.permute.xlu0 %1731
      %1733 = vrot.lane.b32.xlu0 %v1729, 95
      %v1734 = vpop.permute.xlu0 %1733
      %1735 = vrot.lane.b32.xlu0 %v1730, 95
      %v1736 = vpop.permute.xlu0 %1735
      %v1737 = vsel %vm985, %v1732, %v1734
      %v1738 = vsel %vm985, %v1734, %v1736
      %v1743 = vsel %vm1424, %v1717, 0
      %1745 = vmatprep.subr.bf16.mxu0 0
      %1746 = vmatpush1.bf16.msra.mxu0 0
      %1747 = vmatprep.subr.bf16.mxu0 0
      %1748 = vmatpush1.bf16.msra.mxu0 0
      %1749 = vmatprep.subr.bf16.mxu0 0
      %1750 = vmatpush1.bf16.msra.mxu0 0
      %1751 = vmatprep.subr.bf16.mxu0 0
      %1752 = vmatpush1.bf16.msra.mxu0 0
      %1753 = vmatprep.subr.bf16.mxu0 0
      %1754 = vmatpush1.bf16.msra.mxu0 0
      %1755 = vmatprep.subr.bf16.mxu0 0
      %1756 = vmatpush1.bf16.msra.mxu0 0
      %1757 = vmatprep.subr.bf16.mxu0 0
      %1758 = vmatpush1.bf16.msra.mxu0 0
      %1759 = vmatprep.subr.bf16.mxu0 %v1738
      %1760 = vmatpush1.bf16.msra.mxu0 %v1737
      %1761 = vmatprep.subr.bf16.mxu0 0
      %1762 = vmatpush2.bf16.msra.mxu0 0
      %1763 = vmatprep.subr.bf16.mxu0 0
      %1764 = vmatpush2.bf16.msra.mxu0 0
      %1765 = vmatprep.subr.bf16.mxu0 0
      %1766 = vmatpush2.bf16.msra.mxu0 0
      %1767 = vmatprep.subr.bf16.mxu0 0
      %1768 = vmatpush2.bf16.msra.mxu0 0
      %1769 = vmatprep.subr.bf16.mxu0 0
      %1770 = vmatpush2.bf16.msra.mxu0 0
      %1771 = vmatprep.subr.bf16.mxu0 0
      %1772 = vmatpush2.bf16.msra.mxu0 0
      %1773 = vmatprep.subr.bf16.mxu0 0
      %1774 = vmatpush2.bf16.msra.mxu0 0
      %1775 = vmatprep.subr.bf16.mxu0 0
      %1776 = vmatpush2.bf16.msra.mxu0 0
      %1777 = vmatprep.mubr.bf16.mxu0 0
      %1778 = vmatmul.mubr.bf16.gmra.mxu0 %v1743
      %v1779 = vpop.f32.mrf.mxu0
      %v1780 = vadd.f32 0.0, %v1779
      %v1781 = vpop.f32.mrf.mxu0
      %v1782 = vadd.f32 0.0, %v1781
      %v1783 = vpop.f32.mrf.mxu0
      %v1784 = vpop.f32.mrf.mxu0
      %1785 = vdwg.mxu0
      %1786 = vmatprep.subr.bf16.mxu0 0
      %1787 = vmatpush1.bf16.msra.mxu0 0
      %1788 = vmatprep.subr.bf16.mxu0 0
      %1789 = vmatpush1.bf16.msra.mxu0 0
      %1790 = vmatprep.subr.bf16.mxu0 0
      %1791 = vmatpush1.bf16.msra.mxu0 0
      %1792 = vmatprep.subr.bf16.mxu0 0
      %1793 = vmatpush1.bf16.msra.mxu0 0
      %1794 = vmatprep.subr.bf16.mxu0 0
      %1795 = vmatpush1.bf16.msra.mxu0 0
      %1796 = vmatprep.subr.bf16.mxu0 0
      %1797 = vmatpush1.bf16.msra.mxu0 0
      %1798 = vmatprep.subr.bf16.mxu0 0
      %1799 = vmatpush1.bf16.msra.mxu0 0
      %1800 = vmatprep.subr.bf16.mxu0 0
      %1801 = vmatpush1.bf16.msra.mxu0 %v1736
      %1802 = vmatprep.subr.bf16.mxu0 0
      %1803 = vmatpush2.bf16.msra.mxu0 0
      %1804 = vmatprep.subr.bf16.mxu0 0
      %1805 = vmatpush2.bf16.msra.mxu0 0
      %1806 = vmatprep.subr.bf16.mxu0 0
      %1807 = vmatpush2.bf16.msra.mxu0 0
      %1808 = vmatprep.subr.bf16.mxu0 0
      %1809 = vmatpush2.bf16.msra.mxu0 0
      %1810 = vmatprep.subr.bf16.mxu0 0
      %1811 = vmatpush2.bf16.msra.mxu0 0
      %1812 = vmatprep.subr.bf16.mxu0 0
      %1813 = vmatpush2.bf16.msra.mxu0 0
      %1814 = vmatprep.subr.bf16.mxu0 0
      %1815 = vmatpush2.bf16.msra.mxu0 0
      %1816 = vmatprep.subr.bf16.mxu0 0
      %1817 = vmatpush2.bf16.msra.mxu0 0
      %1818 = vmatprep.mubr.bf16.mxu0 0
      %1819 = vmatmul.mubr.bf16.gmra.mxu0 %v1743
      %v1820 = vpop.f32.mrf.mxu0
      %v1821 = vadd.f32 0.0, %v1820
      %v1822 = vpop.f32.mrf.mxu0
      %v1823 = vpop.f32.mrf.mxu0
      %v1824 = vpop.f32.mrf.mxu0
      %1825 = vdwg.mxu0
      %v1826 = vadd.f32 %v1709, %v1780
      %v1827 = vadd.f32 %v1710, %v1782
      %v1828 = vadd.f32 %v1711, %v1821
      %s1829 = scalar_lea.vmem %s3, 16
      %v1830 = vld [vmem:[%s1829] sm:$0xf]
      %1831 = vrot.lane.b32.xlu0 %v1728, 94
      %v1832 = vpop.permute.xlu0 %1831
      %1833 = vrot.lane.b32.xlu0 %v1729, 94
      %v1834 = vpop.permute.xlu0 %1833
      %1835 = vrot.lane.b32.xlu0 %v1730, 94
      %v1836 = vpop.permute.xlu0 %1835
      %v1837 = vsel %vm1092, %v1832, %v1834
      %v1838 = vsel %vm1092, %v1834, %v1836
      %v1843 = vsel %vm1424, %v1830, 0
      %1845 = vmatprep.subr.bf16.mxu0 0
      %1846 = vmatpush1.bf16.msra.mxu0 0
      %1847 = vmatprep.subr.bf16.mxu0 0
      %1848 = vmatpush1.bf16.msra.mxu0 0
      %1849 = vmatprep.subr.bf16.mxu0 0
      %1850 = vmatpush1.bf16.msra.mxu0 0
      %1851 = vmatprep.subr.bf16.mxu0 0
      %1852 = vmatpush1.bf16.msra.mxu0 0
      %1853 = vmatprep.subr.bf16.mxu0 0
      %1854 = vmatpush1.bf16.msra.mxu0 0
      %1855 = vmatprep.subr.bf16.mxu0 0
      %1856 = vmatpush1.bf16.msra.mxu0 0
      %1857 = vmatprep.subr.bf16.mxu0 0
      %1858 = vmatpush1.bf16.msra.mxu0 0
      %1859 = vmatprep.subr.bf16.mxu0 %v1838
      %1860 = vmatpush1.bf16.msra.mxu0 %v1837
      %1861 = vmatprep.subr.bf16.mxu0 0
      %1862 = vmatpush2.bf16.msra.mxu0 0
      %1863 = vmatprep.subr.bf16.mxu0 0
      %1864 = vmatpush2.bf16.msra.mxu0 0
      %1865 = vmatprep.subr.bf16.mxu0 0
      %1866 = vmatpush2.bf16.msra.mxu0 0
      %1867 = vmatprep.subr.bf16.mxu0 0
      %1868 = vmatpush2.bf16.msra.mxu0 0
      %1869 = vmatprep.subr.bf16.mxu0 0
      %1870 = vmatpush2.bf16.msra.mxu0 0
      %1871 = vmatprep.subr.bf16.mxu0 0
      %1872 = vmatpush2.bf16.msra.mxu0 0
      %1873 = vmatprep.subr.bf16.mxu0 0
      %1874 = vmatpush2.bf16.msra.mxu0 0
      %1875 = vmatprep.subr.bf16.mxu0 0
      %1876 = vmatpush2.bf16.msra.mxu0 0
      %1877 = vmatprep.mubr.bf16.mxu0 0
      %1878 = vmatmul.mubr.bf16.gmra.mxu0 %v1843
      %v1879 = vpop.f32.mrf.mxu0
      %v1880 = vadd.f32 0.0, %v1879
      %v1881 = vpop.f32.mrf.mxu0
      %v1882 = vadd.f32 0.0, %v1881
      %v1883 = vpop.f32.mrf.mxu0
      %v1884 = vpop.f32.mrf.mxu0
      %1885 = vdwg.mxu0
      %1886 = vmatprep.subr.bf16.mxu0 0
      %1887 = vmatpush1.bf16.msra.mxu0 0
      %1888 = vmatprep.subr.bf16.mxu0 0
      %1889 = vmatpush1.bf16.msra.mxu0 0
      %1890 = vmatprep.subr.bf16.mxu0 0
      %1891 = vmatpush1.bf16.msra.mxu0 0
      %1892 = vmatprep.subr.bf16.mxu0 0
      %1893 = vmatpush1.bf16.msra.mxu0 0
      %1894 = vmatprep.subr.bf16.mxu0 0
      %1895 = vmatpush1.bf16.msra.mxu0 0
      %1896 = vmatprep.subr.bf16.mxu0 0
      %1897 = vmatpush1.bf16.msra.mxu0 0
      %1898 = vmatprep.subr.bf16.mxu0 0
      %1899 = vmatpush1.bf16.msra.mxu0 0
      %1900 = vmatprep.subr.bf16.mxu0 0
      %1901 = vmatpush1.bf16.msra.mxu0 %v1836
      %1902 = vmatprep.subr.bf16.mxu0 0
      %1903 = vmatpush2.bf16.msra.mxu0 0
      %1904 = vmatprep.subr.bf16.mxu0 0
      %1905 = vmatpush2.bf16.msra.mxu0 0
      %1906 = vmatprep.subr.bf16.mxu0 0
      %1907 = vmatpush2.bf16.msra.mxu0 0
      %1908 = vmatprep.subr.bf16.mxu0 0
      %1909 = vmatpush2.bf16.msra.mxu0 0
      %1910 = vmatprep.subr.bf16.mxu0 0
      %1911 = vmatpush2.bf16.msra.mxu0 0
      %1912 = vmatprep.subr.bf16.mxu0 0
      %1913 = vmatpush2.bf16.msra.mxu0 0
      %1914 = vmatprep.subr.bf16.mxu0 0
      %1915 = vmatpush2.bf16.msra.mxu0 0
      %1916 = vmatprep.subr.bf16.mxu0 0
      %1917 = vmatpush2.bf16.msra.mxu0 0
      %1918 = vmatprep.mubr.bf16.mxu0 0
      %1919 = vmatmul.mubr.bf16.gmra.mxu0 %v1843
      %v1920 = vpop.f32.mrf.mxu0
      %v1921 = vadd.f32 0.0, %v1920
      %v1922 = vpop.f32.mrf.mxu0
      %v1923 = vpop.f32.mrf.mxu0
      %v1924 = vpop.f32.mrf.mxu0
      %1925 = vdwg.mxu0
      %v1926 = vadd.f32 %v1826, %v1880
      %v1927 = vadd.f32 %v1827, %v1882
      %v1928 = vadd.f32 %v1828, %v1921
      %s1929 = scalar_lea.vmem %s3, 20
      %v1930 = vld [vmem:[%s1929] sm:$0xf]
      %1931 = vrot.lane.b32.xlu0 %v1728, 93
      %v1932 = vpop.permute.xlu0 %1931
      %1933 = vrot.lane.b32.xlu0 %v1729, 93
      %v1934 = vpop.permute.xlu0 %1933
      %1935 = vrot.lane.b32.xlu0 %v1730, 93
      %v1936 = vpop.permute.xlu0 %1935
      %v1937 = vsel %vm1199, %v1932, %v1934
      %v1938 = vsel %vm1199, %v1934, %v1936
      %v1943 = vsel %vm1424, %v1930, 0
      %1945 = vmatprep.subr.bf16.mxu0 0
      %1946 = vmatpush1.bf16.msra.mxu0 0
      %1947 = vmatprep.subr.bf16.mxu0 0
      %1948 = vmatpush1.bf16.msra.mxu0 0
      %1949 = vmatprep.subr.bf16.mxu0 0
      %1950 = vmatpush1.bf16.msra.mxu0 0
      %1951 = vmatprep.subr.bf16.mxu0 0
      %1952 = vmatpush1.bf16.msra.mxu0 0
      %1953 = vmatprep.subr.bf16.mxu0 0
      %1954 = vmatpush1.bf16.msra.mxu0 0
      %1955 = vmatprep.subr.bf16.mxu0 0
      %1956 = vmatpush1.bf16.msra.mxu0 0
      %1957 = vmatprep.subr.bf16.mxu0 0
      %1958 = vmatpush1.bf16.msra.mxu0 0
      %1959 = vmatprep.subr.bf16.mxu0 %v1938
      %1960 = vmatpush1.bf16.msra.mxu0 %v1937
      %1961 = vmatprep.subr.bf16.mxu0 0
      %1962 = vmatpush2.bf16.msra.mxu0 0
      %1963 = vmatprep.subr.bf16.mxu0 0
      %1964 = vmatpush2.bf16.msra.mxu0 0
      %1965 = vmatprep.subr.bf16.mxu0 0
      %1966 = vmatpush2.bf16.msra.mxu0 0
      %1967 = vmatprep.subr.bf16.mxu0 0
      %1968 = vmatpush2.bf16.msra.mxu0 0
      %1969 = vmatprep.subr.bf16.mxu0 0
      %1970 = vmatpush2.bf16.msra.mxu0 0
      %1971 = vmatprep.subr.bf16.mxu0 0
      %1972 = vmatpush2.bf16.msra.mxu0 0
      %1973 = vmatprep.subr.bf16.mxu0 0
      %1974 = vmatpush2.bf16.msra.mxu0 0
      %1975 = vmatprep.subr.bf16.mxu0 0
      %1976 = vmatpush2.bf16.msra.mxu0 0
      %1977 = vmatprep.mubr.bf16.mxu0 0
      %1978 = vmatmul.mubr.bf16.gmra.mxu0 %v1943
      %v1979 = vpop.f32.mrf.mxu0
      %v1980 = vadd.f32 0.0, %v1979
      %v1981 = vpop.f32.mrf.mxu0
      %v1982 = vadd.f32 0.0, %v1981
      %v1983 = vpop.f32.mrf.mxu0
      %v1984 = vpop.f32.mrf.mxu0
      %1985 = vdwg.mxu0
      %1986 = vmatprep.subr.bf16.mxu0 0
      %1987 = vmatpush1.bf16.msra.mxu0 0
      %1988 = vmatprep.subr.bf16.mxu0 0
      %1989 = vmatpush1.bf16.msra.mxu0 0
      %1990 = vmatprep.subr.bf16.mxu0 0
      %1991 = vmatpush1.bf16.msra.mxu0 0
      %1992 = vmatprep.subr.bf16.mxu0 0
      %1993 = vmatpush1.bf16.msra.mxu0 0
      %1994 = vmatprep.subr.bf16.mxu0 0
      %1995 = vmatpush1.bf16.msra.mxu0 0
      %1996 = vmatprep.subr.bf16.mxu0 0
      %1997 = vmatpush1.bf16.msra.mxu0 0
      %1998 = vmatprep.subr.bf16.mxu0 0
      %1999 = vmatpush1.bf16.msra.mxu0 0
      %2000 = vmatprep.subr.bf16.mxu0 0
      %2001 = vmatpush1.bf16.msra.mxu0 %v1936
      %2002 = vmatprep.subr.bf16.mxu0 0
      %2003 = vmatpush2.bf16.msra.mxu0 0
      %2004 = vmatprep.subr.bf16.mxu0 0
      %2005 = vmatpush2.bf16.msra.mxu0 0
      %2006 = vmatprep.subr.bf16.mxu0 0
      %2007 = vmatpush2.bf16.msra.mxu0 0
      %2008 = vmatprep.subr.bf16.mxu0 0
      %2009 = vmatpush2.bf16.msra.mxu0 0
      %2010 = vmatprep.subr.bf16.mxu0 0
      %2011 = vmatpush2.bf16.msra.mxu0 0
      %2012 = vmatprep.subr.bf16.mxu0 0
      %2013 = vmatpush2.bf16.msra.mxu0 0
      %2014 = vmatprep.subr.bf16.mxu0 0
      %2015 = vmatpush2.bf16.msra.mxu0 0
      %2016 = vmatprep.subr.bf16.mxu0 0
      %2017 = vmatpush2.bf16.msra.mxu0 0
      %2018 = vmatprep.mubr.bf16.mxu0 0
      %2019 = vmatmul.mubr.bf16.gmra.mxu0 %v1943
      %v2020 = vpop.f32.mrf.mxu0
      %v2021 = vadd.f32 0.0, %v2020
      %v2022 = vpop.f32.mrf.mxu0
      %v2023 = vpop.f32.mrf.mxu0
      %v2024 = vpop.f32.mrf.mxu0
      %2025 = vdwg.mxu0
      %v2026 = vadd.f32 %v1926, %v1980
      %v2027 = vadd.f32 %v1927, %v1982
      %v2028 = vadd.f32 %v1928, %v2021
      %v2029 = vmul.f32 %v2026, %v549
      %v2030 = vmul.f32 %v2027, %v553
      %v2031 = vmul.f32 %v2028, %v557
      %v2032 = vadd.f32 %v2029, %v2030
      %v2033 = vsel %vm565, %v2031, 0.0
      %v2034 = vadd.f32 %v2032, %v2033
      %2035 = vadd.xlane.f32.xlu0 %v2034
      %v2036 = vpop.xlane.xlu0 %2035
      %v2037 = vmul.f32 %v2036, 0.00390625
      %v2038 = vsub.f32 %v2026, %v2037
      %v2039 = vsub.f32 %v2027, %v2037
      %v2040 = vsub.f32 %v2028, %v2037
      %v2041 = vmul.f32 %v2038, %v2038
      %v2042 = vmul.f32 %v2039, %v2039
      %v2043 = vmul.f32 %v2040, %v2040
      %v2044 = vmul.f32 %v2041, %v549
      %v2045 = vmul.f32 %v2042, %v553
      %v2046 = vmul.f32 %v2043, %v557
      %v2047 = vadd.f32 %v2044, %v2045
      %v2048 = vsel %vm565, %v2046, 0.0
      %v2049 = vadd.f32 %v2047, %v2048
      %2050 = vadd.xlane.f32.xlu0 %v2049
      %v2051 = vpop.xlane.xlu0 %2050
      %v2052 = vmul.f32 %v2051, 0.00390625
      %s2053 = scalar_lea.vmem %s9, 16
      %v2054 = vld [vmem:[%s2053] sm:$0xff]
      %v2055 = vadd.f32 %v2052, 1e-05
      %v2056 = vrsqrt.pop %v2055
      %v2057 = vmul.f32 %v2054, %v2056
      %2059 = vset.pattern.permute.xlu0 0
      %2060 = vperm.xlu0 %2059, %v2057
      %v2061 = vpop.permute.xlu0 %2060
      %v2063 = vmul.f32 %v2038, %v2061
      %v2064 = vmul.f32 %v2039, %v2061
      %v2065 = vmul.f32 %v2040, %v2061
      %s2066 = scalar_lea.vmem %s10, 16
      %v2067 = vld [vmem:[%s2066] sm:$0xff]
      %2069 = vset.pattern.permute.xlu0 0
      %2070 = vperm.xlu0 %2069, %v2067
      %v2071 = vpop.permute.xlu0 %2070
      %v2073 = vadd.f32 %v2063, %v2071
      %v2074 = vadd.f32 %v2064, %v2071
      %v2075 = vadd.f32 %v2065, %v2071
      %vm2076 = vcmp.ge.f32.partialorder %v2073, 0.0
      %vm2077 = vcmp.ge.f32.partialorder %v2074, 0.0
      %vm2078 = vcmp.ge.f32.partialorder %v2075, 0.0
      %s2079 = scalar_lea.vmem %s11, 16
      %v2080 = vld [vmem:[%s2079] sm:$0xff]
      %2082 = vset.pattern.permute.xlu0 0
      %2083 = vperm.xlu0 %2082, %v2080
      %v2084 = vpop.permute.xlu0 %2083
      %v2086 = vmul.f32 %v2084, %v2073
      %v2087 = vmul.f32 %v2084, %v2074
      %v2088 = vmul.f32 %v2084, %v2075
      %v2089 = vsel %vm2076, %v2073, %v2086
      %v2090 = vsel %vm2077, %v2074, %v2087
      %v2091 = vsel %vm2078, %v2075, %v2088
      %v2092 = vmul.f32 %v2089, %v549
      %v2093 = vmul.f32 %v2090, %v553
      %v2094 = vmul.f32 %v2091, %v557
      %v2095 = vpack.c.bf16 %v2092, %v2092
      %v2096 = vpack.c.bf16 %v2093, %v2093
      %v2097 = vpack.c.bf16 %v2094, %v2094
      %v2101 = vunpack.c.l.b16 %v2095
      %v2102 = vunpack.c.l.b16 %v2096
      %v2103 = vunpack.c.l.b16 %v2097
      %v2104 = vpack.c.b16 %v2102, %v2101
      %v2105 = vpack.c.b16 %v2103, %v2103
      %2106 = vrot.lane.b32.xlu0 %v2104, 34
      %v2107 = vpop.permute.xlu0 %2106
      %2108 = vrot.lane.b32.xlu0 %v2105, 34
      %v2109 = vpop.permute.xlu0 %2108
      %v2110 = vrot.slane %v2107, 4
      %v2111 = vsel %vm641, %v2110, %v2107
      %v2112 = vsel %vm641, %v2110, %v2109
      %2115 = vst.msk [vmem:[#allocation2 + $0x24] sm:$0xff] %vm648, %v2111
      %2116 = vst.msk [vmem:[#allocation2 + $0x2c] sm:$0xf] %vm650, %v2112
      %v2117 = vld [vmem:[#allocation2] sm:$0xff]
      %v2118 = vld [vmem:[#allocation2 + $0x8] sm:$0xf]
      %v2119 = vld [vmem:[#allocation2 + $0x10] sm:$0xff]
      %v2120 = vld [vmem:[#allocation2 + $0x18] sm:$0xf]
      %v2121 = vld [vmem:[#allocation2 + $0x20] sm:$0xff]
      %v2122 = vld [vmem:[#allocation2 + $0x28] sm:$0xf]
      %v2123 = vld [vmem:[%s4] sm:$0xf]
      %s2124 = scalar_lea.vmem %s4, 4
      %v2125 = vld [vmem:[%s2124] sm:$0xf]
      %v2132 = vunpack.c.l.b16 %v2117
      %v2133 = vunpack.c.h.b16 %v2117
      %v2134 = vunpack.c.l.b16 %v2118
      %v2135 = vunpack.c.l.b16 %v2119
      %v2136 = vunpack.c.h.b16 %v2119
      %v2137 = vunpack.c.l.b16 %v2120
      %v2138 = vunpack.c.l.b16 %v2121
      %v2139 = vunpack.c.h.b16 %v2121
      %v2140 = vunpack.c.l.b16 %v2122
      %v2141 = vpack.c.b16 %v2135, %v2132
      %v2142 = vpack.c.b16 %v2136, %v2133
      %v2143 = vpack.c.b16 %v2137, %v2134
      %v2144 = vpack.c.b16 %v2138, %v2138
      %v2145 = vpack.c.b16 %v2139, %v2139
      %v2146 = vpack.c.b16 %v2140, %v2140
      %2147 = vrot.lane.b32.xlu0 %v2141, 38
      %v2148 = vpop.permute.xlu0 %2147
      %2149 = vrot.lane.b32.xlu0 %v2142, 38
      %v2150 = vpop.permute.xlu0 %2149
      %2151 = vrot.lane.b32.xlu0 %v2143, 38
      %v2152 = vpop.permute.xlu0 %2151
      %2153 = vrot.lane.b32.xlu0 %v2144, 38
      %v2154 = vpop.permute.xlu0 %2153
      %2155 = vrot.lane.b32.xlu0 %v2145, 38
      %v2156 = vpop.permute.xlu0 %2155
      %2157 = vrot.lane.b32.xlu0 %v2146, 38
      %v2158 = vpop.permute.xlu0 %2157
      %vm2159 = vcmask 310272
      %v2160 = vsel %vm2159, %v2148, %v2150
      %v2161 = vsel %vm2159, %v2150, %v2152
      %v2162 = vsel %vm2159, %v2154, %v2156
      %v2163 = vsel %vm2159, %v2156, %v2158
      %vm2167 = vcmask 195584
      %v2169 = vsel %vm2167, %v2125, 0
      %v2172 = vsel %vm412, %v2162, 0
      %v2175 = vsel %vm412, %v2163, 0
      %v2178 = vsel %vm412, %v2158, 0
      %2180 = vmatprep.subr.bf16.mxu0 0
      %2181 = vmatpush1.bf16.msra.mxu0 0
      %2182 = vmatprep.subr.bf16.mxu0 0
      %2183 = vmatpush1.bf16.msra.mxu0 0
      %2184 = vmatprep.subr.bf16.mxu0 0
      %2185 = vmatpush1.bf16.msra.mxu0 0
      %2186 = vmatprep.subr.bf16.mxu0 0
      %2187 = vmatpush1.bf16.msra.mxu0 0
      %2188 = vmatprep.subr.bf16.mxu0 0
      %2189 = vmatpush1.bf16.msra.mxu0 0
      %2190 = vmatprep.subr.bf16.mxu0 0
      %2191 = vmatpush1.bf16.msra.mxu0 0
      %2192 = vmatprep.subr.bf16.mxu0 %v2175
      %2193 = vmatpush1.bf16.msra.mxu0 %v2172
      %2194 = vmatprep.subr.bf16.mxu0 %v2161
      %2195 = vmatpush1.bf16.msra.mxu0 %v2160
      %2196 = vmatprep.subr.bf16.mxu0 0
      %2197 = vmatpush2.bf16.msra.mxu0 0
      %2198 = vmatprep.subr.bf16.mxu0 0
      %2199 = vmatpush2.bf16.msra.mxu0 0
      %2200 = vmatprep.subr.bf16.mxu0 0
      %2201 = vmatpush2.bf16.msra.mxu0 0
      %2202 = vmatprep.subr.bf16.mxu0 0
      %2203 = vmatpush2.bf16.msra.mxu0 0
      %2204 = vmatprep.subr.bf16.mxu0 0
      %2205 = vmatpush2.bf16.msra.mxu0 0
      %2206 = vmatprep.subr.bf16.mxu0 0
      %2207 = vmatpush2.bf16.msra.mxu0 0
      %2208 = vmatprep.subr.bf16.mxu0 0
      %2209 = vmatpush2.bf16.msra.mxu0 0
      %2210 = vmatprep.subr.bf16.mxu0 0
      %2211 = vmatpush2.bf16.msra.mxu0 0
      %2212 = vmatprep.mubr.bf16.mxu0 0
      %2213 = vmatmul.mubr.bf16.gmra.mxu0 %v2169
      %v2214 = vpop.f32.mrf.mxu0
      %v2215 = vadd.f32 0.0, %v2214
      %v2216 = vpop.f32.mrf.mxu0
      %v2217 = vadd.f32 0.0, %v2216
      %v2218 = vpop.f32.mrf.mxu0
      %v2219 = vpop.f32.mrf.mxu0
      %2220 = vdwg.mxu0
      %2221 = vmatprep.subr.bf16.mxu0 0
      %2222 = vmatpush1.bf16.msra.mxu0 0
      %2223 = vmatprep.subr.bf16.mxu0 0
      %2224 = vmatpush1.bf16.msra.mxu0 0
      %2225 = vmatprep.subr.bf16.mxu0 0
      %2226 = vmatpush1.bf16.msra.mxu0 0
      %2227 = vmatprep.subr.bf16.mxu0 0
      %2228 = vmatpush1.bf16.msra.mxu0 0
      %2229 = vmatprep.subr.bf16.mxu0 0
      %2230 = vmatpush1.bf16.msra.mxu0 0
      %2231 = vmatprep.subr.bf16.mxu0 0
      %2232 = vmatpush1.bf16.msra.mxu0 0
      %2233 = vmatprep.subr.bf16.mxu0 0
      %2234 = vmatpush1.bf16.msra.mxu0 %v2178
      %2235 = vmatprep.subr.bf16.mxu0 0
      %2236 = vmatpush1.bf16.msra.mxu0 %v2152
      %2237 = vmatprep.subr.bf16.mxu0 0
      %2238 = vmatpush2.bf16.msra.mxu0 0
      %2239 = vmatprep.subr.bf16.mxu0 0
      %2240 = vmatpush2.bf16.msra.mxu0 0
      %2241 = vmatprep.subr.bf16.mxu0 0
      %2242 = vmatpush2.bf16.msra.mxu0 0
      %2243 = vmatprep.subr.bf16.mxu0 0
      %2244 = vmatpush2.bf16.msra.mxu0 0
      %2245 = vmatprep.subr.bf16.mxu0 0
      %2246 = vmatpush2.bf16.msra.mxu0 0
      %2247 = vmatprep.subr.bf16.mxu0 0
      %2248 = vmatpush2.bf16.msra.mxu0 0
      %2249 = vmatprep.subr.bf16.mxu0 0
      %2250 = vmatpush2.bf16.msra.mxu0 0
      %2251 = vmatprep.subr.bf16.mxu0 0
      %2252 = vmatpush2.bf16.msra.mxu0 0
      %2253 = vmatprep.mubr.bf16.mxu0 0
      %2254 = vmatmul.mubr.bf16.gmra.mxu0 %v2169
      %v2255 = vpop.f32.mrf.mxu0
      %v2256 = vadd.f32 0.0, %v2255
      %v2257 = vpop.f32.mrf.mxu0
      %v2258 = vpop.f32.mrf.mxu0
      %v2259 = vpop.f32.mrf.mxu0
      %2260 = vdwg.mxu0
      %2261 = vrot.lane.b32.xlu0 %v2141, 39
      %v2262 = vpop.permute.xlu0 %2261
      %2263 = vrot.lane.b32.xlu0 %v2142, 39
      %v2264 = vpop.permute.xlu0 %2263
      %2265 = vrot.lane.b32.xlu0 %v2143, 39
      %v2266 = vpop.permute.xlu0 %2265
      %2267 = vrot.lane.b32.xlu0 %v2144, 39
      %v2268 = vpop.permute.xlu0 %2267
      %2269 = vrot.lane.b32.xlu0 %v2145, 39
      %v2270 = vpop.permute.xlu0 %2269
      %2271 = vrot.lane.b32.xlu0 %v2146, 39
      %v2272 = vpop.permute.xlu0 %2271
      %vm2273 = vcmask 318464
      %v2274 = vsel %vm2273, %v2262, %v2264
      %v2275 = vsel %vm2273, %v2264, %v2266
      %v2276 = vsel %vm2273, %v2268, %v2270
      %v2277 = vsel %vm2273, %v2270, %v2272
      %v2282 = vsel %vm2167, %v2123, 0
      %v2285 = vsel %vm412, %v2276, 0
      %v2288 = vsel %vm412, %v2277, 0
      %v2291 = vsel %vm412, %v2272, 0
      %2293 = vmatprep.subr.bf16.mxu0 0
      %2294 = vmatpush1.bf16.msra.mxu0 0
      %2295 = vmatprep.subr.bf16.mxu0 0
      %2296 = vmatpush1.bf16.msra.mxu0 0
      %2297 = vmatprep.subr.bf16.mxu0 0
      %2298 = vmatpush1.bf16.msra.mxu0 0
      %2299 = vmatprep.subr.bf16.mxu0 0
      %2300 = vmatpush1.bf16.msra.mxu0 0
      %2301 = vmatprep.subr.bf16.mxu0 0
      %2302 = vmatpush1.bf16.msra.mxu0 0
      %2303 = vmatprep.subr.bf16.mxu0 0
      %2304 = vmatpush1.bf16.msra.mxu0 0
      %2305 = vmatprep.subr.bf16.mxu0 %v2288
      %2306 = vmatpush1.bf16.msra.mxu0 %v2285
      %2307 = vmatprep.subr.bf16.mxu0 %v2275
      %2308 = vmatpush1.bf16.msra.mxu0 %v2274
      %2309 = vmatprep.subr.bf16.mxu0 0
      %2310 = vmatpush2.bf16.msra.mxu0 0
      %2311 = vmatprep.subr.bf16.mxu0 0
      %2312 = vmatpush2.bf16.msra.mxu0 0
      %2313 = vmatprep.subr.bf16.mxu0 0
      %2314 = vmatpush2.bf16.msra.mxu0 0
      %2315 = vmatprep.subr.bf16.mxu0 0
      %2316 = vmatpush2.bf16.msra.mxu0 0
      %2317 = vmatprep.subr.bf16.mxu0 0
      %2318 = vmatpush2.bf16.msra.mxu0 0
      %2319 = vmatprep.subr.bf16.mxu0 0
      %2320 = vmatpush2.bf16.msra.mxu0 0
      %2321 = vmatprep.subr.bf16.mxu0 0
      %2322 = vmatpush2.bf16.msra.mxu0 0
      %2323 = vmatprep.subr.bf16.mxu0 0
      %2324 = vmatpush2.bf16.msra.mxu0 0
      %2325 = vmatprep.mubr.bf16.mxu0 0
      %2326 = vmatmul.mubr.bf16.gmra.mxu0 %v2282
      %v2327 = vpop.f32.mrf.mxu0
      %v2328 = vadd.f32 %v2215, %v2327
      %v2329 = vpop.f32.mrf.mxu0
      %v2330 = vadd.f32 %v2217, %v2329
      %v2331 = vpop.f32.mrf.mxu0
      %v2332 = vpop.f32.mrf.mxu0
      %2333 = vdwg.mxu0
      %2334 = vmatprep.subr.bf16.mxu0 0
      %2335 = vmatpush1.bf16.msra.mxu0 0
      %2336 = vmatprep.subr.bf16.mxu0 0
      %2337 = vmatpush1.bf16.msra.mxu0 0
      %2338 = vmatprep.subr.bf16.mxu0 0
      %2339 = vmatpush1.bf16.msra.mxu0 0
      %2340 = vmatprep.subr.bf16.mxu0 0
      %2341 = vmatpush1.bf16.msra.mxu0 0
      %2342 = vmatprep.subr.bf16.mxu0 0
      %2343 = vmatpush1.bf16.msra.mxu0 0
      %2344 = vmatprep.subr.bf16.mxu0 0
      %2345 = vmatpush1.bf16.msra.mxu0 0
      %2346 = vmatprep.subr.bf16.mxu0 0
      %2347 = vmatpush1.bf16.msra.mxu0 %v2291
      %2348 = vmatprep.subr.bf16.mxu0 0
      %2349 = vmatpush1.bf16.msra.mxu0 %v2266
      %2350 = vmatprep.subr.bf16.mxu0 0
      %2351 = vmatpush2.bf16.msra.mxu0 0
      %2352 = vmatprep.subr.bf16.mxu0 0
      %2353 = vmatpush2.bf16.msra.mxu0 0
      %2354 = vmatprep.subr.bf16.mxu0 0
      %2355 = vmatpush2.bf16.msra.mxu0 0
      %2356 = vmatprep.subr.bf16.mxu0 0
      %2357 = vmatpush2.bf16.msra.mxu0 0
      %2358 = vmatprep.subr.bf16.mxu0 0
      %2359 = vmatpush2.bf16.msra.mxu0 0
      %2360 = vmatprep.subr.bf16.mxu0 0
      %2361 = vmatpush2.bf16.msra.mxu0 0
      %2362 = vmatprep.subr.bf16.mxu0 0
      %2363 = vmatpush2.bf16.msra.mxu0 0
      %2364 = vmatprep.subr.bf16.mxu0 0
      %2365 = vmatpush2.bf16.msra.mxu0 0
      %2366 = vmatprep.mubr.bf16.mxu0 0
      %2367 = vmatmul.mubr.bf16.gmra.mxu0 %v2282
      %v2368 = vpop.f32.mrf.mxu0
      %v2369 = vadd.f32 %v2256, %v2368
      %v2370 = vpop.f32.mrf.mxu0
      %v2371 = vpop.f32.mrf.mxu0
      %v2372 = vpop.f32.mrf.mxu0
      %2373 = vdwg.mxu0
      %s2374 = scalar_lea.vmem %s4, 8
      %v2375 = vld [vmem:[%s2374] sm:$0xf]
      %2376 = vrot.lane.b32.xlu0 %v2141, 37
      %v2377 = vpop.permute.xlu0 %2376
      %2378 = vrot.lane.b32.xlu0 %v2142, 37
      %v2379 = vpop.permute.xlu0 %2378
      %2380 = vrot.lane.b32.xlu0 %v2143, 37
      %v2381 = vpop.permute.xlu0 %2380
      %2382 = vrot.lane.b32.xlu0 %v2144, 37
      %v2383 = vpop.permute.xlu0 %2382
      %2384 = vrot.lane.b32.xlu0 %v2145, 37
      %v2385 = vpop.permute.xlu0 %2384
      %2386 = vrot.lane.b32.xlu0 %v2146, 37
      %v2387 = vpop.permute.xlu0 %2386
      %vm2388 = vcmask 302080
      %v2389 = vsel %vm2388, %v2377, %v2379
      %v2390 = vsel %vm2388, %v2379, %v2381
      %v2391 = vsel %vm2388, %v2383, %v2385
      %v2392 = vsel %vm2388, %v2385, %v2387
      %v2397 = vsel %vm2167, %v2375, 0
      %v2400 = vsel %vm412, %v2391, 0
      %v2403 = vsel %vm412, %v2392, 0
      %v2406 = vsel %vm412, %v2387, 0
      %2408 = vmatprep.subr.bf16.mxu0 0
      %2409 = vmatpush1.bf16.msra.mxu0 0
      %2410 = vmatprep.subr.bf16.mxu0 0
      %2411 = vmatpush1.bf16.msra.mxu0 0
      %2412 = vmatprep.subr.bf16.mxu0 0
      %2413 = vmatpush1.bf16.msra.mxu0 0
      %2414 = vmatprep.subr.bf16.mxu0 0
      %2415 = vmatpush1.bf16.msra.mxu0 0
      %2416 = vmatprep.subr.bf16.mxu0 0
      %2417 = vmatpush1.bf16.msra.mxu0 0
      %2418 = vmatprep.subr.bf16.mxu0 0
      %2419 = vmatpush1.bf16.msra.mxu0 0
      %2420 = vmatprep.subr.bf16.mxu0 %v2403
      %2421 = vmatpush1.bf16.msra.mxu0 %v2400
      %2422 = vmatprep.subr.bf16.mxu0 %v2390
      %2423 = vmatpush1.bf16.msra.mxu0 %v2389
      %2424 = vmatprep.subr.bf16.mxu0 0
      %2425 = vmatpush2.bf16.msra.mxu0 0
      %2426 = vmatprep.subr.bf16.mxu0 0
      %2427 = vmatpush2.bf16.msra.mxu0 0
      %2428 = vmatprep.subr.bf16.mxu0 0
      %2429 = vmatpush2.bf16.msra.mxu0 0
      %2430 = vmatprep.subr.bf16.mxu0 0
      %2431 = vmatpush2.bf16.msra.mxu0 0
      %2432 = vmatprep.subr.bf16.mxu0 0
      %2433 = vmatpush2.bf16.msra.mxu0 0
      %2434 = vmatprep.subr.bf16.mxu0 0
      %2435 = vmatpush2.bf16.msra.mxu0 0
      %2436 = vmatprep.subr.bf16.mxu0 0
      %2437 = vmatpush2.bf16.msra.mxu0 0
      %2438 = vmatprep.subr.bf16.mxu0 0
      %2439 = vmatpush2.bf16.msra.mxu0 0
      %2440 = vmatprep.mubr.bf16.mxu0 0
      %2441 = vmatmul.mubr.bf16.gmra.mxu0 %v2397
      %v2442 = vpop.f32.mrf.mxu0
      %v2443 = vadd.f32 0.0, %v2442
      %v2444 = vpop.f32.mrf.mxu0
      %v2445 = vadd.f32 0.0, %v2444
      %v2446 = vpop.f32.mrf.mxu0
      %v2447 = vpop.f32.mrf.mxu0
      %2448 = vdwg.mxu0
      %2449 = vmatprep.subr.bf16.mxu0 0
      %2450 = vmatpush1.bf16.msra.mxu0 0
      %2451 = vmatprep.subr.bf16.mxu0 0
      %2452 = vmatpush1.bf16.msra.mxu0 0
      %2453 = vmatprep.subr.bf16.mxu0 0
      %2454 = vmatpush1.bf16.msra.mxu0 0
      %2455 = vmatprep.subr.bf16.mxu0 0
      %2456 = vmatpush1.bf16.msra.mxu0 0
      %2457 = vmatprep.subr.bf16.mxu0 0
      %2458 = vmatpush1.bf16.msra.mxu0 0
      %2459 = vmatprep.subr.bf16.mxu0 0
      %2460 = vmatpush1.bf16.msra.mxu0 0
      %2461 = vmatprep.subr.bf16.mxu0 0
      %2462 = vmatpush1.bf16.msra.mxu0 %v2406
      %2463 = vmatprep.subr.bf16.mxu0 0
      %2464 = vmatpush1.bf16.msra.mxu0 %v2381
      %2465 = vmatprep.subr.bf16.mxu0 0
      %2466 = vmatpush2.bf16.msra.mxu0 0
      %2467 = vmatprep.subr.bf16.mxu0 0
      %2468 = vmatpush2.bf16.msra.mxu0 0
      %2469 = vmatprep.subr.bf16.mxu0 0
      %2470 = vmatpush2.bf16.msra.mxu0 0
      %2471 = vmatprep.subr.bf16.mxu0 0
      %2472 = vmatpush2.bf16.msra.mxu0 0
      %2473 = vmatprep.subr.bf16.mxu0 0
      %2474 = vmatpush2.bf16.msra.mxu0 0
      %2475 = vmatprep.subr.bf16.mxu0 0
      %2476 = vmatpush2.bf16.msra.mxu0 0
      %2477 = vmatprep.subr.bf16.mxu0 0
      %2478 = vmatpush2.bf16.msra.mxu0 0
      %2479 = vmatprep.subr.bf16.mxu0 0
      %2480 = vmatpush2.bf16.msra.mxu0 0
      %2481 = vmatprep.mubr.bf16.mxu0 0
      %2482 = vmatmul.mubr.bf16.gmra.mxu0 %v2397
      %v2483 = vpop.f32.mrf.mxu0
      %v2484 = vadd.f32 0.0, %v2483
      %v2485 = vpop.f32.mrf.mxu0
      %v2486 = vpop.f32.mrf.mxu0
      %v2487 = vpop.f32.mrf.mxu0
      %2488 = vdwg.mxu0
      %v2489 = vadd.f32 %v2328, %v2443
      %v2490 = vadd.f32 %v2330, %v2445
      %v2491 = vadd.f32 %v2369, %v2484
      %v2492 = vld [vmem:[#allocation2 + $0x4] sm:$0xff]
      %v2493 = vld [vmem:[#allocation2 + $0xc] sm:$0xf]
      %v2494 = vld [vmem:[#allocation2 + $0x14] sm:$0xff]
      %v2495 = vld [vmem:[#allocation2 + $0x1c] sm:$0xf]
      %v2496 = vld [vmem:[#allocation2 + $0x24] sm:$0xff]
      %v2497 = vld [vmem:[#allocation2 + $0x2c] sm:$0xf]
      %s2498 = scalar_lea.vmem %s4, 12
      %v2499 = vld [vmem:[%s2498] sm:$0xf]
      %v2506 = vunpack.c.l.b16 %v2492
      %v2507 = vunpack.c.h.b16 %v2492
      %v2508 = vunpack.c.l.b16 %v2493
      %v2509 = vunpack.c.l.b16 %v2494
      %v2510 = vunpack.c.h.b16 %v2494
      %v2511 = vunpack.c.l.b16 %v2495
      %v2512 = vunpack.c.l.b16 %v2496
      %v2513 = vunpack.c.h.b16 %v2496
      %v2514 = vunpack.c.l.b16 %v2497
      %v2515 = vpack.c.b16 %v2509, %v2506
      %v2516 = vpack.c.b16 %v2510, %v2507
      %v2517 = vpack.c.b16 %v2511, %v2508
      %v2518 = vpack.c.b16 %v2512, %v2512
      %v2519 = vpack.c.b16 %v2513, %v2513
      %v2520 = vpack.c.b16 %v2514, %v2514
      %2521 = vrot.lane.b32.xlu0 %v2515, 95
      %v2522 = vpop.permute.xlu0 %2521
      %2523 = vrot.lane.b32.xlu0 %v2516, 95
      %v2524 = vpop.permute.xlu0 %2523
      %2525 = vrot.lane.b32.xlu0 %v2517, 95
      %v2526 = vpop.permute.xlu0 %2525
      %2527 = vrot.lane.b32.xlu0 %v2518, 95
      %v2528 = vpop.permute.xlu0 %2527
      %2529 = vrot.lane.b32.xlu0 %v2519, 95
      %v2530 = vpop.permute.xlu0 %2529
      %2531 = vrot.lane.b32.xlu0 %v2520, 95
      %v2532 = vpop.permute.xlu0 %2531
      %v2533 = vsel %vm985, %v2522, %v2524
      %v2534 = vsel %vm985, %v2524, %v2526
      %v2535 = vsel %vm985, %v2528, %v2530
      %v2536 = vsel %vm985, %v2530, %v2532
      %v2541 = vsel %vm2167, %v2499, 0
      %v2544 = vsel %vm412, %v2535, 0
      %v2547 = vsel %vm412, %v2536, 0
      %v2550 = vsel %vm412, %v2532, 0
      %2552 = vmatprep.subr.bf16.mxu0 0
      %2553 = vmatpush1.bf16.msra.mxu0 0
      %2554 = vmatprep.subr.bf16.mxu0 0
      %2555 = vmatpush1.bf16.msra.mxu0 0
      %2556 = vmatprep.subr.bf16.mxu0 0
      %2557 = vmatpush1.bf16.msra.mxu0 0
      %2558 = vmatprep.subr.bf16.mxu0 0
      %2559 = vmatpush1.bf16.msra.mxu0 0
      %2560 = vmatprep.subr.bf16.mxu0 0
      %2561 = vmatpush1.bf16.msra.mxu0 0
      %2562 = vmatprep.subr.bf16.mxu0 0
      %2563 = vmatpush1.bf16.msra.mxu0 0
      %2564 = vmatprep.subr.bf16.mxu0 %v2547
      %2565 = vmatpush1.bf16.msra.mxu0 %v2544
      %2566 = vmatprep.subr.bf16.mxu0 %v2534
      %2567 = vmatpush1.bf16.msra.mxu0 %v2533
      %2568 = vmatprep.subr.bf16.mxu0 0
      %2569 = vmatpush2.bf16.msra.mxu0 0
      %2570 = vmatprep.subr.bf16.mxu0 0
      %2571 = vmatpush2.bf16.msra.mxu0 0
      %2572 = vmatprep.subr.bf16.mxu0 0
      %2573 = vmatpush2.bf16.msra.mxu0 0
      %2574 = vmatprep.subr.bf16.mxu0 0
      %2575 = vmatpush2.bf16.msra.mxu0 0
      %2576 = vmatprep.subr.bf16.mxu0 0
      %2577 = vmatpush2.bf16.msra.mxu0 0
      %2578 = vmatprep.subr.bf16.mxu0 0
      %2579 = vmatpush2.bf16.msra.mxu0 0
      %2580 = vmatprep.subr.bf16.mxu0 0
      %2581 = vmatpush2.bf16.msra.mxu0 0
      %2582 = vmatprep.subr.bf16.mxu0 0
      %2583 = vmatpush2.bf16.msra.mxu0 0
      %2584 = vmatprep.mubr.bf16.mxu0 0
      %2585 = vmatmul.mubr.bf16.gmra.mxu0 %v2541
      %v2586 = vpop.f32.mrf.mxu0
      %v2587 = vadd.f32 0.0, %v2586
      %v2588 = vpop.f32.mrf.mxu0
      %v2589 = vadd.f32 0.0, %v2588
      %v2590 = vpop.f32.mrf.mxu0
      %v2591 = vpop.f32.mrf.mxu0
      %2592 = vdwg.mxu0
      %2593 = vmatprep.subr.bf16.mxu0 0
      %2594 = vmatpush1.bf16.msra.mxu0 0
      %2595 = vmatprep.subr.bf16.mxu0 0
      %2596 = vmatpush1.bf16.msra.mxu0 0
      %2597 = vmatprep.subr.bf16.mxu0 0
      %2598 = vmatpush1.bf16.msra.mxu0 0
      %2599 = vmatprep.subr.bf16.mxu0 0
      %2600 = vmatpush1.bf16.msra.mxu0 0
      %2601 = vmatprep.subr.bf16.mxu0 0
      %2602 = vmatpush1.bf16.msra.mxu0 0
      %2603 = vmatprep.subr.bf16.mxu0 0
      %2604 = vmatpush1.bf16.msra.mxu0 0
      %2605 = vmatprep.subr.bf16.mxu0 0
      %2606 = vmatpush1.bf16.msra.mxu0 %v2550
      %2607 = vmatprep.subr.bf16.mxu0 0
      %2608 = vmatpush1.bf16.msra.mxu0 %v2526
      %2609 = vmatprep.subr.bf16.mxu0 0
      %2610 = vmatpush2.bf16.msra.mxu0 0
      %2611 = vmatprep.subr.bf16.mxu0 0
      %2612 = vmatpush2.bf16.msra.mxu0 0
      %2613 = vmatprep.subr.bf16.mxu0 0
      %2614 = vmatpush2.bf16.msra.mxu0 0
      %2615 = vmatprep.subr.bf16.mxu0 0
      %2616 = vmatpush2.bf16.msra.mxu0 0
      %2617 = vmatprep.subr.bf16.mxu0 0
      %2618 = vmatpush2.bf16.msra.mxu0 0
      %2619 = vmatprep.subr.bf16.mxu0 0
      %2620 = vmatpush2.bf16.msra.mxu0 0
      %2621 = vmatprep.subr.bf16.mxu0 0
      %2622 = vmatpush2.bf16.msra.mxu0 0
      %2623 = vmatprep.subr.bf16.mxu0 0
      %2624 = vmatpush2.bf16.msra.mxu0 0
      %2625 = vmatprep.mubr.bf16.mxu0 0
      %2626 = vmatmul.mubr.bf16.gmra.mxu0 %v2541
      %v2627 = vpop.f32.mrf.mxu0
      %v2628 = vadd.f32 0.0, %v2627
      %v2629 = vpop.f32.mrf.mxu0
      %v2630 = vpop.f32.mrf.mxu0
      %v2631 = vpop.f32.mrf.mxu0
      %2632 = vdwg.mxu0
      %v2633 = vadd.f32 %v2489, %v2587
      %v2634 = vadd.f32 %v2490, %v2589
      %v2635 = vadd.f32 %v2491, %v2628
      %s2636 = scalar_lea.vmem %s4, 16
      %v2637 = vld [vmem:[%s2636] sm:$0xf]
      %2638 = vrot.lane.b32.xlu0 %v2515, 94
      %v2639 = vpop.permute.xlu0 %2638
      %2640 = vrot.lane.b32.xlu0 %v2516, 94
      %v2641 = vpop.permute.xlu0 %2640
      %2642 = vrot.lane.b32.xlu0 %v2517, 94
      %v2643 = vpop.permute.xlu0 %2642
      %2644 = vrot.lane.b32.xlu0 %v2518, 94
      %v2645 = vpop.permute.xlu0 %2644
      %2646 = vrot.lane.b32.xlu0 %v2519, 94
      %v2647 = vpop.permute.xlu0 %2646
      %2648 = vrot.lane.b32.xlu0 %v2520, 94
      %v2649 = vpop.permute.xlu0 %2648
      %v2650 = vsel %vm1092, %v2639, %v2641
      %v2651 = vsel %vm1092, %v2641, %v2643
      %v2652 = vsel %vm1092, %v2645, %v2647
      %v2653 = vsel %vm1092, %v2647, %v2649
      %v2658 = vsel %vm2167, %v2637, 0
      %v2661 = vsel %vm412, %v2652, 0
      %v2664 = vsel %vm412, %v2653, 0
      %v2667 = vsel %vm412, %v2649, 0
      %2669 = vmatprep.subr.bf16.mxu0 0
      %2670 = vmatpush1.bf16.msra.mxu0 0
      %2671 = vmatprep.subr.bf16.mxu0 0
      %2672 = vmatpush1.bf16.msra.mxu0 0
      %2673 = vmatprep.subr.bf16.mxu0 0
      %2674 = vmatpush1.bf16.msra.mxu0 0
      %2675 = vmatprep.subr.bf16.mxu0 0
      %2676 = vmatpush1.bf16.msra.mxu0 0
      %2677 = vmatprep.subr.bf16.mxu0 0
      %2678 = vmatpush1.bf16.msra.mxu0 0
      %2679 = vmatprep.subr.bf16.mxu0 0
      %2680 = vmatpush1.bf16.msra.mxu0 0
      %2681 = vmatprep.subr.bf16.mxu0 %v2664
      %2682 = vmatpush1.bf16.msra.mxu0 %v2661
      %2683 = vmatprep.subr.bf16.mxu0 %v2651
      %2684 = vmatpush1.bf16.msra.mxu0 %v2650
      %2685 = vmatprep.subr.bf16.mxu0 0
      %2686 = vmatpush2.bf16.msra.mxu0 0
      %2687 = vmatprep.subr.bf16.mxu0 0
      %2688 = vmatpush2.bf16.msra.mxu0 0
      %2689 = vmatprep.subr.bf16.mxu0 0
      %2690 = vmatpush2.bf16.msra.mxu0 0
      %2691 = vmatprep.subr.bf16.mxu0 0
      %2692 = vmatpush2.bf16.msra.mxu0 0
      %2693 = vmatprep.subr.bf16.mxu0 0
      %2694 = vmatpush2.bf16.msra.mxu0 0
      %2695 = vmatprep.subr.bf16.mxu0 0
      %2696 = vmatpush2.bf16.msra.mxu0 0
      %2697 = vmatprep.subr.bf16.mxu0 0
      %2698 = vmatpush2.bf16.msra.mxu0 0
      %2699 = vmatprep.subr.bf16.mxu0 0
      %2700 = vmatpush2.bf16.msra.mxu0 0
      %2701 = vmatprep.mubr.bf16.mxu0 0
      %2702 = vmatmul.mubr.bf16.gmra.mxu0 %v2658
      %v2703 = vpop.f32.mrf.mxu0
      %v2704 = vadd.f32 0.0, %v2703
      %v2705 = vpop.f32.mrf.mxu0
      %v2706 = vadd.f32 0.0, %v2705
      %v2707 = vpop.f32.mrf.mxu0
      %v2708 = vpop.f32.mrf.mxu0
      %2709 = vdwg.mxu0
      %2710 = vmatprep.subr.bf16.mxu0 0
      %2711 = vmatpush1.bf16.msra.mxu0 0
      %2712 = vmatprep.subr.bf16.mxu0 0
      %2713 = vmatpush1.bf16.msra.mxu0 0
      %2714 = vmatprep.subr.bf16.mxu0 0
      %2715 = vmatpush1.bf16.msra.mxu0 0
      %2716 = vmatprep.subr.bf16.mxu0 0
      %2717 = vmatpush1.bf16.msra.mxu0 0
      %2718 = vmatprep.subr.bf16.mxu0 0
      %2719 = vmatpush1.bf16.msra.mxu0 0
      %2720 = vmatprep.subr.bf16.mxu0 0
      %2721 = vmatpush1.bf16.msra.mxu0 0
      %2722 = vmatprep.subr.bf16.mxu0 0
      %2723 = vmatpush1.bf16.msra.mxu0 %v2667
      %2724 = vmatprep.subr.bf16.mxu0 0
      %2725 = vmatpush1.bf16.msra.mxu0 %v2643
      %2726 = vmatprep.subr.bf16.mxu0 0
      %2727 = vmatpush2.bf16.msra.mxu0 0
      %2728 = vmatprep.subr.bf16.mxu0 0
      %2729 = vmatpush2.bf16.msra.mxu0 0
      %2730 = vmatprep.subr.bf16.mxu0 0
      %2731 = vmatpush2.bf16.msra.mxu0 0
      %2732 = vmatprep.subr.bf16.mxu0 0
      %2733 = vmatpush2.bf16.msra.mxu0 0
      %2734 = vmatprep.subr.bf16.mxu0 0
      %2735 = vmatpush2.bf16.msra.mxu0 0
      %2736 = vmatprep.subr.bf16.mxu0 0
      %2737 = vmatpush2.bf16.msra.mxu0 0
      %2738 = vmatprep.subr.bf16.mxu0 0
      %2739 = vmatpush2.bf16.msra.mxu0 0
      %2740 = vmatprep.subr.bf16.mxu0 0
      %2741 = vmatpush2.bf16.msra.mxu0 0
      %2742 = vmatprep.mubr.bf16.mxu0 0
      %2743 = vmatmul.mubr.bf16.gmra.mxu0 %v2658
      %v2744 = vpop.f32.mrf.mxu0
      %v2745 = vadd.f32 0.0, %v2744
      %v2746 = vpop.f32.mrf.mxu0
      %v2747 = vpop.f32.mrf.mxu0
      %v2748 = vpop.f32.mrf.mxu0
      %2749 = vdwg.mxu0
      %v2750 = vadd.f32 %v2633, %v2704
      %v2751 = vadd.f32 %v2634, %v2706
      %v2752 = vadd.f32 %v2635, %v2745
      %s2753 = scalar_lea.vmem %s4, 20
      %v2754 = vld [vmem:[%s2753] sm:$0xf]
      %2755 = vrot.lane.b32.xlu0 %v2515, 93
      %v2756 = vpop.permute.xlu0 %2755
      %2757 = vrot.lane.b32.xlu0 %v2516, 93
      %v2758 = vpop.permute.xlu0 %2757
      %2759 = vrot.lane.b32.xlu0 %v2517, 93
      %v2760 = vpop.permute.xlu0 %2759
      %2761 = vrot.lane.b32.xlu0 %v2518, 93
      %v2762 = vpop.permute.xlu0 %2761
      %2763 = vrot.lane.b32.xlu0 %v2519, 93
      %v2764 = vpop.permute.xlu0 %2763
      %2765 = vrot.lane.b32.xlu0 %v2520, 93
      %v2766 = vpop.permute.xlu0 %2765
      %v2767 = vsel %vm1199, %v2756, %v2758
      %v2768 = vsel %vm1199, %v2758, %v2760
      %v2769 = vsel %vm1199, %v2762, %v2764
      %v2770 = vsel %vm1199, %v2764, %v2766
      %v2775 = vsel %vm2167, %v2754, 0
      %v2778 = vsel %vm412, %v2769, 0
      %v2781 = vsel %vm412, %v2770, 0
      %v2784 = vsel %vm412, %v2766, 0
      %2786 = vmatprep.subr.bf16.mxu0 0
      %2787 = vmatpush1.bf16.msra.mxu0 0
      %2788 = vmatprep.subr.bf16.mxu0 0
      %2789 = vmatpush1.bf16.msra.mxu0 0
      %2790 = vmatprep.subr.bf16.mxu0 0
      %2791 = vmatpush1.bf16.msra.mxu0 0
      %2792 = vmatprep.subr.bf16.mxu0 0
      %2793 = vmatpush1.bf16.msra.mxu0 0
      %2794 = vmatprep.subr.bf16.mxu0 0
      %2795 = vmatpush1.bf16.msra.mxu0 0
      %2796 = vmatprep.subr.bf16.mxu0 0
      %2797 = vmatpush1.bf16.msra.mxu0 0
      %2798 = vmatprep.subr.bf16.mxu0 %v2781
      %2799 = vmatpush1.bf16.msra.mxu0 %v2778
      %2800 = vmatprep.subr.bf16.mxu0 %v2768
      %2801 = vmatpush1.bf16.msra.mxu0 %v2767
      %2802 = vmatprep.subr.bf16.mxu0 0
      %2803 = vmatpush2.bf16.msra.mxu0 0
      %2804 = vmatprep.subr.bf16.mxu0 0
      %2805 = vmatpush2.bf16.msra.mxu0 0
      %2806 = vmatprep.subr.bf16.mxu0 0
      %2807 = vmatpush2.bf16.msra.mxu0 0
      %2808 = vmatprep.subr.bf16.mxu0 0
      %2809 = vmatpush2.bf16.msra.mxu0 0
      %2810 = vmatprep.subr.bf16.mxu0 0
      %2811 = vmatpush2.bf16.msra.mxu0 0
      %2812 = vmatprep.subr.bf16.mxu0 0
      %2813 = vmatpush2.bf16.msra.mxu0 0
      %2814 = vmatprep.subr.bf16.mxu0 0
      %2815 = vmatpush2.bf16.msra.mxu0 0
      %2816 = vmatprep.subr.bf16.mxu0 0
      %2817 = vmatpush2.bf16.msra.mxu0 0
      %2818 = vmatprep.mubr.bf16.mxu0 0
      %2819 = vmatmul.mubr.bf16.gmra.mxu0 %v2775
      %v2820 = vpop.f32.mrf.mxu0
      %v2821 = vadd.f32 0.0, %v2820
      %v2822 = vpop.f32.mrf.mxu0
      %v2823 = vadd.f32 0.0, %v2822
      %v2824 = vpop.f32.mrf.mxu0
      %v2825 = vpop.f32.mrf.mxu0
      %2826 = vdwg.mxu0
      %2827 = vmatprep.subr.bf16.mxu0 0
      %2828 = vmatpush1.bf16.msra.mxu0 0
      %2829 = vmatprep.subr.bf16.mxu0 0
      %2830 = vmatpush1.bf16.msra.mxu0 0
      %2831 = vmatprep.subr.bf16.mxu0 0
      %2832 = vmatpush1.bf16.msra.mxu0 0
      %2833 = vmatprep.subr.bf16.mxu0 0
      %2834 = vmatpush1.bf16.msra.mxu0 0
      %2835 = vmatprep.subr.bf16.mxu0 0
      %2836 = vmatpush1.bf16.msra.mxu0 0
      %2837 = vmatprep.subr.bf16.mxu0 0
      %2838 = vmatpush1.bf16.msra.mxu0 0
      %2839 = vmatprep.subr.bf16.mxu0 0
      %2840 = vmatpush1.bf16.msra.mxu0 %v2784
      %2841 = vmatprep.subr.bf16.mxu0 0
      %2842 = vmatpush1.bf16.msra.mxu0 %v2760
      %2843 = vmatprep.subr.bf16.mxu0 0
      %2844 = vmatpush2.bf16.msra.mxu0 0
      %2845 = vmatprep.subr.bf16.mxu0 0
      %2846 = vmatpush2.bf16.msra.mxu0 0
      %2847 = vmatprep.subr.bf16.mxu0 0
      %2848 = vmatpush2.bf16.msra.mxu0 0
      %2849 = vmatprep.subr.bf16.mxu0 0
      %2850 = vmatpush2.bf16.msra.mxu0 0
      %2851 = vmatprep.subr.bf16.mxu0 0
      %2852 = vmatpush2.bf16.msra.mxu0 0
      %2853 = vmatprep.subr.bf16.mxu0 0
      %2854 = vmatpush2.bf16.msra.mxu0 0
      %2855 = vmatprep.subr.bf16.mxu0 0
      %2856 = vmatpush2.bf16.msra.mxu0 0
      %2857 = vmatprep.subr.bf16.mxu0 0
      %2858 = vmatpush2.bf16.msra.mxu0 0
      %2859 = vmatprep.mubr.bf16.mxu0 0
      %2860 = vmatmul.mubr.bf16.gmra.mxu0 %v2775
      %v2861 = vpop.f32.mrf.mxu0
      %v2862 = vadd.f32 0.0, %v2861
      %v2863 = vpop.f32.mrf.mxu0
      %v2864 = vpop.f32.mrf.mxu0
      %v2865 = vpop.f32.mrf.mxu0
      %2866 = vdwg.mxu0
      %v2867 = vadd.f32 %v2750, %v2821
      %v2868 = vadd.f32 %v2751, %v2823
      %v2869 = vadd.f32 %v2752, %v2862
      %v2870 = vmul.f32 %v2867, %v549
      %v2871 = vmul.f32 %v2868, %v553
      %v2872 = vmul.f32 %v2869, %v557
      %v2873 = vadd.f32 %v2870, %v2871
      %v2874 = vsel %vm565, %v2872, 0.0
      %v2875 = vadd.f32 %v2873, %v2874
      %2876 = vadd.xlane.f32.xlu0 %v2875
      %v2877 = vpop.xlane.xlu0 %2876
      %v2878 = vmul.f32 %v2877, 0.00390625
      %v2879 = vsub.f32 %v2867, %v2878
      %v2880 = vsub.f32 %v2868, %v2878
      %v2881 = vsub.f32 %v2869, %v2878
      %v2882 = vmul.f32 %v2879, %v2879
      %v2883 = vmul.f32 %v2880, %v2880
      %v2884 = vmul.f32 %v2881, %v2881
      %v2885 = vmul.f32 %v2882, %v549
      %v2886 = vmul.f32 %v2883, %v553
      %v2887 = vmul.f32 %v2884, %v557
      %v2888 = vadd.f32 %v2885, %v2886
      %v2889 = vsel %vm565, %v2887, 0.0
      %v2890 = vadd.f32 %v2888, %v2889
      %2891 = vadd.xlane.f32.xlu0 %v2890
      %v2892 = vpop.xlane.xlu0 %2891
      %v2893 = vmul.f32 %v2892, 0.00390625
      %s2894 = scalar_lea.vmem %s9, 24
      %v2895 = vld [vmem:[%s2894] sm:$0xff]
      %v2896 = vadd.f32 %v2893, 1e-05
      %v2897 = vrsqrt.pop %v2896
      %v2898 = vmul.f32 %v2895, %v2897
      %2900 = vset.pattern.permute.xlu0 0
      %2901 = vperm.xlu0 %2900, %v2898
      %v2902 = vpop.permute.xlu0 %2901
      %v2904 = vmul.f32 %v2879, %v2902
      %v2905 = vmul.f32 %v2880, %v2902
      %v2906 = vmul.f32 %v2881, %v2902
      %s2907 = scalar_lea.vmem %s10, 24
      %v2908 = vld [vmem:[%s2907] sm:$0xff]
      %2910 = vset.pattern.permute.xlu0 0
      %2911 = vperm.xlu0 %2910, %v2908
      %v2912 = vpop.permute.xlu0 %2911
      %v2914 = vadd.f32 %v2904, %v2912
      %v2915 = vadd.f32 %v2905, %v2912
      %v2916 = vadd.f32 %v2906, %v2912
      %vm2917 = vcmp.ge.f32.partialorder %v2914, 0.0
      %vm2918 = vcmp.ge.f32.partialorder %v2915, 0.0
      %vm2919 = vcmp.ge.f32.partialorder %v2916, 0.0
      %s2920 = scalar_lea.vmem %s11, 24
      %v2921 = vld [vmem:[%s2920] sm:$0xff]
      %2923 = vset.pattern.permute.xlu0 0
      %2924 = vperm.xlu0 %2923, %v2921
      %v2925 = vpop.permute.xlu0 %2924
      %v2927 = vmul.f32 %v2925, %v2914
      %v2928 = vmul.f32 %v2925, %v2915
      %v2929 = vmul.f32 %v2925, %v2916
      %v2930 = vsel %vm2917, %v2914, %v2927
      %v2931 = vsel %vm2918, %v2915, %v2928
      %v2932 = vsel %vm2919, %v2916, %v2929
      %v2933 = vmul.f32 %v2930, %v549
      %v2934 = vmul.f32 %v2931, %v553
      %v2935 = vmul.f32 %v2932, %v557
      %v2936 = vpack.c.bf16 %v2933, %v2933
      %v2937 = vpack.c.bf16 %v2934, %v2934
      %v2938 = vpack.c.bf16 %v2935, %v2935
      %v2942 = vunpack.c.l.b16 %v2936
      %v2943 = vunpack.c.l.b16 %v2937
      %v2944 = vunpack.c.l.b16 %v2938
      %v2945 = vpack.c.b16 %v2943, %v2942
      %v2946 = vpack.c.b16 %v2944, %v2944
      %2947 = vrot.lane.b32.xlu0 %v2945, 34
      %v2948 = vpop.permute.xlu0 %2947
      %2949 = vrot.lane.b32.xlu0 %v2946, 34
      %v2950 = vpop.permute.xlu0 %2949
      %v2951 = vrot.slane %v2948, 4
      %v2952 = vsel %vm641, %v2951, %v2948
      %v2953 = vsel %vm641, %v2951, %v2950
      %2956 = vst.msk [vmem:[#allocation2 + $0x34] sm:$0xff] %vm648, %v2952
      %2957 = vst.msk [vmem:[#allocation2 + $0x3c] sm:$0xf] %vm650, %v2953
      %v2958 = vld [vmem:[#allocation2] sm:$0xff]
      %v2959 = vld [vmem:[#allocation2 + $0x8] sm:$0xf]
      %v2960 = vld [vmem:[#allocation2 + $0x10] sm:$0xff]
      %v2961 = vld [vmem:[#allocation2 + $0x18] sm:$0xf]
      %v2962 = vld [vmem:[#allocation2 + $0x20] sm:$0xff]
      %v2963 = vld [vmem:[#allocation2 + $0x28] sm:$0xf]
      %v2964 = vld [vmem:[#allocation2 + $0x30] sm:$0xff]
      %v2965 = vld [vmem:[#allocation2 + $0x38] sm:$0xf]
      %v2966 = vld [vmem:[%s5] sm:$0xf]
      %s2967 = scalar_lea.vmem %s5, 4
      %v2968 = vld [vmem:[%s2967] sm:$0xf]
      %v2977 = vunpack.c.l.b16 %v2958
      %v2978 = vunpack.c.h.b16 %v2958
      %v2979 = vunpack.c.l.b16 %v2959
      %v2980 = vunpack.c.l.b16 %v2960
      %v2981 = vunpack.c.h.b16 %v2960
      %v2982 = vunpack.c.l.b16 %v2961
      %v2983 = vunpack.c.l.b16 %v2962
      %v2984 = vunpack.c.h.b16 %v2962
      %v2985 = vunpack.c.l.b16 %v2963
      %v2986 = vunpack.c.l.b16 %v2964
      %v2987 = vunpack.c.h.b16 %v2964
      %v2988 = vunpack.c.l.b16 %v2965
      %v2989 = vpack.c.b16 %v2980, %v2977
      %v2990 = vpack.c.b16 %v2981, %v2978
      %v2991 = vpack.c.b16 %v2982, %v2979
      %v2992 = vpack.c.b16 %v2986, %v2983
      %v2993 = vpack.c.b16 %v2987, %v2984
      %v2994 = vpack.c.b16 %v2988, %v2985
      %2995 = vrot.lane.b32.xlu0 %v2989, 110
      %v2996 = vpop.permute.xlu0 %2995
      %2997 = vrot.lane.b32.xlu0 %v2990, 110
      %v2998 = vpop.permute.xlu0 %2997
      %2999 = vrot.lane.b32.xlu0 %v2991, 110
      %v3000 = vpop.permute.xlu0 %2999
      %3001 = vrot.lane.b32.xlu0 %v2992, 110
      %v3002 = vpop.permute.xlu0 %3001
      %3003 = vrot.lane.b32.xlu0 %v2993, 110
      %v3004 = vpop.permute.xlu0 %3003
      %3005 = vrot.lane.b32.xlu0 %v2994, 110
      %v3006 = vpop.permute.xlu0 %3005
      %vm3007 = vcmask 900096
      %v3008 = vsel %vm3007, %v2996, %v2998
      %v3009 = vsel %vm3007, %v2998, %v3000
      %v3010 = vsel %vm3007, %v3002, %v3004
      %v3011 = vsel %vm3007, %v3004, %v3006
      %v3019 = vsel %vm565, %v2968, 0
      %3021 = vmatprep.subr.bf16.mxu0 0
      %3022 = vmatpush1.bf16.msra.mxu0 0
      %3023 = vmatprep.subr.bf16.mxu0 0
      %3024 = vmatpush1.bf16.msra.mxu0 0
      %3025 = vmatprep.subr.bf16.mxu0 0
      %3026 = vmatpush1.bf16.msra.mxu0 0
      %3027 = vmatprep.subr.bf16.mxu0 0
      %3028 = vmatpush1.bf16.msra.mxu0 0
      %3029 = vmatprep.subr.bf16.mxu0 0
      %3030 = vmatpush1.bf16.msra.mxu0 0
      %3031 = vmatprep.subr.bf16.mxu0 0
      %3032 = vmatpush1.bf16.msra.mxu0 0
      %3033 = vmatprep.subr.bf16.mxu0 %v3011
      %3034 = vmatpush1.bf16.msra.mxu0 %v3010
      %3035 = vmatprep.subr.bf16.mxu0 %v3009
      %3036 = vmatpush1.bf16.msra.mxu0 %v3008
      %3037 = vmatprep.subr.bf16.mxu0 0
      %3038 = vmatpush2.bf16.msra.mxu0 0
      %3039 = vmatprep.subr.bf16.mxu0 0
      %3040 = vmatpush2.bf16.msra.mxu0 0
      %3041 = vmatprep.subr.bf16.mxu0 0
      %3042 = vmatpush2.bf16.msra.mxu0 0
      %3043 = vmatprep.subr.bf16.mxu0 0
      %3044 = vmatpush2.bf16.msra.mxu0 0
      %3045 = vmatprep.subr.bf16.mxu0 0
      %3046 = vmatpush2.bf16.msra.mxu0 0
      %3047 = vmatprep.subr.bf16.mxu0 0
      %3048 = vmatpush2.bf16.msra.mxu0 0
      %3049 = vmatprep.subr.bf16.mxu0 0
      %3050 = vmatpush2.bf16.msra.mxu0 0
      %3051 = vmatprep.subr.bf16.mxu0 0
      %3052 = vmatpush2.bf16.msra.mxu0 0
      %3053 = vmatprep.mubr.bf16.mxu0 0
      %3054 = vmatmul.mubr.bf16.gmra.mxu0 %v3019
      %v3055 = vpop.f32.mrf.mxu0
      %v3056 = vadd.f32 0.0, %v3055
      %v3057 = vpop.f32.mrf.mxu0
      %v3058 = vadd.f32 0.0, %v3057
      %v3059 = vpop.f32.mrf.mxu0
      %v3060 = vpop.f32.mrf.mxu0
      %3061 = vdwg.mxu0
      %3062 = vmatprep.subr.bf16.mxu0 0
      %3063 = vmatpush1.bf16.msra.mxu0 0
      %3064 = vmatprep.subr.bf16.mxu0 0
      %3065 = vmatpush1.bf16.msra.mxu0 0
      %3066 = vmatprep.subr.bf16.mxu0 0
      %3067 = vmatpush1.bf16.msra.mxu0 0
      %3068 = vmatprep.subr.bf16.mxu0 0
      %3069 = vmatpush1.bf16.msra.mxu0 0
      %3070 = vmatprep.subr.bf16.mxu0 0
      %3071 = vmatpush1.bf16.msra.mxu0 0
      %3072 = vmatprep.subr.bf16.mxu0 0
      %3073 = vmatpush1.bf16.msra.mxu0 0
      %3074 = vmatprep.subr.bf16.mxu0 0
      %3075 = vmatpush1.bf16.msra.mxu0 %v3006
      %3076 = vmatprep.subr.bf16.mxu0 0
      %3077 = vmatpush1.bf16.msra.mxu0 %v3000
      %3078 = vmatprep.subr.bf16.mxu0 0
      %3079 = vmatpush2.bf16.msra.mxu0 0
      %3080 = vmatprep.subr.bf16.mxu0 0
      %3081 = vmatpush2.bf16.msra.mxu0 0
      %3082 = vmatprep.subr.bf16.mxu0 0
      %3083 = vmatpush2.bf16.msra.mxu0 0
      %3084 = vmatprep.subr.bf16.mxu0 0
      %3085 = vmatpush2.bf16.msra.mxu0 0
      %3086 = vmatprep.subr.bf16.mxu0 0
      %3087 = vmatpush2.bf16.msra.mxu0 0
      %3088 = vmatprep.subr.bf16.mxu0 0
      %3089 = vmatpush2.bf16.msra.mxu0 0
      %3090 = vmatprep.subr.bf16.mxu0 0
      %3091 = vmatpush2.bf16.msra.mxu0 0
      %3092 = vmatprep.subr.bf16.mxu0 0
      %3093 = vmatpush2.bf16.msra.mxu0 0
      %3094 = vmatprep.mubr.bf16.mxu0 0
      %3095 = vmatmul.mubr.bf16.gmra.mxu0 %v3019
      %v3096 = vpop.f32.mrf.mxu0
      %v3097 = vadd.f32 0.0, %v3096
      %v3098 = vpop.f32.mrf.mxu0
      %v3099 = vpop.f32.mrf.mxu0
      %v3100 = vpop.f32.mrf.mxu0
      %3101 = vdwg.mxu0
      %3102 = vrot.lane.b32.xlu0 %v2989, 111
      %v3103 = vpop.permute.xlu0 %3102
      %3104 = vrot.lane.b32.xlu0 %v2990, 111
      %v3105 = vpop.permute.xlu0 %3104
      %3106 = vrot.lane.b32.xlu0 %v2991, 111
      %v3107 = vpop.permute.xlu0 %3106
      %3108 = vrot.lane.b32.xlu0 %v2992, 111
      %v3109 = vpop.permute.xlu0 %3108
      %3110 = vrot.lane.b32.xlu0 %v2993, 111
      %v3111 = vpop.permute.xlu0 %3110
      %3112 = vrot.lane.b32.xlu0 %v2994, 111
      %v3113 = vpop.permute.xlu0 %3112
      %v3114 = vsel %vm878, %v3103, %v3105
      %v3115 = vsel %vm878, %v3105, %v3107
      %v3116 = vsel %vm878, %v3109, %v3111
      %v3117 = vsel %vm878, %v3111, %v3113
      %v3125 = vsel %vm565, %v2966, 0
      %3127 = vmatprep.subr.bf16.mxu0 0
      %3128 = vmatpush1.bf16.msra.mxu0 0
      %3129 = vmatprep.subr.bf16.mxu0 0
      %3130 = vmatpush1.bf16.msra.mxu0 0
      %3131 = vmatprep.subr.bf16.mxu0 0
      %3132 = vmatpush1.bf16.msra.mxu0 0
      %3133 = vmatprep.subr.bf16.mxu0 0
      %3134 = vmatpush1.bf16.msra.mxu0 0
      %3135 = vmatprep.subr.bf16.mxu0 0
      %3136 = vmatpush1.bf16.msra.mxu0 0
      %3137 = vmatprep.subr.bf16.mxu0 0
      %3138 = vmatpush1.bf16.msra.mxu0 0
      %3139 = vmatprep.subr.bf16.mxu0 %v3117
      %3140 = vmatpush1.bf16.msra.mxu0 %v3116
      %3141 = vmatprep.subr.bf16.mxu0 %v3115
      %3142 = vmatpush1.bf16.msra.mxu0 %v3114
      %3143 = vmatprep.subr.bf16.mxu0 0
      %3144 = vmatpush2.bf16.msra.mxu0 0
      %3145 = vmatprep.subr.bf16.mxu0 0
      %3146 = vmatpush2.bf16.msra.mxu0 0
      %3147 = vmatprep.subr.bf16.mxu0 0
      %3148 = vmatpush2.bf16.msra.mxu0 0
      %3149 = vmatprep.subr.bf16.mxu0 0
      %3150 = vmatpush2.bf16.msra.mxu0 0
      %3151 = vmatprep.subr.bf16.mxu0 0
      %3152 = vmatpush2.bf16.msra.mxu0 0
      %3153 = vmatprep.subr.bf16.mxu0 0
      %3154 = vmatpush2.bf16.msra.mxu0 0
      %3155 = vmatprep.subr.bf16.mxu0 0
      %3156 = vmatpush2.bf16.msra.mxu0 0
      %3157 = vmatprep.subr.bf16.mxu0 0
      %3158 = vmatpush2.bf16.msra.mxu0 0
      %3159 = vmatprep.mubr.bf16.mxu0 0
      %3160 = vmatmul.mubr.bf16.gmra.mxu0 %v3125
      %v3161 = vpop.f32.mrf.mxu0
      %v3162 = vadd.f32 %v3056, %v3161
      %v3163 = vpop.f32.mrf.mxu0
      %v3164 = vadd.f32 %v3058, %v3163
      %v3165 = vpop.f32.mrf.mxu0
      %v3166 = vpop.f32.mrf.mxu0
      %3167 = vdwg.mxu0
      %3168 = vmatprep.subr.bf16.mxu0 0
      %3169 = vmatpush1.bf16.msra.mxu0 0
      %3170 = vmatprep.subr.bf16.mxu0 0
      %3171 = vmatpush1.bf16.msra.mxu0 0
      %3172 = vmatprep.subr.bf16.mxu0 0
      %3173 = vmatpush1.bf16.msra.mxu0 0
      %3174 = vmatprep.subr.bf16.mxu0 0
      %3175 = vmatpush1.bf16.msra.mxu0 0
      %3176 = vmatprep.subr.bf16.mxu0 0
      %3177 = vmatpush1.bf16.msra.mxu0 0
      %3178 = vmatprep.subr.bf16.mxu0 0
      %3179 = vmatpush1.bf16.msra.mxu0 0
      %3180 = vmatprep.subr.bf16.mxu0 0
      %3181 = vmatpush1.bf16.msra.mxu0 %v3113
      %3182 = vmatprep.subr.bf16.mxu0 0
      %3183 = vmatpush1.bf16.msra.mxu0 %v3107
      %3184 = vmatprep.subr.bf16.mxu0 0
      %3185 = vmatpush2.bf16.msra.mxu0 0
      %3186 = vmatprep.subr.bf16.mxu0 0
      %3187 = vmatpush2.bf16.msra.mxu0 0
      %3188 = vmatprep.subr.bf16.mxu0 0
      %3189 = vmatpush2.bf16.msra.mxu0 0
      %3190 = vmatprep.subr.bf16.mxu0 0
      %3191 = vmatpush2.bf16.msra.mxu0 0
      %3192 = vmatprep.subr.bf16.mxu0 0
      %3193 = vmatpush2.bf16.msra.mxu0 0
      %3194 = vmatprep.subr.bf16.mxu0 0
      %3195 = vmatpush2.bf16.msra.mxu0 0
      %3196 = vmatprep.subr.bf16.mxu0 0
      %3197 = vmatpush2.bf16.msra.mxu0 0
      %3198 = vmatprep.subr.bf16.mxu0 0
      %3199 = vmatpush2.bf16.msra.mxu0 0
      %3200 = vmatprep.mubr.bf16.mxu0 0
      %3201 = vmatmul.mubr.bf16.gmra.mxu0 %v3125
      %v3202 = vpop.f32.mrf.mxu0
      %v3203 = vadd.f32 %v3097, %v3202
      %v3204 = vpop.f32.mrf.mxu0
      %v3205 = vpop.f32.mrf.mxu0
      %v3206 = vpop.f32.mrf.mxu0
      %3207 = vdwg.mxu0
      %s3208 = scalar_lea.vmem %s5, 8
      %v3209 = vld [vmem:[%s3208] sm:$0xf]
      %3210 = vrot.lane.b32.xlu0 %v2989, 109
      %v3211 = vpop.permute.xlu0 %3210
      %3212 = vrot.lane.b32.xlu0 %v2990, 109
      %v3213 = vpop.permute.xlu0 %3212
      %3214 = vrot.lane.b32.xlu0 %v2991, 109
      %v3215 = vpop.permute.xlu0 %3214
      %3216 = vrot.lane.b32.xlu0 %v2992, 109
      %v3217 = vpop.permute.xlu0 %3216
      %3218 = vrot.lane.b32.xlu0 %v2993, 109
      %v3219 = vpop.permute.xlu0 %3218
      %3220 = vrot.lane.b32.xlu0 %v2994, 109
      %v3221 = vpop.permute.xlu0 %3220
      %vm3222 = vcmask 891904
      %v3223 = vsel %vm3222, %v3211, %v3213
      %v3224 = vsel %vm3222, %v3213, %v3215
      %v3225 = vsel %vm3222, %v3217, %v3219
      %v3226 = vsel %vm3222, %v3219, %v3221
      %v3234 = vsel %vm565, %v3209, 0
      %3236 = vmatprep.subr.bf16.mxu0 0
      %3237 = vmatpush1.bf16.msra.mxu0 0
      %3238 = vmatprep.subr.bf16.mxu0 0
      %3239 = vmatpush1.bf16.msra.mxu0 0
      %3240 = vmatprep.subr.bf16.mxu0 0
      %3241 = vmatpush1.bf16.msra.mxu0 0
      %3242 = vmatprep.subr.bf16.mxu0 0
      %3243 = vmatpush1.bf16.msra.mxu0 0
      %3244 = vmatprep.subr.bf16.mxu0 0
      %3245 = vmatpush1.bf16.msra.mxu0 0
      %3246 = vmatprep.subr.bf16.mxu0 0
      %3247 = vmatpush1.bf16.msra.mxu0 0
      %3248 = vmatprep.subr.bf16.mxu0 %v3226
      %3249 = vmatpush1.bf16.msra.mxu0 %v3225
      %3250 = vmatprep.subr.bf16.mxu0 %v3224
      %3251 = vmatpush1.bf16.msra.mxu0 %v3223
      %3252 = vmatprep.subr.bf16.mxu0 0
      %3253 = vmatpush2.bf16.msra.mxu0 0
      %3254 = vmatprep.subr.bf16.mxu0 0
      %3255 = vmatpush2.bf16.msra.mxu0 0
      %3256 = vmatprep.subr.bf16.mxu0 0
      %3257 = vmatpush2.bf16.msra.mxu0 0
      %3258 = vmatprep.subr.bf16.mxu0 0
      %3259 = vmatpush2.bf16.msra.mxu0 0
      %3260 = vmatprep.subr.bf16.mxu0 0
      %3261 = vmatpush2.bf16.msra.mxu0 0
      %3262 = vmatprep.subr.bf16.mxu0 0
      %3263 = vmatpush2.bf16.msra.mxu0 0
      %3264 = vmatprep.subr.bf16.mxu0 0
      %3265 = vmatpush2.bf16.msra.mxu0 0
      %3266 = vmatprep.subr.bf16.mxu0 0
      %3267 = vmatpush2.bf16.msra.mxu0 0
      %3268 = vmatprep.mubr.bf16.mxu0 0
      %3269 = vmatmul.mubr.bf16.gmra.mxu0 %v3234
      %v3270 = vpop.f32.mrf.mxu0
      %v3271 = vadd.f32 0.0, %v3270
      %v3272 = vpop.f32.mrf.mxu0
      %v3273 = vadd.f32 0.0, %v3272
      %v3274 = vpop.f32.mrf.mxu0
      %v3275 = vpop.f32.mrf.mxu0
      %3276 = vdwg.mxu0
      %3277 = vmatprep.subr.bf16.mxu0 0
      %3278 = vmatpush1.bf16.msra.mxu0 0
      %3279 = vmatprep.subr.bf16.mxu0 0
      %3280 = vmatpush1.bf16.msra.mxu0 0
      %3281 = vmatprep.subr.bf16.mxu0 0
      %3282 = vmatpush1.bf16.msra.mxu0 0
      %3283 = vmatprep.subr.bf16.mxu0 0
      %3284 = vmatpush1.bf16.msra.mxu0 0
      %3285 = vmatprep.subr.bf16.mxu0 0
      %3286 = vmatpush1.bf16.msra.mxu0 0
      %3287 = vmatprep.subr.bf16.mxu0 0
      %3288 = vmatpush1.bf16.msra.mxu0 0
      %3289 = vmatprep.subr.bf16.mxu0 0
      %3290 = vmatpush1.bf16.msra.mxu0 %v3221
      %3291 = vmatprep.subr.bf16.mxu0 0
      %3292 = vmatpush1.bf16.msra.mxu0 %v3215
      %3293 = vmatprep.subr.bf16.mxu0 0
      %3294 = vmatpush2.bf16.msra.mxu0 0
      %3295 = vmatprep.subr.bf16.mxu0 0
      %3296 = vmatpush2.bf16.msra.mxu0 0
      %3297 = vmatprep.subr.bf16.mxu0 0
      %3298 = vmatpush2.bf16.msra.mxu0 0
      %3299 = vmatprep.subr.bf16.mxu0 0
      %3300 = vmatpush2.bf16.msra.mxu0 0
      %3301 = vmatprep.subr.bf16.mxu0 0
      %3302 = vmatpush2.bf16.msra.mxu0 0
      %3303 = vmatprep.subr.bf16.mxu0 0
      %3304 = vmatpush2.bf16.msra.mxu0 0
      %3305 = vmatprep.subr.bf16.mxu0 0
      %3306 = vmatpush2.bf16.msra.mxu0 0
      %3307 = vmatprep.subr.bf16.mxu0 0
      %3308 = vmatpush2.bf16.msra.mxu0 0
      %3309 = vmatprep.mubr.bf16.mxu0 0
      %3310 = vmatmul.mubr.bf16.gmra.mxu0 %v3234
      %v3311 = vpop.f32.mrf.mxu0
      %v3312 = vadd.f32 0.0, %v3311
      %v3313 = vpop.f32.mrf.mxu0
      %v3314 = vpop.f32.mrf.mxu0
      %v3315 = vpop.f32.mrf.mxu0
      %3316 = vdwg.mxu0
      %v3317 = vadd.f32 %v3162, %v3271
      %v3318 = vadd.f32 %v3164, %v3273
      %v3319 = vadd.f32 %v3203, %v3312
      %v3320 = vld [vmem:[#allocation2 + $0x4] sm:$0xff]
      %v3321 = vld [vmem:[#allocation2 + $0xc] sm:$0xf]
      %v3322 = vld [vmem:[#allocation2 + $0x14] sm:$0xff]
      %v3323 = vld [vmem:[#allocation2 + $0x1c] sm:$0xf]
      %v3324 = vld [vmem:[#allocation2 + $0x24] sm:$0xff]
      %v3325 = vld [vmem:[#allocation2 + $0x2c] sm:$0xf]
      %v3326 = vld [vmem:[#allocation2 + $0x34] sm:$0xff]
      %v3327 = vld [vmem:[#allocation2 + $0x3c] sm:$0xf]
      %s3328 = scalar_lea.vmem %s5, 12
      %v3329 = vld [vmem:[%s3328] sm:$0xf]
      %v3338 = vunpack.c.l.b16 %v3320
      %v3339 = vunpack.c.h.b16 %v3320
      %v3340 = vunpack.c.l.b16 %v3321
      %v3341 = vunpack.c.l.b16 %v3322
      %v3342 = vunpack.c.h.b16 %v3322
      %v3343 = vunpack.c.l.b16 %v3323
      %v3344 = vunpack.c.l.b16 %v3324
      %v3345 = vunpack.c.h.b16 %v3324
      %v3346 = vunpack.c.l.b16 %v3325
      %v3347 = vunpack.c.l.b16 %v3326
      %v3348 = vunpack.c.h.b16 %v3326
      %v3349 = vunpack.c.l.b16 %v3327
      %v3350 = vpack.c.b16 %v3341, %v3338
      %v3351 = vpack.c.b16 %v3342, %v3339
      %v3352 = vpack.c.b16 %v3343, %v3340
      %v3353 = vpack.c.b16 %v3347, %v3344
      %v3354 = vpack.c.b16 %v3348, %v3345
      %v3355 = vpack.c.b16 %v3349, %v3346
      %3356 = vrot.lane.b32.xlu0 %v3350, 95
      %v3357 = vpop.permute.xlu0 %3356
      %3358 = vrot.lane.b32.xlu0 %v3351, 95
      %v3359 = vpop.permute.xlu0 %3358
      %3360 = vrot.lane.b32.xlu0 %v3352, 95
      %v3361 = vpop.permute.xlu0 %3360
      %3362 = vrot.lane.b32.xlu0 %v3353, 95
      %v3363 = vpop.permute.xlu0 %3362
      %3364 = vrot.lane.b32.xlu0 %v3354, 95
      %v3365 = vpop.permute.xlu0 %3364
      %3366 = vrot.lane.b32.xlu0 %v3355, 95
      %v3367 = vpop.permute.xlu0 %3366
      %v3368 = vsel %vm985, %v3357, %v3359
      %v3369 = vsel %vm985, %v3359, %v3361
      %v3370 = vsel %vm985, %v3363, %v3365
      %v3371 = vsel %vm985, %v3365, %v3367
      %v3379 = vsel %vm565, %v3329, 0
      %3381 = vmatprep.subr.bf16.mxu0 0
      %3382 = vmatpush1.bf16.msra.mxu0 0
      %3383 = vmatprep.subr.bf16.mxu0 0
      %3384 = vmatpush1.bf16.msra.mxu0 0
      %3385 = vmatprep.subr.bf16.mxu0 0
      %3386 = vmatpush1.bf16.msra.mxu0 0
      %3387 = vmatprep.subr.bf16.mxu0 0
      %3388 = vmatpush1.bf16.msra.mxu0 0
      %3389 = vmatprep.subr.bf16.mxu0 0
      %3390 = vmatpush1.bf16.msra.mxu0 0
      %3391 = vmatprep.subr.bf16.mxu0 0
      %3392 = vmatpush1.bf16.msra.mxu0 0
      %3393 = vmatprep.subr.bf16.mxu0 %v3371
      %3394 = vmatpush1.bf16.msra.mxu0 %v3370
      %3395 = vmatprep.subr.bf16.mxu0 %v3369
      %3396 = vmatpush1.bf16.msra.mxu0 %v3368
      %3397 = vmatprep.subr.bf16.mxu0 0
      %3398 = vmatpush2.bf16.msra.mxu0 0
      %3399 = vmatprep.subr.bf16.mxu0 0
      %3400 = vmatpush2.bf16.msra.mxu0 0
      %3401 = vmatprep.subr.bf16.mxu0 0
      %3402 = vmatpush2.bf16.msra.mxu0 0
      %3403 = vmatprep.subr.bf16.mxu0 0
      %3404 = vmatpush2.bf16.msra.mxu0 0
      %3405 = vmatprep.subr.bf16.mxu0 0
      %3406 = vmatpush2.bf16.msra.mxu0 0
      %3407 = vmatprep.subr.bf16.mxu0 0
      %3408 = vmatpush2.bf16.msra.mxu0 0
      %3409 = vmatprep.subr.bf16.mxu0 0
      %3410 = vmatpush2.bf16.msra.mxu0 0
      %3411 = vmatprep.subr.bf16.mxu0 0
      %3412 = vmatpush2.bf16.msra.mxu0 0
      %3413 = vmatprep.mubr.bf16.mxu0 0
      %3414 = vmatmul.mubr.bf16.gmra.mxu0 %v3379
      %v3415 = vpop.f32.mrf.mxu0
      %v3416 = vadd.f32 0.0, %v3415
      %v3417 = vpop.f32.mrf.mxu0
      %v3418 = vadd.f32 0.0, %v3417
      %v3419 = vpop.f32.mrf.mxu0
      %v3420 = vpop.f32.mrf.mxu0
      %3421 = vdwg.mxu0
      %3422 = vmatprep.subr.bf16.mxu0 0
      %3423 = vmatpush1.bf16.msra.mxu0 0
      %3424 = vmatprep.subr.bf16.mxu0 0
      %3425 = vmatpush1.bf16.msra.mxu0 0
      %3426 = vmatprep.subr.bf16.mxu0 0
      %3427 = vmatpush1.bf16.msra.mxu0 0
      %3428 = vmatprep.subr.bf16.mxu0 0
      %3429 = vmatpush1.bf16.msra.mxu0 0
      %3430 = vmatprep.subr.bf16.mxu0 0
      %3431 = vmatpush1.bf16.msra.mxu0 0
      %3432 = vmatprep.subr.bf16.mxu0 0
      %3433 = vmatpush1.bf16.msra.mxu0 0
      %3434 = vmatprep.subr.bf16.mxu0 0
      %3435 = vmatpush1.bf16.msra.mxu0 %v3367
      %3436 = vmatprep.subr.bf16.mxu0 0
      %3437 = vmatpush1.bf16.msra.mxu0 %v3361
      %3438 = vmatprep.subr.bf16.mxu0 0
      %3439 = vmatpush2.bf16.msra.mxu0 0
      %3440 = vmatprep.subr.bf16.mxu0 0
      %3441 = vmatpush2.bf16.msra.mxu0 0
      %3442 = vmatprep.subr.bf16.mxu0 0
      %3443 = vmatpush2.bf16.msra.mxu0 0
      %3444 = vmatprep.subr.bf16.mxu0 0
      %3445 = vmatpush2.bf16.msra.mxu0 0
      %3446 = vmatprep.subr.bf16.mxu0 0
      %3447 = vmatpush2.bf16.msra.mxu0 0
      %3448 = vmatprep.subr.bf16.mxu0 0
      %3449 = vmatpush2.bf16.msra.mxu0 0
      %3450 = vmatprep.subr.bf16.mxu0 0
      %3451 = vmatpush2.bf16.msra.mxu0 0
      %3452 = vmatprep.subr.bf16.mxu0 0
      %3453 = vmatpush2.bf16.msra.mxu0 0
      %3454 = vmatprep.mubr.bf16.mxu0 0
      %3455 = vmatmul.mubr.bf16.gmra.mxu0 %v3379
      %v3456 = vpop.f32.mrf.mxu0
      %v3457 = vadd.f32 0.0, %v3456
      %v3458 = vpop.f32.mrf.mxu0
      %v3459 = vpop.f32.mrf.mxu0
      %v3460 = vpop.f32.mrf.mxu0
      %3461 = vdwg.mxu0
      %v3462 = vadd.f32 %v3317, %v3416
      %v3463 = vadd.f32 %v3318, %v3418
      %v3464 = vadd.f32 %v3319, %v3457
      %s3465 = scalar_lea.vmem %s5, 16
      %v3466 = vld [vmem:[%s3465] sm:$0xf]
      %3467 = vrot.lane.b32.xlu0 %v3350, 94
      %v3468 = vpop.permute.xlu0 %3467
      %3469 = vrot.lane.b32.xlu0 %v3351, 94
      %v3470 = vpop.permute.xlu0 %3469
      %3471 = vrot.lane.b32.xlu0 %v3352, 94
      %v3472 = vpop.permute.xlu0 %3471
      %3473 = vrot.lane.b32.xlu0 %v3353, 94
      %v3474 = vpop.permute.xlu0 %3473
      %3475 = vrot.lane.b32.xlu0 %v3354, 94
      %v3476 = vpop.permute.xlu0 %3475
      %3477 = vrot.lane.b32.xlu0 %v3355, 94
      %v3478 = vpop.permute.xlu0 %3477
      %v3479 = vsel %vm1092, %v3468, %v3470
      %v3480 = vsel %vm1092, %v3470, %v3472
      %v3481 = vsel %vm1092, %v3474, %v3476
      %v3482 = vsel %vm1092, %v3476, %v3478
      %v3490 = vsel %vm565, %v3466, 0
      %3492 = vmatprep.subr.bf16.mxu0 0
      %3493 = vmatpush1.bf16.msra.mxu0 0
      %3494 = vmatprep.subr.bf16.mxu0 0
      %3495 = vmatpush1.bf16.msra.mxu0 0
      %3496 = vmatprep.subr.bf16.mxu0 0
      %3497 = vmatpush1.bf16.msra.mxu0 0
      %3498 = vmatprep.subr.bf16.mxu0 0
      %3499 = vmatpush1.bf16.msra.mxu0 0
      %3500 = vmatprep.subr.bf16.mxu0 0
      %3501 = vmatpush1.bf16.msra.mxu0 0
      %3502 = vmatprep.subr.bf16.mxu0 0
      %3503 = vmatpush1.bf16.msra.mxu0 0
      %3504 = vmatprep.subr.bf16.mxu0 %v3482
      %3505 = vmatpush1.bf16.msra.mxu0 %v3481
      %3506 = vmatprep.subr.bf16.mxu0 %v3480
      %3507 = vmatpush1.bf16.msra.mxu0 %v3479
      %3508 = vmatprep.subr.bf16.mxu0 0
      %3509 = vmatpush2.bf16.msra.mxu0 0
      %3510 = vmatprep.subr.bf16.mxu0 0
      %3511 = vmatpush2.bf16.msra.mxu0 0
      %3512 = vmatprep.subr.bf16.mxu0 0
      %3513 = vmatpush2.bf16.msra.mxu0 0
      %3514 = vmatprep.subr.bf16.mxu0 0
      %3515 = vmatpush2.bf16.msra.mxu0 0
      %3516 = vmatprep.subr.bf16.mxu0 0
      %3517 = vmatpush2.bf16.msra.mxu0 0
      %3518 = vmatprep.subr.bf16.mxu0 0
      %3519 = vmatpush2.bf16.msra.mxu0 0
      %3520 = vmatprep.subr.bf16.mxu0 0
      %3521 = vmatpush2.bf16.msra.mxu0 0
      %3522 = vmatprep.subr.bf16.mxu0 0
      %3523 = vmatpush2.bf16.msra.mxu0 0
      %3524 = vmatprep.mubr.bf16.mxu0 0
      %3525 = vmatmul.mubr.bf16.gmra.mxu0 %v3490
      %v3526 = vpop.f32.mrf.mxu0
      %v3527 = vadd.f32 0.0, %v3526
      %v3528 = vpop.f32.mrf.mxu0
      %v3529 = vadd.f32 0.0, %v3528
      %v3530 = vpop.f32.mrf.mxu0
      %v3531 = vpop.f32.mrf.mxu0
      %3532 = vdwg.mxu0
      %3533 = vmatprep.subr.bf16.mxu0 0
      %3534 = vmatpush1.bf16.msra.mxu0 0
      %3535 = vmatprep.subr.bf16.mxu0 0
      %3536 = vmatpush1.bf16.msra.mxu0 0
      %3537 = vmatprep.subr.bf16.mxu0 0
      %3538 = vmatpush1.bf16.msra.mxu0 0
      %3539 = vmatprep.subr.bf16.mxu0 0
      %3540 = vmatpush1.bf16.msra.mxu0 0
      %3541 = vmatprep.subr.bf16.mxu0 0
      %3542 = vmatpush1.bf16.msra.mxu0 0
      %3543 = vmatprep.subr.bf16.mxu0 0
      %3544 = vmatpush1.bf16.msra.mxu0 0
      %3545 = vmatprep.subr.bf16.mxu0 0
      %3546 = vmatpush1.bf16.msra.mxu0 %v3478
      %3547 = vmatprep.subr.bf16.mxu0 0
      %3548 = vmatpush1.bf16.msra.mxu0 %v3472
      %3549 = vmatprep.subr.bf16.mxu0 0
      %3550 = vmatpush2.bf16.msra.mxu0 0
      %3551 = vmatprep.subr.bf16.mxu0 0
      %3552 = vmatpush2.bf16.msra.mxu0 0
      %3553 = vmatprep.subr.bf16.mxu0 0
      %3554 = vmatpush2.bf16.msra.mxu0 0
      %3555 = vmatprep.subr.bf16.mxu0 0
      %3556 = vmatpush2.bf16.msra.mxu0 0
      %3557 = vmatprep.subr.bf16.mxu0 0
      %3558 = vmatpush2.bf16.msra.mxu0 0
      %3559 = vmatprep.subr.bf16.mxu0 0
      %3560 = vmatpush2.bf16.msra.mxu0 0
      %3561 = vmatprep.subr.bf16.mxu0 0
      %3562 = vmatpush2.bf16.msra.mxu0 0
      %3563 = vmatprep.subr.bf16.mxu0 0
      %3564 = vmatpush2.bf16.msra.mxu0 0
      %3565 = vmatprep.mubr.bf16.mxu0 0
      %3566 = vmatmul.mubr.bf16.gmra.mxu0 %v3490
      %v3567 = vpop.f32.mrf.mxu0
      %v3568 = vadd.f32 0.0, %v3567
      %v3569 = vpop.f32.mrf.mxu0
      %v3570 = vpop.f32.mrf.mxu0
      %v3571 = vpop.f32.mrf.mxu0
      %3572 = vdwg.mxu0
      %v3573 = vadd.f32 %v3462, %v3527
      %v3574 = vadd.f32 %v3463, %v3529
      %v3575 = vadd.f32 %v3464, %v3568
      %s3576 = scalar_lea.vmem %s5, 20
      %v3577 = vld [vmem:[%s3576] sm:$0xf]
      %3578 = vrot.lane.b32.xlu0 %v3350, 93
      %v3579 = vpop.permute.xlu0 %3578
      %3580 = vrot.lane.b32.xlu0 %v3351, 93
      %v3581 = vpop.permute.xlu0 %3580
      %3582 = vrot.lane.b32.xlu0 %v3352, 93
      %v3583 = vpop.permute.xlu0 %3582
      %3584 = vrot.lane.b32.xlu0 %v3353, 93
      %v3585 = vpop.permute.xlu0 %3584
      %3586 = vrot.lane.b32.xlu0 %v3354, 93
      %v3587 = vpop.permute.xlu0 %3586
      %3588 = vrot.lane.b32.xlu0 %v3355, 93
      %v3589 = vpop.permute.xlu0 %3588
      %v3590 = vsel %vm1199, %v3579, %v3581
      %v3591 = vsel %vm1199, %v3581, %v3583
      %v3592 = vsel %vm1199, %v3585, %v3587
      %v3593 = vsel %vm1199, %v3587, %v3589
      %v3601 = vsel %vm565, %v3577, 0
      %3603 = vmatprep.subr.bf16.mxu0 0
      %3604 = vmatpush1.bf16.msra.mxu0 0
      %3605 = vmatprep.subr.bf16.mxu0 0
      %3606 = vmatpush1.bf16.msra.mxu0 0
      %3607 = vmatprep.subr.bf16.mxu0 0
      %3608 = vmatpush1.bf16.msra.mxu0 0
      %3609 = vmatprep.subr.bf16.mxu0 0
      %3610 = vmatpush1.bf16.msra.mxu0 0
      %3611 = vmatprep.subr.bf16.mxu0 0
      %3612 = vmatpush1.bf16.msra.mxu0 0
      %3613 = vmatprep.subr.bf16.mxu0 0
      %3614 = vmatpush1.bf16.msra.mxu0 0
      %3615 = vmatprep.subr.bf16.mxu0 %v3593
      %3616 = vmatpush1.bf16.msra.mxu0 %v3592
      %3617 = vmatprep.subr.bf16.mxu0 %v3591
      %3618 = vmatpush1.bf16.msra.mxu0 %v3590
      %3619 = vmatprep.subr.bf16.mxu0 0
      %3620 = vmatpush2.bf16.msra.mxu0 0
      %3621 = vmatprep.subr.bf16.mxu0 0
      %3622 = vmatpush2.bf16.msra.mxu0 0
      %3623 = vmatprep.subr.bf16.mxu0 0
      %3624 = vmatpush2.bf16.msra.mxu0 0
      %3625 = vmatprep.subr.bf16.mxu0 0
      %3626 = vmatpush2.bf16.msra.mxu0 0
      %3627 = vmatprep.subr.bf16.mxu0 0
      %3628 = vmatpush2.bf16.msra.mxu0 0
      %3629 = vmatprep.subr.bf16.mxu0 0
      %3630 = vmatpush2.bf16.msra.mxu0 0
      %3631 = vmatprep.subr.bf16.mxu0 0
      %3632 = vmatpush2.bf16.msra.mxu0 0
      %3633 = vmatprep.subr.bf16.mxu0 0
      %3634 = vmatpush2.bf16.msra.mxu0 0
      %3635 = vmatprep.mubr.bf16.mxu0 0
      %3636 = vmatmul.mubr.bf16.gmra.mxu0 %v3601
      %v3637 = vpop.f32.mrf.mxu0
      %v3638 = vadd.f32 0.0, %v3637
      %v3639 = vpop.f32.mrf.mxu0
      %v3640 = vadd.f32 0.0, %v3639
      %v3641 = vpop.f32.mrf.mxu0
      %v3642 = vpop.f32.mrf.mxu0
      %3643 = vdwg.mxu0
      %3644 = vmatprep.subr.bf16.mxu0 0
      %3645 = vmatpush1.bf16.msra.mxu0 0
      %3646 = vmatprep.subr.bf16.mxu0 0
      %3647 = vmatpush1.bf16.msra.mxu0 0
      %3648 = vmatprep.subr.bf16.mxu0 0
      %3649 = vmatpush1.bf16.msra.mxu0 0
      %3650 = vmatprep.subr.bf16.mxu0 0
      %3651 = vmatpush1.bf16.msra.mxu0 0
      %3652 = vmatprep.subr.bf16.mxu0 0
      %3653 = vmatpush1.bf16.msra.mxu0 0
      %3654 = vmatprep.subr.bf16.mxu0 0
      %3655 = vmatpush1.bf16.msra.mxu0 0
      %3656 = vmatprep.subr.bf16.mxu0 0
      %3657 = vmatpush1.bf16.msra.mxu0 %v3589
      %3658 = vmatprep.subr.bf16.mxu0 0
      %3659 = vmatpush1.bf16.msra.mxu0 %v3583
      %3660 = vmatprep.subr.bf16.mxu0 0
      %3661 = vmatpush2.bf16.msra.mxu0 0
      %3662 = vmatprep.subr.bf16.mxu0 0
      %3663 = vmatpush2.bf16.msra.mxu0 0
      %3664 = vmatprep.subr.bf16.mxu0 0
      %3665 = vmatpush2.bf16.msra.mxu0 0
      %3666 = vmatprep.subr.bf16.mxu0 0
      %3667 = vmatpush2.bf16.msra.mxu0 0
      %3668 = vmatprep.subr.bf16.mxu0 0
      %3669 = vmatpush2.bf16.msra.mxu0 0
      %3670 = vmatprep.subr.bf16.mxu0 0
      %3671 = vmatpush2.bf16.msra.mxu0 0
      %3672 = vmatprep.subr.bf16.mxu0 0
      %3673 = vmatpush2.bf16.msra.mxu0 0
      %3674 = vmatprep.subr.bf16.mxu0 0
      %3675 = vmatpush2.bf16.msra.mxu0 0
      %3676 = vmatprep.mubr.bf16.mxu0 0
      %3677 = vmatmul.mubr.bf16.gmra.mxu0 %v3601
      %v3678 = vpop.f32.mrf.mxu0
      %v3679 = vadd.f32 0.0, %v3678
      %v3680 = vpop.f32.mrf.mxu0
      %v3681 = vpop.f32.mrf.mxu0
      %v3682 = vpop.f32.mrf.mxu0
      %3683 = vdwg.mxu0
      %v3684 = vadd.f32 %v3573, %v3638
      %v3685 = vadd.f32 %v3574, %v3640
      %v3686 = vadd.f32 %v3575, %v3679
      %v3687 = vmul.f32 %v3684, %v549
      %v3688 = vmul.f32 %v3685, %v553
      %v3689 = vmul.f32 %v3686, %v557
      %v3690 = vadd.f32 %v3687, %v3688
      %v3691 = vsel %vm565, %v3689, 0.0
      %v3692 = vadd.f32 %v3690, %v3691
      %3693 = vadd.xlane.f32.xlu0 %v3692
      %v3694 = vpop.xlane.xlu0 %3693
      %v3695 = vmul.f32 %v3694, 0.00390625
      %v3696 = vsub.f32 %v3684, %v3695
      %v3697 = vsub.f32 %v3685, %v3695
      %v3698 = vsub.f32 %v3686, %v3695
      %v3699 = vmul.f32 %v3696, %v3696
      %v3700 = vmul.f32 %v3697, %v3697
      %v3701 = vmul.f32 %v3698, %v3698
      %v3702 = vmul.f32 %v3699, %v549
      %v3703 = vmul.f32 %v3700, %v553
      %v3704 = vmul.f32 %v3701, %v557
      %v3705 = vadd.f32 %v3702, %v3703
      %v3706 = vsel %vm565, %v3704, 0.0
      %v3707 = vadd.f32 %v3705, %v3706
      %3708 = vadd.xlane.f32.xlu0 %v3707
      %v3709 = vpop.xlane.xlu0 %3708
      %v3710 = vmul.f32 %v3709, 0.00390625
      %s3711 = scalar_lea.vmem %s9, 32
      %v3712 = vld [vmem:[%s3711] sm:$0xff]
      %v3713 = vadd.f32 %v3710, 1e-05
      %v3714 = vrsqrt.pop %v3713
      %v3715 = vmul.f32 %v3712, %v3714
      %3717 = vset.pattern.permute.xlu0 0
      %3718 = vperm.xlu0 %3717, %v3715
      %v3719 = vpop.permute.xlu0 %3718
      %v3721 = vmul.f32 %v3696, %v3719
      %v3722 = vmul.f32 %v3697, %v3719
      %v3723 = vmul.f32 %v3698, %v3719
      %s3724 = scalar_lea.vmem %s10, 32
      %v3725 = vld [vmem:[%s3724] sm:$0xff]
      %3727 = vset.pattern.permute.xlu0 0
      %3728 = vperm.xlu0 %3727, %v3725
      %v3729 = vpop.permute.xlu0 %3728
      %v3731 = vadd.f32 %v3721, %v3729
      %v3732 = vadd.f32 %v3722, %v3729
      %v3733 = vadd.f32 %v3723, %v3729
      %vm3734 = vcmp.ge.f32.partialorder %v3731, 0.0
      %vm3735 = vcmp.ge.f32.partialorder %v3732, 0.0
      %vm3736 = vcmp.ge.f32.partialorder %v3733, 0.0
      %s3737 = scalar_lea.vmem %s11, 32
      %v3738 = vld [vmem:[%s3737] sm:$0xff]
      %3740 = vset.pattern.permute.xlu0 0
      %3741 = vperm.xlu0 %3740, %v3738
      %v3742 = vpop.permute.xlu0 %3741
      %v3744 = vmul.f32 %v3742, %v3731
      %v3745 = vmul.f32 %v3742, %v3732
      %v3746 = vmul.f32 %v3742, %v3733
      %v3747 = vsel %vm3734, %v3731, %v3744
      %v3748 = vsel %vm3735, %v3732, %v3745
      %v3749 = vsel %vm3736, %v3733, %v3746
      %v3750 = vmul.f32 %v3747, %v549
      %v3751 = vmul.f32 %v3748, %v553
      %v3752 = vmul.f32 %v3749, %v557
      %v3753 = vpack.c.bf16 %v3750, %v3750
      %v3754 = vpack.c.bf16 %v3751, %v3751
      %v3755 = vpack.c.bf16 %v3752, %v3752
      %v3759 = vunpack.c.l.b16 %v3753
      %v3760 = vunpack.c.l.b16 %v3754
      %v3761 = vunpack.c.l.b16 %v3755
      %v3762 = vpack.c.b16 %v3760, %v3759
      %v3763 = vpack.c.b16 %v3761, %v3761
      %3764 = vrot.lane.b32.xlu0 %v3762, 34
      %v3765 = vpop.permute.xlu0 %3764
      %3766 = vrot.lane.b32.xlu0 %v3763, 34
      %v3767 = vpop.permute.xlu0 %3766
      %v3768 = vrot.slane %v3765, 4
      %v3769 = vsel %vm641, %v3768, %v3765
      %v3770 = vsel %vm641, %v3768, %v3767
      %3773 = vst.msk [vmem:[#allocation2 + $0x44] sm:$0xff] %vm648, %v3769
      %3774 = vst.msk [vmem:[#allocation2 + $0x4c] sm:$0xf] %vm650, %v3770
      %v3775 = vld [vmem:[#allocation2 + $0x44] sm:$0xff]
      %v3776 = vld [vmem:[#allocation2 + $0x4c] sm:$0xf]
      %v3777 = vld [vmem:[%s6] sm:$0xf]
      %s3778 = scalar_lea.vmem %s6, 4
      %v3779 = vld [vmem:[%s3778] sm:$0xf]
      %v3782 = vunpack.c.l.b16 %v3775
      %v3783 = vunpack.c.h.b16 %v3775
      %v3784 = vunpack.c.l.b16 %v3776
      %v3785 = vpack.c.b16 %v3782, %v3782
      %v3786 = vpack.c.b16 %v3783, %v3783
      %v3787 = vpack.c.b16 %v3784, %v3784
      %3788 = vrot.lane.b32.xlu0 %v3785, 94
      %v3789 = vpop.permute.xlu0 %3788
      %3790 = vrot.lane.b32.xlu0 %v3786, 94
      %v3791 = vpop.permute.xlu0 %3790
      %3792 = vrot.lane.b32.xlu0 %v3787, 94
      %v3793 = vpop.permute.xlu0 %3792
      %v3794 = vsel %vm1092, %v3789, %v3791
      %v3795 = vsel %vm1092, %v3791, %v3793
      %v3797 = vsel %vm674, %v3779, 0
      %v3800 = vsel %vm412, %v3794, 0
      %v3803 = vsel %vm412, %v3795, 0
      %v3806 = vsel %vm412, %v3793, 0
      %3808 = vmatprep.subr.bf16.mxu0 0
      %3809 = vmatpush1.bf16.msra.mxu0 0
      %3810 = vmatprep.subr.bf16.mxu0 0
      %3811 = vmatpush1.bf16.msra.mxu0 0
      %3812 = vmatprep.subr.bf16.mxu0 0
      %3813 = vmatpush1.bf16.msra.mxu0 0
      %3814 = vmatprep.subr.bf16.mxu0 0
      %3815 = vmatpush1.bf16.msra.mxu0 0
      %3816 = vmatprep.subr.bf16.mxu0 0
      %3817 = vmatpush1.bf16.msra.mxu0 0
      %3818 = vmatprep.subr.bf16.mxu0 0
      %3819 = vmatpush1.bf16.msra.mxu0 0
      %3820 = vmatprep.subr.bf16.mxu0 0
      %3821 = vmatpush1.bf16.msra.mxu0 0
      %3822 = vmatprep.subr.bf16.mxu0 %v3803
      %3823 = vmatpush1.bf16.msra.mxu0 %v3800
      %3824 = vmatprep.subr.bf16.mxu0 0
      %3825 = vmatpush2.bf16.msra.mxu0 0
      %3826 = vmatprep.subr.bf16.mxu0 0
      %3827 = vmatpush2.bf16.msra.mxu0 0
      %3828 = vmatprep.subr.bf16.mxu0 0
      %3829 = vmatpush2.bf16.msra.mxu0 0
      %3830 = vmatprep.subr.bf16.mxu0 0
      %3831 = vmatpush2.bf16.msra.mxu0 0
      %3832 = vmatprep.subr.bf16.mxu0 0
      %3833 = vmatpush2.bf16.msra.mxu0 0
      %3834 = vmatprep.subr.bf16.mxu0 0
      %3835 = vmatpush2.bf16.msra.mxu0 0
      %3836 = vmatprep.subr.bf16.mxu0 0
      %3837 = vmatpush2.bf16.msra.mxu0 0
      %3838 = vmatprep.subr.bf16.mxu0 0
      %3839 = vmatpush2.bf16.msra.mxu0 0
      %3840 = vmatprep.mubr.bf16.mxu0 0
      %3841 = vmatmul.mubr.bf16.gmra.mxu0 %v3797
      %v3842 = vpop.f32.mrf.mxu0
      %v3843 = vadd.f32 0.0, %v3842
      %v3844 = vpop.f32.mrf.mxu0
      %v3845 = vadd.f32 0.0, %v3844
      %v3846 = vpop.f32.mrf.mxu0
      %v3847 = vpop.f32.mrf.mxu0
      %3848 = vdwg.mxu0
      %3849 = vmatprep.subr.bf16.mxu0 0
      %3850 = vmatpush1.bf16.msra.mxu0 0
      %3851 = vmatprep.subr.bf16.mxu0 0
      %3852 = vmatpush1.bf16.msra.mxu0 0
      %3853 = vmatprep.subr.bf16.mxu0 0
      %3854 = vmatpush1.bf16.msra.mxu0 0
      %3855 = vmatprep.subr.bf16.mxu0 0
      %3856 = vmatpush1.bf16.msra.mxu0 0
      %3857 = vmatprep.subr.bf16.mxu0 0
      %3858 = vmatpush1.bf16.msra.mxu0 0
      %3859 = vmatprep.subr.bf16.mxu0 0
      %3860 = vmatpush1.bf16.msra.mxu0 0
      %3861 = vmatprep.subr.bf16.mxu0 0
      %3862 = vmatpush1.bf16.msra.mxu0 0
      %3863 = vmatprep.subr.bf16.mxu0 0
      %3864 = vmatpush1.bf16.msra.mxu0 %v3806
      %3865 = vmatprep.subr.bf16.mxu0 0
      %3866 = vmatpush2.bf16.msra.mxu0 0
      %3867 = vmatprep.subr.bf16.mxu0 0
      %3868 = vmatpush2.bf16.msra.mxu0 0
      %3869 = vmatprep.subr.bf16.mxu0 0
      %3870 = vmatpush2.bf16.msra.mxu0 0
      %3871 = vmatprep.subr.bf16.mxu0 0
      %3872 = vmatpush2.bf16.msra.mxu0 0
      %3873 = vmatprep.subr.bf16.mxu0 0
      %3874 = vmatpush2.bf16.msra.mxu0 0
      %3875 = vmatprep.subr.bf16.mxu0 0
      %3876 = vmatpush2.bf16.msra.mxu0 0
      %3877 = vmatprep.subr.bf16.mxu0 0
      %3878 = vmatpush2.bf16.msra.mxu0 0
      %3879 = vmatprep.subr.bf16.mxu0 0
      %3880 = vmatpush2.bf16.msra.mxu0 0
      %3881 = vmatprep.mubr.bf16.mxu0 0
      %3882 = vmatmul.mubr.bf16.gmra.mxu0 %v3797
      %v3883 = vpop.f32.mrf.mxu0
      %v3884 = vadd.f32 0.0, %v3883
      %v3885 = vpop.f32.mrf.mxu0
      %v3886 = vpop.f32.mrf.mxu0
      %v3887 = vpop.f32.mrf.mxu0
      %3888 = vdwg.mxu0
      %3889 = vrot.lane.b32.xlu0 %v3785, 95
      %v3890 = vpop.permute.xlu0 %3889
      %3891 = vrot.lane.b32.xlu0 %v3786, 95
      %v3892 = vpop.permute.xlu0 %3891
      %3893 = vrot.lane.b32.xlu0 %v3787, 95
      %v3894 = vpop.permute.xlu0 %3893
      %v3895 = vsel %vm985, %v3890, %v3892
      %v3896 = vsel %vm985, %v3892, %v3894
      %v3898 = vsel %vm674, %v3777, 0
      %v3901 = vsel %vm412, %v3895, 0
      %v3904 = vsel %vm412, %v3896, 0
      %v3907 = vsel %vm412, %v3894, 0
      %3909 = vmatprep.subr.bf16.mxu0 0
      %3910 = vmatpush1.bf16.msra.mxu0 0
      %3911 = vmatprep.subr.bf16.mxu0 0
      %3912 = vmatpush1.bf16.msra.mxu0 0
      %3913 = vmatprep.subr.bf16.mxu0 0
      %3914 = vmatpush1.bf16.msra.mxu0 0
      %3915 = vmatprep.subr.bf16.mxu0 0
      %3916 = vmatpush1.bf16.msra.mxu0 0
      %3917 = vmatprep.subr.bf16.mxu0 0
      %3918 = vmatpush1.bf16.msra.mxu0 0
      %3919 = vmatprep.subr.bf16.mxu0 0
      %3920 = vmatpush1.bf16.msra.mxu0 0
      %3921 = vmatprep.subr.bf16.mxu0 0
      %3922 = vmatpush1.bf16.msra.mxu0 0
      %3923 = vmatprep.subr.bf16.mxu0 %v3904
      %3924 = vmatpush1.bf16.msra.mxu0 %v3901
      %3925 = vmatprep.subr.bf16.mxu0 0
      %3926 = vmatpush2.bf16.msra.mxu0 0
      %3927 = vmatprep.subr.bf16.mxu0 0
      %3928 = vmatpush2.bf16.msra.mxu0 0
      %3929 = vmatprep.subr.bf16.mxu0 0
      %3930 = vmatpush2.bf16.msra.mxu0 0
      %3931 = vmatprep.subr.bf16.mxu0 0
      %3932 = vmatpush2.bf16.msra.mxu0 0
      %3933 = vmatprep.subr.bf16.mxu0 0
      %3934 = vmatpush2.bf16.msra.mxu0 0
      %3935 = vmatprep.subr.bf16.mxu0 0
      %3936 = vmatpush2.bf16.msra.mxu0 0
      %3937 = vmatprep.subr.bf16.mxu0 0
      %3938 = vmatpush2.bf16.msra.mxu0 0
      %3939 = vmatprep.subr.bf16.mxu0 0
      %3940 = vmatpush2.bf16.msra.mxu0 0
      %3941 = vmatprep.mubr.bf16.mxu0 0
      %3942 = vmatmul.mubr.bf16.gmra.mxu0 %v3898
      %v3943 = vpop.f32.mrf.mxu0
      %v3944 = vadd.f32 %v3843, %v3943
      %v3945 = vpop.f32.mrf.mxu0
      %v3946 = vadd.f32 %v3845, %v3945
      %v3947 = vpop.f32.mrf.mxu0
      %v3948 = vpop.f32.mrf.mxu0
      %3949 = vdwg.mxu0
      %3950 = vmatprep.subr.bf16.mxu0 0
      %3951 = vmatpush1.bf16.msra.mxu0 0
      %3952 = vmatprep.subr.bf16.mxu0 0
      %3953 = vmatpush1.bf16.msra.mxu0 0
      %3954 = vmatprep.subr.bf16.mxu0 0
      %3955 = vmatpush1.bf16.msra.mxu0 0
      %3956 = vmatprep.subr.bf16.mxu0 0
      %3957 = vmatpush1.bf16.msra.mxu0 0
      %3958 = vmatprep.subr.bf16.mxu0 0
      %3959 = vmatpush1.bf16.msra.mxu0 0
      %3960 = vmatprep.subr.bf16.mxu0 0
      %3961 = vmatpush1.bf16.msra.mxu0 0
      %3962 = vmatprep.subr.bf16.mxu0 0
      %3963 = vmatpush1.bf16.msra.mxu0 0
      %3964 = vmatprep.subr.bf16.mxu0 0
      %3965 = vmatpush1.bf16.msra.mxu0 %v3907
      %3966 = vmatprep.subr.bf16.mxu0 0
      %3967 = vmatpush2.bf16.msra.mxu0 0
      %3968 = vmatprep.subr.bf16.mxu0 0
      %3969 = vmatpush2.bf16.msra.mxu0 0
      %3970 = vmatprep.subr.bf16.mxu0 0
      %3971 = vmatpush2.bf16.msra.mxu0 0
      %3972 = vmatprep.subr.bf16.mxu0 0
      %3973 = vmatpush2.bf16.msra.mxu0 0
      %3974 = vmatprep.subr.bf16.mxu0 0
      %3975 = vmatpush2.bf16.msra.mxu0 0
      %3976 = vmatprep.subr.bf16.mxu0 0
      %3977 = vmatpush2.bf16.msra.mxu0 0
      %3978 = vmatprep.subr.bf16.mxu0 0
      %3979 = vmatpush2.bf16.msra.mxu0 0
      %3980 = vmatprep.subr.bf16.mxu0 0
      %3981 = vmatpush2.bf16.msra.mxu0 0
      %3982 = vmatprep.mubr.bf16.mxu0 0
      %3983 = vmatmul.mubr.bf16.gmra.mxu0 %v3898
      %v3984 = vpop.f32.mrf.mxu0
      %v3985 = vadd.f32 %v3884, %v3984
      %v3986 = vpop.f32.mrf.mxu0
      %v3987 = vpop.f32.mrf.mxu0
      %v3988 = vpop.f32.mrf.mxu0
      %3989 = vdwg.mxu0
      %s3990 = scalar_lea.vmem %s6, 8
      %v3991 = vld [vmem:[%s3990] sm:$0xf]
      %3992 = vrot.lane.b32.xlu0 %v3785, 93
      %v3993 = vpop.permute.xlu0 %3992
      %3994 = vrot.lane.b32.xlu0 %v3786, 93
      %v3995 = vpop.permute.xlu0 %3994
      %3996 = vrot.lane.b32.xlu0 %v3787, 93
      %v3997 = vpop.permute.xlu0 %3996
      %v3998 = vsel %vm1199, %v3993, %v3995
      %v3999 = vsel %vm1199, %v3995, %v3997
      %v4001 = vsel %vm674, %v3991, 0
      %v4004 = vsel %vm412, %v3998, 0
      %v4007 = vsel %vm412, %v3999, 0
      %v4010 = vsel %vm412, %v3997, 0
      %4012 = vmatprep.subr.bf16.mxu0 0
      %4013 = vmatpush1.bf16.msra.mxu0 0
      %4014 = vmatprep.subr.bf16.mxu0 0
      %4015 = vmatpush1.bf16.msra.mxu0 0
      %4016 = vmatprep.subr.bf16.mxu0 0
      %4017 = vmatpush1.bf16.msra.mxu0 0
      %4018 = vmatprep.subr.bf16.mxu0 0
      %4019 = vmatpush1.bf16.msra.mxu0 0
      %4020 = vmatprep.subr.bf16.mxu0 0
      %4021 = vmatpush1.bf16.msra.mxu0 0
      %4022 = vmatprep.subr.bf16.mxu0 0
      %4023 = vmatpush1.bf16.msra.mxu0 0
      %4024 = vmatprep.subr.bf16.mxu0 0
      %4025 = vmatpush1.bf16.msra.mxu0 0
      %4026 = vmatprep.subr.bf16.mxu0 %v4007
      %4027 = vmatpush1.bf16.msra.mxu0 %v4004
      %4028 = vmatprep.subr.bf16.mxu0 0
      %4029 = vmatpush2.bf16.msra.mxu0 0
      %4030 = vmatprep.subr.bf16.mxu0 0
      %4031 = vmatpush2.bf16.msra.mxu0 0
      %4032 = vmatprep.subr.bf16.mxu0 0
      %4033 = vmatpush2.bf16.msra.mxu0 0
      %4034 = vmatprep.subr.bf16.mxu0 0
      %4035 = vmatpush2.bf16.msra.mxu0 0
      %4036 = vmatprep.subr.bf16.mxu0 0
      %4037 = vmatpush2.bf16.msra.mxu0 0
      %4038 = vmatprep.subr.bf16.mxu0 0
      %4039 = vmatpush2.bf16.msra.mxu0 0
      %4040 = vmatprep.subr.bf16.mxu0 0
      %4041 = vmatpush2.bf16.msra.mxu0 0
      %4042 = vmatprep.subr.bf16.mxu0 0
      %4043 = vmatpush2.bf16.msra.mxu0 0
      %4044 = vmatprep.mubr.bf16.mxu0 0
      %4045 = vmatmul.mubr.bf16.gmra.mxu0 %v4001
      %v4046 = vpop.f32.mrf.mxu0
      %v4047 = vadd.f32 0.0, %v4046
      %v4048 = vpop.f32.mrf.mxu0
      %v4049 = vadd.f32 0.0, %v4048
      %v4050 = vpop.f32.mrf.mxu0
      %v4051 = vpop.f32.mrf.mxu0
      %4052 = vdwg.mxu0
      %4053 = vmatprep.subr.bf16.mxu0 0
      %4054 = vmatpush1.bf16.msra.mxu0 0
      %4055 = vmatprep.subr.bf16.mxu0 0
      %4056 = vmatpush1.bf16.msra.mxu0 0
      %4057 = vmatprep.subr.bf16.mxu0 0
      %4058 = vmatpush1.bf16.msra.mxu0 0
      %4059 = vmatprep.subr.bf16.mxu0 0
      %4060 = vmatpush1.bf16.msra.mxu0 0
      %4061 = vmatprep.subr.bf16.mxu0 0
      %4062 = vmatpush1.bf16.msra.mxu0 0
      %4063 = vmatprep.subr.bf16.mxu0 0
      %4064 = vmatpush1.bf16.msra.mxu0 0
      %4065 = vmatprep.subr.bf16.mxu0 0
      %4066 = vmatpush1.bf16.msra.mxu0 0
      %4067 = vmatprep.subr.bf16.mxu0 0
      %4068 = vmatpush1.bf16.msra.mxu0 %v4010
      %4069 = vmatprep.subr.bf16.mxu0 0
      %4070 = vmatpush2.bf16.msra.mxu0 0
      %4071 = vmatprep.subr.bf16.mxu0 0
      %4072 = vmatpush2.bf16.msra.mxu0 0
      %4073 = vmatprep.subr.bf16.mxu0 0
      %4074 = vmatpush2.bf16.msra.mxu0 0
      %4075 = vmatprep.subr.bf16.mxu0 0
      %4076 = vmatpush2.bf16.msra.mxu0 0
      %4077 = vmatprep.subr.bf16.mxu0 0
      %4078 = vmatpush2.bf16.msra.mxu0 0
      %4079 = vmatprep.subr.bf16.mxu0 0
      %4080 = vmatpush2.bf16.msra.mxu0 0
      %4081 = vmatprep.subr.bf16.mxu0 0
      %4082 = vmatpush2.bf16.msra.mxu0 0
      %4083 = vmatprep.subr.bf16.mxu0 0
      %4084 = vmatpush2.bf16.msra.mxu0 0
      %4085 = vmatprep.mubr.bf16.mxu0 0
      %4086 = vmatmul.mubr.bf16.gmra.mxu0 %v4001
      %v4087 = vpop.f32.mrf.mxu0
      %v4088 = vadd.f32 0.0, %v4087
      %v4089 = vpop.f32.mrf.mxu0
      %v4090 = vpop.f32.mrf.mxu0
      %v4091 = vpop.f32.mrf.mxu0
      %4092 = vdwg.mxu0
      %v4093 = vadd.f32 %v3944, %v4047
      %v4094 = vadd.f32 %v3946, %v4049
      %v4095 = vadd.f32 %v3985, %v4088
      %v4096 = vld [vmem:[%s7] sm:$0xff]
      %v4097 = vld [vmem:[%s7 + $0x8] sm:$0xff]
      %v4098 = vld [vmem:[%s7 + $0x10] sm:$0xff]
      %v4099 = vld [vmem:[%s7 + $0x18] sm:$0xff]
      %v4100 = vld [vmem:[%s7 + $0x20] sm:$0xff]
      %v4101 = vld [vmem:[%s7 + $0x28] sm:$0xff]
      %v4102 = vld [vmem:[%s7 + $0x30] sm:$0xff]
      %v4103 = vld [vmem:[%s7 + $0x38] sm:$0xff]
      %v4104 = vld [vmem:[%s7 + $0x40] sm:$0xff]
      %v4105 = vld [vmem:[%s7 + $0x48] sm:$0xff]
      %v4106 = vld [vmem:[%s7 + $0x50] sm:$0xff]
      %v4107 = vld [vmem:[%s7 + $0x58] sm:$0xff]
      %v4108 = vld [vmem:[%s7 + $0x60] sm:$0xff]
      %v4109 = vld [vmem:[%s7 + $0x68] sm:$0xff]
      %v4110 = vld [vmem:[%s7 + $0x70] sm:$0xff]
      %v4111 = vld [vmem:[%s7 + $0x78] sm:$0xff]
      %v4112 = vld [vmem:[%s7 + $0x80] sm:$0xff]
      %v4113 = vld [vmem:[%s7 + $0x88] sm:$0xff]
      %v4114 = vld [vmem:[%s7 + $0x90] sm:$0xff]
      %v4115 = vld [vmem:[%s7 + $0x98] sm:$0xff]
      %v4116 = vld [vmem:[%s7 + $0xa0] sm:$0xff]
      %v4117 = vld [vmem:[%s7 + $0xa8] sm:$0xff]
      %v4118 = vld [vmem:[%s7 + $0xb0] sm:$0xff]
      %v4119 = vld [vmem:[%s7 + $0xb8] sm:$0xff]
      %v4120 = vld [vmem:[%s7 + $0xc0] sm:$0xff]
      %v4121 = vld [vmem:[%s7 + $0xc8] sm:$0xff]
      %v4122 = vld [vmem:[%s7 + $0xd0] sm:$0xff]
      %v4123 = vld [vmem:[%s7 + $0xd8] sm:$0xff]
      %v4124 = vld [vmem:[%s7 + $0xe0] sm:$0xff]
      %v4125 = vld [vmem:[%s7 + $0xe8] sm:$0xff]
      %v4126 = vld [vmem:[%s7 + $0xf0] sm:$0xff]
      %v4127 = vld [vmem:[%s7 + $0xf8] sm:$0xff]
      %v4128 = vld [vmem:[%s7 + $0x100] sm:$0xff]
      %v4129 = vld [vmem:[%s7 + $0x108] sm:$0xff]
      %v4130 = vld [vmem:[%s7 + $0x110] sm:$0xff]
      %v4131 = vld [vmem:[%s7 + $0x118] sm:$0xff]
      %v4133 = vsel %vm565, %v4095, 0
      %4135 = vmatprep.subr.mxu0 0.0
      %4136 = vmatpush1.msra.mxu0 %v4111
      %4137 = vmatprep.subr.mxu0 0.0
      %4138 = vmatpush1.msra.mxu0 %v4110
      %4139 = vmatprep.subr.mxu0 0.0
      %4140 = vmatpush1.msra.mxu0 %v4109
      %4141 = vmatprep.subr.mxu0 0.0
      %4142 = vmatpush1.msra.mxu0 %v4108
      %4143 = vmatprep.subr.mxu0 0.0
      %4144 = vmatpush1.msra.mxu0 %v4107
      %4145 = vmatprep.subr.mxu0 0.0
      %4146 = vmatpush1.msra.mxu0 %v4106
      %4147 = vmatprep.subr.mxu0 0.0
      %4148 = vmatpush1.msra.mxu0 %v4105
      %4149 = vmatprep.subr.mxu0 0.0
      %4150 = vmatpush1.msra.mxu0 %v4104
      %4151 = vmatprep.subr.mxu0 0.0
      %4152 = vmatpush1.msra.mxu0 %v4103
      %4153 = vmatprep.subr.mxu0 0.0
      %4154 = vmatpush1.msra.mxu0 %v4102
      %4155 = vmatprep.subr.mxu0 0.0
      %4156 = vmatpush1.msra.mxu0 %v4101
      %4157 = vmatprep.subr.mxu0 0.0
      %4158 = vmatpush1.msra.mxu0 %v4100
      %4159 = vmatprep.subr.mxu0 0.0
      %4160 = vmatpush1.msra.mxu0 %v4099
      %4161 = vmatprep.subr.mxu0 0.0
      %4162 = vmatpush1.msra.mxu0 %v4098
      %4163 = vmatprep.subr.mxu0 0.0
      %4164 = vmatpush1.msra.mxu0 %v4097
      %4165 = vmatprep.subr.mxu0 0.0
      %4166 = vmatpush1.msra.mxu0 %v4096
      %4167 = vmatprep.subr.mxu0 0.0
      %4168 = vmatpush2.msra.mxu0 %v4127
      %4169 = vmatprep.subr.mxu0 0.0
      %4170 = vmatpush2.msra.mxu0 %v4126
      %4171 = vmatprep.subr.mxu0 0.0
      %4172 = vmatpush2.msra.mxu0 %v4125
      %4173 = vmatprep.subr.mxu0 0.0
      %4174 = vmatpush2.msra.mxu0 %v4124
      %4175 = vmatprep.subr.mxu0 0.0
      %4176 = vmatpush2.msra.mxu0 %v4123
      %4177 = vmatprep.subr.mxu0 0.0
      %4178 = vmatpush2.msra.mxu0 %v4122
      %4179 = vmatprep.subr.mxu0 0.0
      %4180 = vmatpush2.msra.mxu0 %v4121
      %4181 = vmatprep.subr.mxu0 0.0
      %4182 = vmatpush2.msra.mxu0 %v4120
      %4183 = vmatprep.subr.mxu0 0.0
      %4184 = vmatpush2.msra.mxu0 %v4119
      %4185 = vmatprep.subr.mxu0 0.0
      %4186 = vmatpush2.msra.mxu0 %v4118
      %4187 = vmatprep.subr.mxu0 0.0
      %4188 = vmatpush2.msra.mxu0 %v4117
      %4189 = vmatprep.subr.mxu0 0.0
      %4190 = vmatpush2.msra.mxu0 %v4116
      %4191 = vmatprep.subr.mxu0 0.0
      %4192 = vmatpush2.msra.mxu0 %v4115
      %4193 = vmatprep.subr.mxu0 0.0
      %4194 = vmatpush2.msra.mxu0 %v4114
      %4195 = vmatprep.subr.mxu0 0.0
      %4196 = vmatpush2.msra.mxu0 %v4113
      %4197 = vmatprep.subr.mxu0 0.0
      %4198 = vmatpush2.msra.mxu0 %v4112
      %4199 = vmatprep.mubr.f32.mxu0 %v4094
      %4200 = vmatmul.mubr.f32.gmra.mxu0 %v4093
      %v4201 = vpop.f32.mrf.mxu0
      %v4202 = vadd.f32 0.0, %v4201
      %v4203 = vpop.f32.mrf.mxu0
      %4204 = vdwg.mxu0
      %4205 = vmatprep.subr.mxu0 0.0
      %4206 = vmatpush1.msra.mxu0 0.0
      %4207 = vmatprep.subr.mxu0 0.0
      %4208 = vmatpush1.msra.mxu0 0.0
      %4209 = vmatprep.subr.mxu0 0.0
      %4210 = vmatpush1.msra.mxu0 0.0
      %4211 = vmatprep.subr.mxu0 0.0
      %4212 = vmatpush1.msra.mxu0 0.0
      %4213 = vmatprep.subr.mxu0 0.0
      %4214 = vmatpush1.msra.mxu0 0.0
      %4215 = vmatprep.subr.mxu0 0.0
      %4216 = vmatpush1.msra.mxu0 0.0
      %4217 = vmatprep.subr.mxu0 0.0
      %4218 = vmatpush1.msra.mxu0 0.0
      %4219 = vmatprep.subr.mxu0 0.0
      %4220 = vmatpush1.msra.mxu0 0.0
      %4221 = vmatprep.subr.mxu0 0.0
      %4222 = vmatpush1.msra.mxu0 0.0
      %4223 = vmatprep.subr.mxu0 0.0
      %4224 = vmatpush1.msra.mxu0 0.0
      %4225 = vmatprep.subr.mxu0 0.0
      %4226 = vmatpush1.msra.mxu0 0.0
      %4227 = vmatprep.subr.mxu0 0.0
      %4228 = vmatpush1.msra.mxu0 0.0
      %4229 = vmatprep.subr.mxu0 0.0
      %4230 = vmatpush1.msra.mxu0 %v4131
      %4231 = vmatprep.subr.mxu0 0.0
      %4232 = vmatpush1.msra.mxu0 %v4130
      %4233 = vmatprep.subr.mxu0 0.0
      %4234 = vmatpush1.msra.mxu0 %v4129
      %4235 = vmatprep.subr.mxu0 0.0
      %4236 = vmatpush1.msra.mxu0 %v4128
      %4237 = vmatprep.subr.mxu0 0.0
      %4238 = vmatpush2.msra.mxu0 0.0
      %4239 = vmatprep.subr.mxu0 0.0
      %4240 = vmatpush2.msra.mxu0 0.0
      %4241 = vmatprep.subr.mxu0 0.0
      %4242 = vmatpush2.msra.mxu0 0.0
      %4243 = vmatprep.subr.mxu0 0.0
      %4244 = vmatpush2.msra.mxu0 0.0
      %4245 = vmatprep.subr.mxu0 0.0
      %4246 = vmatpush2.msra.mxu0 0.0
      %4247 = vmatprep.subr.mxu0 0.0
      %4248 = vmatpush2.msra.mxu0 0.0
      %4249 = vmatprep.subr.mxu0 0.0
      %4250 = vmatpush2.msra.mxu0 0.0
      %4251 = vmatprep.subr.mxu0 0.0
      %4252 = vmatpush2.msra.mxu0 0.0
      %4253 = vmatprep.subr.mxu0 0.0
      %4254 = vmatpush2.msra.mxu0 0.0
      %4255 = vmatprep.subr.mxu0 0.0
      %4256 = vmatpush2.msra.mxu0 0.0
      %4257 = vmatprep.subr.mxu0 0.0
      %4258 = vmatpush2.msra.mxu0 0.0
      %4259 = vmatprep.subr.mxu0 0.0
      %4260 = vmatpush2.msra.mxu0 0.0
      %4261 = vmatprep.subr.mxu0 0.0
      %4262 = vmatpush2.msra.mxu0 0.0
      %4263 = vmatprep.subr.mxu0 0.0
      %4264 = vmatpush2.msra.mxu0 0.0
      %4265 = vmatprep.subr.mxu0 0.0
      %4266 = vmatpush2.msra.mxu0 0.0
      %4267 = vmatprep.subr.mxu0 0.0
      %4268 = vmatpush2.msra.mxu0 0.0
      %4269 = vmatprep.mubr.f32.mxu0 0.0
      %4270 = vmatmul.mubr.f32.gmra.mxu0 %v4133
      %v4271 = vpop.f32.mrf.mxu0
      %v4272 = vadd.f32 %v4202, %v4271
      %v4273 = vpop.f32.mrf.mxu0
      %4274 = vdwg.mxu0
      %4275 = vadd.xlane.f32.xlu0 %v4272
      %v4276 = vpop.xlane.xlu0 %4275
      %v4277 = vmul.f32 %v4276, 0.0078125
      %v4278 = vsub.f32 %v4272, %v4277
      %v4279 = vmul.f32 %v4278, %v4278
      %4280 = vadd.xlane.f32.xlu0 %v4279
      %v4281 = vpop.xlane.xlu0 %4280
      %v4282 = vmul.f32 %v4281, 0.0078125
      %s4283 = scalar_lea.vmem %s9, 40
      %v4284 = vld [vmem:[%s4283] sm:$0xff]
      %v4285 = vadd.f32 %v4282, 1e-05
      %v4286 = vrsqrt.pop %v4285
      %v4287 = vmul.f32 %v4284, %v4286
      %4289 = vset.pattern.permute.xlu0 0
      %4290 = vperm.xlu0 %4289, %v4287
      %v4291 = vpop.permute.xlu0 %4290
      %v4293 = vmul.f32 %v4278, %v4291
      %s4294 = scalar_lea.vmem %s10, 40
      %v4295 = vld [vmem:[%s4294] sm:$0xff]
      %4297 = vset.pattern.permute.xlu0 0
      %4298 = vperm.xlu0 %4297, %v4295
      %v4299 = vpop.permute.xlu0 %4298
      %v4301 = vadd.f32 %v4293, %v4299
      %vm4302 = vcmp.ge.f32.partialorder %v4301, 0.0
      %s4303 = scalar_lea.vmem %s11, 40
      %v4304 = vld [vmem:[%s4303] sm:$0xff]
      %4306 = vset.pattern.permute.xlu0 0
      %4307 = vperm.xlu0 %4306, %v4304
      %v4308 = vpop.permute.xlu0 %4307
      %v4310 = vmul.f32 %v4308, %v4301
      %v4311 = vsel %vm4302, %v4301, %v4310
      %4312 = vst [vmem:[%s408] sm:$0xff] %v4311
      %p4313 = scmp.lt.s32.totalorder %s23, 1
      %s4314 = scalar_select %p4313, %s23, 1
      %s4315 = smul.addr %s4314, 8
      %s4316 = scalar_lea.vmem %s12, %s4315
      // Predicated region
      $region69: #{dense_encoder_forward.1} parent=67 // pred_check
        %p4317 = pneg %p298
      $region70: #{dense_encoder_forward.1} parent=67 // pred_check_branch
        %4319 = sbr.rel (%p4317) target = $region72
      $region71: #{dense_encoder_forward.1} parent=67 // pred_region
        _
      $region72: #{dense_encoder_forward.1} parent=67 // pred_fallthru
        _
    $region68: #{dense_encoder_forward.1} parent=5 // pred_fallthru
      _
    %p4320 = scmp.le.s32.totalorder 2, %s18
    // Predicated region
    $region73: #{dense_encoder_forward.1} parent=5 // pred_check
      %p4321 = pneg %p4320
    $region74: #{dense_encoder_forward.1} parent=5 // pred_check_branch
      %4323 = sbr.rel (%p4321) target = $region76
    $region75: #{dense_encoder_forward.1} parent=5 // pred_region
      %s4324 = ssub.s32 %s18, 2
      // Predicated region
      $region77: #{dense_encoder_forward.1} parent=75 // pred_check
        %p4325 = pneg %p304
      $region78: #{dense_encoder_forward.1} parent=75 // pred_check_branch
        %4327 = sbr.rel (%p4325) target = $region80
      $region79: #{dense_encoder_forward.1} parent=75 // pred_region
        %p4328 = scmp.lt.s32.totalorder %s24, 1
        %s4329 = scalar_select %p4328, %s24, 1
        %s4330 = smul.addr %s4329, 8
        %s4331 = scalar_lea.vmem %s12, %s4330
      $region80: #{dense_encoder_forward.1} parent=75 // pred_fallthru
        _
    $region76: #{dense_encoder_forward.1} parent=5 // pred_fallthru
      _
  $region6: #{dense_encoder_forward.1} parent=0 // loop_footer
    %s22 = sadd.s32 1, %s18
  $region7: #{dense_encoder_forward.1} parent=0 // loop_footer_branch
    %17 = sbr.rel target = $region3
  $region8: #{dense_encoder_forward.1} parent=0 // loop_exit
    _

</llo_original>
